<compile_context>
chip_gen: v6e
topology: v6e:2x2x1
jax: 0.10.0
libtpu: 0.0.40
codegen_flags: <defaults>
</compile_context>

<pallas_src>
import math

import jax
import jax.numpy as jnp
from jax.experimental import pallas as pl
from jax.experimental.pallas import tpu as pltpu

_BN_EPS = 1e-5
_W_ALIGN = 8          # pad the padded-image width so in-kernel f32 reshapes are layout-clean


def _round_up(v, m):
    return (v + m - 1) // m * m


def _vmem_limit_bytes():
    # ~half of physical VMEM: v5e/v6e (128 MiB) -> 64 MiB, v7x (64 MiB) -> 32 MiB.
    try:
        cap = int(pltpu.get_tpu_info().vmem_capacity_bytes)
    except Exception:
        cap = 64 * 1024 * 1024
    return max(32 * 1024 * 1024, min(96 * 1024 * 1024, cap // 2))


_VMEM_LIMIT = _vmem_limit_bytes()


def _cparams(dims):
    return pltpu.CompilerParams(dimension_semantics=tuple(dims),
                                vmem_limit_bytes=_VMEM_LIMIT)


# --------------------------------------------------------------------------- #
# Kernels
# --------------------------------------------------------------------------- #

def _make_mbconv_se_kernel(num_phases, tap_map, ho, wo, residual):
    """SE branch, fully fused for one batch sample:
       expand(1x1)+BN+ReLU -> dw3x3+BN+ReLU -> SE(pool,FC,ReLU,FC,sigmoid)
       -> gate -> project(1x1)+BN (+residual)."""
    def kernel(*refs):
        it = iter(refs)
        phase_refs = [next(it) for _ in range(num_phases)]
        mask_refs = [next(it) for _ in range(num_phases)]
        we_ref = next(it); se_ref = next(it); be_ref = next(it)
        wd_ref = next(it); sd_ref = next(it); bd_ref = next(it)
        w1_ref = next(it); b1_ref = next(it); w2_ref = next(it); b2_ref = next(it)
        wp_ref = next(it); sp_ref = next(it); bp_ref = next(it)
        r_ref = next(it) if residual else None
        o_ref = next(it)
        hid_refs = [next(it) for _ in range(num_phases)]

        # 1) Expansion 1x1 + BN + ReLU, one MXU matmul per spatial phase.
        #    The halo mask zeroes positions that correspond to the depthwise
        #    conv's zero padding, so the expanded tensor never leaves VMEM.
        for p in range(num_phases):
            hp, wp, cin = phase_refs[p].shape
            xph = phase_refs[p][...].astype(jnp.float32).reshape(hp * wp, cin)
            acc = jnp.dot(xph.astype(jnp.bfloat16), we_ref[...],
                          preferred_element_type=jnp.float32)
            hid = jnp.maximum(acc * se_ref[...] + be_ref[...], 0.0) * mask_refs[p][...]
            hid_refs[p][...] = hid.reshape(hp, wp, hid.shape[-1])

        # 2) Depthwise 3x3 + BN + ReLU (f32 MAC; taps are static VMEM slices).
        acc = None
        for k, (pi, r0, c0) in enumerate(tap_map):
            term = hid_refs[pi][r0:r0 + ho, c0:c0 + wo, :] * wd_ref[k]
            acc = term if acc is None else acc + term
        hdw = jnp.maximum(acc * sd_ref[...] + bd_ref[...], 0.0)    # (ho, wo, hidden) f32

        # 3) Squeeze-Excite fused in the epilogue: pool -> FC -> ReLU -> FC -> sigmoid.
        pool = jnp.mean(hdw, axis=(0, 1), keepdims=True)[0]         # (1, hidden)
        t = jnp.maximum(jnp.dot(pool, w1_ref[...],
                                preferred_element_type=jnp.float32) + b1_ref[...], 0.0)
        z = jnp.dot(t, w2_ref[...], preferred_element_type=jnp.float32) + b2_ref[...]
        gate = pl.reciprocal(1.0 + jnp.exp(-z), approx=True)        # sigmoid (EUP slot)

        # 4) Channel gating + projection 1x1 + BN (+ residual).
        hflat = hdw.reshape(ho * wo, hdw.shape[-1]) * gate
        y = jnp.dot(hflat.astype(jnp.bfloat16), wp_ref[...],
                    preferred_element_type=jnp.float32)
        y = y * sp_ref[...] + bp_ref[...]
        if residual:
            y = y + r_ref[...].astype(jnp.float32)
        o_ref[...] = y.astype(o_ref.dtype)
    return kernel


def _make_mbconv_plain_kernel(num_phases, tap_map, ho, wo, cin, residual):
    """Non-SE branch, fused for one sample: 3x3 conv + BN + ReLU ->
       project(1x1) + BN (+residual).  im2col along K -> one K=9*Cin matmul."""
    def kernel(*refs):
        it = iter(refs)
        phase_refs = [next(it) for _ in range(num_phases)]
        wc_ref = next(it); se_ref = next(it); be_ref = next(it)
        wp_ref = next(it); sp_ref = next(it); bp_ref = next(it)
        r_ref = next(it) if residual else None
        o_ref = next(it)

        taps = [phase_refs[pi][r0:r0 + ho, c0:c0 + wo, :]
                for (pi, r0, c0) in tap_map]                 # 9 x (ho, wo, cin) bf16
        im = jnp.concatenate(taps, axis=-1)                  # (ho, wo, 9*cin)
        im = im.astype(jnp.float32).reshape(ho * wo, 9 * cin)
        acc = jnp.dot(im.astype(jnp.bfloat16), wc_ref[...],
                      preferred_element_type=jnp.float32)    # (ho*wo, hidden)
        h1 = jnp.maximum(acc * se_ref[...] + be_ref[...], 0.0)

        y = jnp.dot(h1.astype(jnp.bfloat16), wp_ref[...],
                    preferred_element_type=jnp.float32)
        y = y * sp_ref[...] + bp_ref[...]
        if residual:
            y = y + r_ref[...].astype(jnp.float32)
        o_ref[...] = y.astype(o_ref.dtype)
    return kernel


# --------------------------------------------------------------------------- #
# Host-side geometry helpers (pad + phase split of the SMALL bf16 input only)
# --------------------------------------------------------------------------- #

def _phase_views(x_nhwc, stride):
    """Zero-pad (pad=1) and, for stride 2, decompose into 4 spatial phases so
    every 3x3 tap inside the kernel is a contiguous static slice.

    Returns (phases, tap_map, ho, wo, pdims, padded_hw) with
    tap_map[k] = (phase_idx, row_off, col_off)."""
    _, h, w, _ = x_nhwc.shape
    ho = (h + 2 - 3) // stride + 1
    wo = (w + 2 - 3) // stride + 1
    if stride == 1:
        hp, wp = h + 2, _round_up(w + 2, _W_ALIGN)
        xp = jnp.pad(x_nhwc, ((0, 0), (1, 1), (1, wp - w - 1), (0, 0)))
        phases = [xp]
        tap_map = [(0, kh, kw) for kh in range(3) for kw in range(3)]
        pdims = [(hp, wp)]
        padded_hw = (hp, wp)
    else:  # stride == 2
        hp, wp = ho + 1, _round_up(wo + 1, _W_ALIGN)
        Hp, Wp = 2 * hp, 2 * wp
        xp = jnp.pad(x_nhwc, ((0, 0), (1, Hp - h - 1), (1, Wp - w - 1), (0, 0)))
        phases = [xp[:, ph::2, pw::2, :] for ph in range(2) for pw in range(2)]
        tap_map = [((kh % 2) * 2 + (kw % 2), kh // 2, kw // 2)
                   for kh in range(3) for kw in range(3)]
        pdims = [(hp, wp)] * 4
        padded_hw = (Hp, Wp)
    return phases, tap_map, ho, wo, pdims, padded_hw


def _phase_masks(h, w, stride, padded_hw, pdims):
    """Per-phase (hp*wp, 1) f32 masks: 1 on valid image positions, 0 on halo."""
    Hp, Wp = padded_hw
    m = jnp.zeros((Hp, Wp), jnp.float32).at[1:h + 1, 1:w + 1].set(1.0)
    if stride == 1:
        parts = [m]
    else:
        parts = [m[ph::2, pw::2] for ph in range(2) for pw in range(2)]
    return [part.reshape(pd[0] * pd[1], 1) for part, pd in zip(parts, pdims)]


# --------------------------------------------------------------------------- #
# pallas_call wrappers
# --------------------------------------------------------------------------- #

def _mbconv_se_forward(p, x_nhwc):
    n, h, w, cin = x_nhwc.shape
    stride, hidden, oup = p['stride'], p['hidden'], p['oup']
    mid = p['se_w1'].shape[1]
    residual = p['identity']

    xb = x_nhwc.astype(jnp.bfloat16)
    phases, tap_map, ho, wo, pdims, padded_hw = _phase_views(xb, stride)
    masks = _phase_masks(h, w, stride, padded_hw, pdims)

    args = list(phases) + list(masks) + [
        p['w_exp'].astype(jnp.bfloat16),
        p['s_exp'].reshape(1, hidden).astype(jnp.float32),
        p['b_exp'].reshape(1, hidden).astype(jnp.float32),
        p['w_dw'].reshape(9, 1, hidden).astype(jnp.float32),
        p['s_dw'].reshape(1, hidden).astype(jnp.float32),
        p['b_dw'].reshape(1, hidden).astype(jnp.float32),
        p['se_w1'].astype(jnp.float32),
        p['se_b1'].reshape(1, mid).astype(jnp.float32),
        p['se_w2'].astype(jnp.float32),
        p['se_b2'].reshape(1, hidden).astype(jnp.float32),
        p['w_proj'].astype(jnp.bfloat16),
        p['s_proj'].reshape(1, oup).astype(jnp.float32),
        p['b_proj'].reshape(1, oup).astype(jnp.float32),
    ]
    in_specs = (
        [pl.BlockSpec((None, hp, wp_, cin), lambda b: (b, 0, 0, 0)) for (hp, wp_) in pdims]
        + [pl.BlockSpec((hp * wp_, 1), lambda b: (0, 0)) for (hp, wp_) in pdims]
        + [pl.BlockSpec((cin, hidden), lambda b: (0, 0)),
           pl.BlockSpec((1, hidden), lambda b: (0, 0)),
           pl.BlockSpec((1, hidden), lambda b: (0, 0)),
           pl.BlockSpec((9, 1, hidden), lambda b: (0, 0, 0)),
           pl.BlockSpec((1, hidden), lambda b: (0, 0)),
           pl.BlockSpec((1, hidden), lambda b: (0, 0)),
           pl.BlockSpec((hidden, mid), lambda b: (0, 0)),
           pl.BlockSpec((1, mid), lambda b: (0, 0)),
           pl.BlockSpec((mid, hidden), lambda b: (0, 0)),
           pl.BlockSpec((1, hidden), lambda b: (0, 0)),
           pl.BlockSpec((hidden, oup), lambda b: (0, 0)),
           pl.BlockSpec((1, oup), lambda b: (0, 0)),
           pl.BlockSpec((1, oup), lambda b: (0, 0))])
    if residual:
        args.append(x_nhwc.reshape(n, h * w, cin).astype(jnp.bfloat16))
        in_specs.append(pl.BlockSpec((None, h * w, cin), lambda b: (b, 0, 0)))

    out = pl.pallas_call(
        _make_mbconv_se_kernel(len(phases), tap_map, ho, wo, residual),
        grid=(n,),
        in_specs=in_specs,
        out_specs=pl.BlockSpec((None, ho * wo, oup), lambda b: (b, 0, 0)),
        out_shape=jax.ShapeDtypeStruct((n, ho * wo, oup), jnp.float32),
        scratch_shapes=[pltpu.VMEM((hp, wp_, hidden), jnp.float32)
                        for (hp, wp_) in pdims],
        compiler_params=_cparams(("parallel",)),
    )(*args)
    return out, ho, wo


def _mbconv_plain_forward(p, x_nhwc):
    n, h, w, cin = x_nhwc.shape
    stride, hidden, oup = p['stride'], p['hidden'], p['oup']
    residual = p['identity']

    xb = x_nhwc.astype(jnp.bfloat16)
    phases, tap_map, ho, wo, pdims, _ = _phase_views(xb, stride)

    args = list(phases) + [
        p['w_exp'].reshape(9 * cin, hidden).astype(jnp.bfloat16),
        p['s_exp'].reshape(1, hidden).astype(jnp.float32),
        p['b_exp'].reshape(1, hidden).astype(jnp.float32),
        p['w_proj'].astype(jnp.bfloat16),
        p['s_proj'].reshape(1, oup).astype(jnp.float32),
        p['b_proj'].reshape(1, oup).astype(jnp.float32),
    ]
    in_specs = (
        [pl.BlockSpec((None, hp, wp_, cin), lambda b: (b, 0, 0, 0)) for (hp, wp_) in pdims]
        + [pl.BlockSpec((9 * cin, hidden), lambda b: (0, 0)),
           pl.BlockSpec((1, hidden), lambda b: (0, 0)),
           pl.BlockSpec((1, hidden), lambda b: (0, 0)),
           pl.BlockSpec((hidden, oup), lambda b: (0, 0)),
           pl.BlockSpec((1, oup), lambda b: (0, 0)),
           pl.BlockSpec((1, oup), lambda b: (0, 0))])
    if residual:
        args.append(x_nhwc.reshape(n, h * w, cin).astype(jnp.bfloat16))
        in_specs.append(pl.BlockSpec((None, h * w, cin), lambda b: (b, 0, 0)))

    out = pl.pallas_call(
        _make_mbconv_plain_kernel(len(phases), tap_map, ho, wo, cin, residual),
        grid=(n,),
        in_specs=in_specs,
        out_specs=pl.BlockSpec((None, ho * wo, oup), lambda b: (b, 0, 0)),
        out_shape=jax.ShapeDtypeStruct((n, ho * wo, oup), jnp.float32),
        compiler_params=_cparams(("parallel",)),
    )(*args)
    return out, ho, wo


# --------------------------------------------------------------------------- #
# Parameters (deterministic init, mirrors the PyTorch module structure)
# --------------------------------------------------------------------------- #

def _make_divisible(v, divisor, min_value=None):
    if min_value is None:
        min_value = divisor
    new_v = max(min_value, int(v + divisor / 2) // divisor * divisor)
    if new_v < 0.9 * v:
        new_v += divisor
    return new_v


class _Keys:
    def __init__(self, seed=0):
        self._key = jax.random.PRNGKey(seed)

    def __call__(self):
        self._key, sub = jax.random.split(self._key)
        return sub


def _bn_params(kg, c):
    # Eval-mode BN with non-trivial (random) running stats folded into scale/bias.
    gamma = jax.random.uniform(kg(), (c,), jnp.float32, 0.5, 1.5)
    beta = 0.3 * jax.random.normal(kg(), (c,), jnp.float32)
    mean = 0.3 * jax.random.normal(kg(), (c,), jnp.float32)
    var = jax.random.uniform(kg(), (c,), jnp.float32, 0.5, 1.5)
    scale = gamma / jnp.sqrt(var + _BN_EPS)
    bias = beta - mean * scale
    return scale, bias


def _conv_w(kg, kh, kw, cin, cout):
    std = math.sqrt(2.0 / (kh * kw * cin))
    return std * jax.random.normal(kg(), (kh, kw, cin, cout), jnp.float32)


def _linear_w(kg, cin, cout):
    std = 1.0 / math.sqrt(cin)
    w = std * jax.random.normal(kg(), (cin, cout), jnp.float32)
    b = 0.05 * jax.random.normal(kg(), (cout,), jnp.float32)
    return w, b


def init_mbconv(inp, oup, stride, expand_ratio, use_se, seed=0):
    assert stride in (1, 2)
    kg = _Keys(seed)
    hidden = int(round(inp * expand_ratio))
    p = dict(inp=inp, oup=oup, stride=stride, use_se=use_se, hidden=hidden,
             identity=(stride == 1 and inp == oup))
    if use_se:
        mid = _make_divisible(inp // 4, 8)
        p['w_exp'] = _conv_w(kg, 1, 1, inp, hidden).reshape(inp, hidden)
        p['s_exp'], p['b_exp'] = _bn_params(kg, hidden)
        p['w_dw'] = _conv_w(kg, 3, 3, 1, hidden).reshape(3, 3, hidden)
        p['s_dw'], p['b_dw'] = _bn_params(kg, hidden)
        p['se_w1'], p['se_b1'] = _linear_w(kg, hidden, mid)
        p['se_w2'], p['se_b2'] = _linear_w(kg, mid, hidden)
        p['w_proj'] = _conv_w(kg, 1, 1, hidden, oup).reshape(hidden, oup)
        p['s_proj'], p['b_proj'] = _bn_params(kg, oup)
    else:
        p['w_exp'] = _conv_w(kg, 3, 3, inp, hidden)          # (3,3,inp,hidden)
        p['s_exp'], p['b_exp'] = _bn_params(kg, hidden)
        p['w_proj'] = _conv_w(kg, 1, 1, hidden, oup).reshape(hidden, oup)
        p['s_proj'], p['b_proj'] = _bn_params(kg, oup)
    return p


# --------------------------------------------------------------------------- #
# Forward pass (Pallas) and pure-JAX reference
# --------------------------------------------------------------------------- #

def mbconv_forward(p, x_nchw):
    x = jnp.transpose(x_nchw.astype(jnp.float32), (0, 2, 3, 1))   # NCHW -> NHWC
    n = x.shape[0]
    if p['use_se']:
        out, ho, wo = _mbconv_se_forward(p, x)
    else:
        out, ho, wo = _mbconv_plain_forward(p, x)
    out = out.reshape(n, ho, wo, p['oup'])
    return jnp.transpose(out, (0, 3, 1, 2))                       # NHWC -> NCHW


def mbconv_reference(p, x_nchw):
    """Pure-JAX (XLA conv) reference of the same eval-mode MBConv."""
    x = jnp.transpose(x_nchw.astype(jnp.float32), (0, 2, 3, 1))
    stride = p['stride']

    def conv(x_, w_, s_, pad, groups=1):
        return jax.lax.conv_general_dilated(
            x_, w_, (s_, s_), [(pad, pad), (pad, pad)],
            dimension_numbers=('NHWC', 'HWIO', 'NHWC'),
            feature_group_count=groups)

    if p['use_se']:
        h1 = jnp.maximum(conv(x, p['w_exp'][None, None], 1, 0)
                         * p['s_exp'] + p['b_exp'], 0.0)
        hdw = conv(h1, p['w_dw'][:, :, None, :], stride, 1, groups=p['hidden'])
        hdw = jnp.maximum(hdw * p['s_dw'] + p['b_dw'], 0.0)
        pooled = jnp.mean(hdw, axis=(1, 2))
        t = jnp.maximum(pooled @ p['se_w1'] + p['se_b1'], 0.0)
        g = jax.nn.sigmoid(t @ p['se_w2'] + p['se_b2'])
        hg = hdw * g[:, None, None, :]
        out = conv(hg, p['w_proj'][None, None], 1, 0) * p['s_proj'] + p['b_proj']
    else:
        h1 = jnp.maximum(conv(x, p['w_exp'], stride, 1)
                         * p['s_exp'] + p['b_exp'], 0.0)
        out = conv(h1, p['w_proj'][None, None], 1, 0) * p['s_proj'] + p['b_proj']
    if p['identity']:
        out = out + x
    return jnp.transpose(out, (0, 3, 1, 2))


# --------------------------------------------------------------------------- #

if __name__ == "__main__":
    key = jax.random.PRNGKey(0)
    x = jax.random.normal(key, (2, 16, 16, 16), jnp.float32)   # NCHW

    configs = [
        dict(inp=16, oup=16, stride=1, expand_ratio=4, use_se=True),
        dict(inp=16, oup=24, stride=2, expand_ratio=4, use_se=True),
        dict(inp=16, oup=16, stride=1, expand_ratio=4, use_se=False),
        dict(inp=16, oup=24, stride=2, expand_ratio=4, use_se=False),
    ]
    for i, cfg in enumerate(configs):
        params = init_mbconv(seed=i, **cfg)
        fwd = jax.jit(lambda xx, p=params: mbconv_forward(p, xx))
        out = jax.block_until_ready(fwd(x))
        ref = jax.block_until_ready(mbconv_reference(params, x))

        expected = (2, cfg['oup'], 16 // cfg['stride'], 16 // cfg['stride'])
        assert tuple(out.shape) == expected, (out.shape, expected)
        assert bool(jnp.all(jnp.isfinite(out)))
        max_err = float(jnp.max(jnp.abs(out - ref)))
        ok = bool(jnp.all(jnp.abs(out - ref) <= 0.1 + 0.1 * jnp.abs(ref)))
        assert ok, (cfg, max_err)

    print("KERNEL_OK")
</pallas_src>

<mosaic_0001>
module attributes {stable_mosaic.version = 11 : i64} {
  func.func @kernel(%arg0: i32, %arg1: memref<1x18x24x16xbf16, #tpu.memory_space<vmem>>, %arg2: memref<432x1xf32, #tpu.memory_space<vmem>>, %arg3: memref<16x64xbf16, #tpu.memory_space<vmem>>, %arg4: memref<1x64xf32, #tpu.memory_space<vmem>>, %arg5: memref<1x64xf32, #tpu.memory_space<vmem>>, %arg6: memref<9x1x64xf32, #tpu.memory_space<vmem>>, %arg7: memref<1x64xf32, #tpu.memory_space<vmem>>, %arg8: memref<1x64xf32, #tpu.memory_space<vmem>>, %arg9: memref<64x8xf32, #tpu.memory_space<vmem>>, %arg10: memref<1x8xf32, #tpu.memory_space<vmem>>, %arg11: memref<8x64xf32, #tpu.memory_space<vmem>>, %arg12: memref<1x64xf32, #tpu.memory_space<vmem>>, %arg13: memref<64x16xbf16, #tpu.memory_space<vmem>>, %arg14: memref<1x16xf32, #tpu.memory_space<vmem>>, %arg15: memref<1x16xf32, #tpu.memory_space<vmem>>, %arg16: memref<1x256x16xbf16, #tpu.memory_space<vmem>>, %arg17: memref<1x256x16xf32, #tpu.memory_space<vmem>>, %arg18: memref<18x24x64xf32, #tpu.memory_space<vmem>>) attributes {dimension_semantics = [#tpu.dimension_semantics<parallel>], iteration_bounds = array<i64: 2>, scalar_prefetch = 0 : i64, scratch_operands = 1 : i64, tpu.core_type = #tpu.core_type<tc>, window_params = [{transform_indices = @transform_0, window_bounds = array<i64: 1, 18, 24, 16>}, {pipeline_mode = #tpu.pipeline_mode<synchronous>, transform_indices = @transform_1, window_bounds = array<i64: 432, 1>}, {pipeline_mode = #tpu.pipeline_mode<synchronous>, transform_indices = @transform_2, window_bounds = array<i64: 16, 64>}, {pipeline_mode = #tpu.pipeline_mode<synchronous>, transform_indices = @transform_3, window_bounds = array<i64: 1, 64>}, {pipeline_mode = #tpu.pipeline_mode<synchronous>, transform_indices = @transform_4, window_bounds = array<i64: 1, 64>}, {pipeline_mode = #tpu.pipeline_mode<synchronous>, transform_indices = @transform_5, window_bounds = array<i64: 9, 1, 64>}, {pipeline_mode = #tpu.pipeline_mode<synchronous>, transform_indices = @transform_6, window_bounds = array<i64: 1, 64>}, {pipeline_mode = #tpu.pipeline_mode<synchronous>, transform_indices = @transform_7, window_bounds = array<i64: 1, 64>}, {pipeline_mode = #tpu.pipeline_mode<synchronous>, transform_indices = @transform_8, window_bounds = array<i64: 64, 8>}, {pipeline_mode = #tpu.pipeline_mode<synchronous>, transform_indices = @transform_9, window_bounds = array<i64: 1, 8>}, {pipeline_mode = #tpu.pipeline_mode<synchronous>, transform_indices = @transform_10, window_bounds = array<i64: 8, 64>}, {pipeline_mode = #tpu.pipeline_mode<synchronous>, transform_indices = @transform_11, window_bounds = array<i64: 1, 64>}, {pipeline_mode = #tpu.pipeline_mode<synchronous>, transform_indices = @transform_12, window_bounds = array<i64: 64, 16>}, {pipeline_mode = #tpu.pipeline_mode<synchronous>, transform_indices = @transform_13, window_bounds = array<i64: 1, 16>}, {pipeline_mode = #tpu.pipeline_mode<synchronous>, transform_indices = @transform_14, window_bounds = array<i64: 1, 16>}, {transform_indices = @transform_15, window_bounds = array<i64: 1, 256, 16>}, {transform_indices = @transform_16, window_bounds = array<i64: 1, 256, 16>}]} {
    %c0 = arith.constant 0 : index
    %c0_0 = arith.constant 0 : index
    %c0_1 = arith.constant 0 : index
    %c0_2 = arith.constant 0 : index
    %0 = vector.load %arg1[%c0, %c0_0, %c0_1, %c0_2] : memref<1x18x24x16xbf16, #tpu.memory_space<vmem>>, vector<1x18x24x16xbf16>
    %1 = vector.shape_cast %0 : vector<1x18x24x16xbf16> to vector<18x24x16xbf16>
    %2 = arith.extf %1 : vector<18x24x16xbf16> to vector<18x24x16xf32>
    %3 = vector.shape_cast %2 : vector<18x24x16xf32> to vector<432x16xf32>
    %4 = arith.truncf %3 : vector<432x16xf32> to vector<432x16xbf16>
    %c0_3 = arith.constant 0 : index
    %c0_4 = arith.constant 0 : index
    %5 = vector.load %arg3[%c0_3, %c0_4] : memref<16x64xbf16, #tpu.memory_space<vmem>>, vector<16x64xbf16>
    %cst = arith.constant dense<0.000000e+00> : vector<432x64xf32>
    %6 = tpu.matmul %4, %5, %cst {dimension_numbers = #tpu.dot_dimension_numbers<[1], [0], [0], [1], [0, 0, 1, 1], [], []>} : vector<432x16xbf16>, vector<16x64xbf16>, vector<432x64xf32> -> vector<432x64xf32>
    %c0_5 = arith.constant 0 : index
    %c0_6 = arith.constant 0 : index
    %7 = vector.load %arg4[%c0_5, %c0_6] : memref<1x64xf32, #tpu.memory_space<vmem>>, vector<1x64xf32>
    %8 = vector.broadcast %7 : vector<1x64xf32> to vector<432x64xf32>
    %9 = arith.mulf %6, %8 : vector<432x64xf32>
    %c0_7 = arith.constant 0 : index
    %c0_8 = arith.constant 0 : index
    %10 = vector.load %arg5[%c0_7, %c0_8] : memref<1x64xf32, #tpu.memory_space<vmem>>, vector<1x64xf32>
    %11 = vector.broadcast %10 : vector<1x64xf32> to vector<432x64xf32>
    %12 = arith.addf %9, %11 : vector<432x64xf32>
    %cst_9 = arith.constant 0.000000e+00 : f32
    %13 = vector.broadcast %cst_9 : f32 to vector<432x64xf32>
    %14 = arith.maximumf %12, %13 : vector<432x64xf32>
    %c0_10 = arith.constant 0 : index
    %c0_11 = arith.constant 0 : index
    %15 = vector.load %arg2[%c0_10, %c0_11] : memref<432x1xf32, #tpu.memory_space<vmem>>, vector<432x1xf32>
    %16 = vector.broadcast %15 : vector<432x1xf32> to vector<432x64xf32>
    %17 = arith.mulf %14, %16 : vector<432x64xf32>
    %18 = vector.shape_cast %17 : vector<432x64xf32> to vector<18x24x64xf32>
    %c0_12 = arith.constant 0 : index
    %c0_13 = arith.constant 0 : index
    %c0_14 = arith.constant 0 : index
    %19 = vector.load %arg18[%c0_12, %c0_13, %c0_14] : memref<18x24x64xf32, #tpu.memory_space<vmem>>, vector<18x24x64xf32>
    tpu.vector_store %arg18[%c0_12, %c0_13, %c0_14], %18 {strides = array<i32>} : memref<18x24x64xf32, #tpu.memory_space<vmem>>, vector<18x24x64xf32>,
    %c0_15 = arith.constant 0 : index
    %c0_16 = arith.constant 0 : index
    %c0_17 = arith.constant 0 : index
    %20 = vector.load %arg18[%c0_15, %c0_16, %c0_17] : memref<18x24x64xf32, #tpu.memory_space<vmem>>, vector<16x16x64xf32>
    %c0_18 = arith.constant 0 : index
    %c0_19 = arith.constant 0 : index
    %c0_20 = arith.constant 0 : index
    %21 = vector.load %arg6[%c0_18, %c0_19, %c0_20] : memref<9x1x64xf32, #tpu.memory_space<vmem>>, vector<1x1x64xf32>
    %22 = vector.shape_cast %21 : vector<1x1x64xf32> to vector<1x64xf32>
    %23 = vector.shape_cast %22 : vector<1x64xf32> to vector<1x1x64xf32>
    %24 = vector.broadcast %23 : vector<1x1x64xf32> to vector<16x16x64xf32>
    %25 = arith.mulf %20, %24 : vector<16x16x64xf32>
    %c0_21 = arith.constant 0 : index
    %c1 = arith.constant 1 : index
    %c0_22 = arith.constant 0 : index
    %26 = vector.load %arg18[%c0_21, %c1, %c0_22] : memref<18x24x64xf32, #tpu.memory_space<vmem>>, vector<16x16x64xf32>
    %c1_23 = arith.constant 1 : index
    %c0_24 = arith.constant 0 : index
    %c0_25 = arith.constant 0 : index
    %27 = vector.load %arg6[%c1_23, %c0_24, %c0_25] : memref<9x1x64xf32, #tpu.memory_space<vmem>>, vector<1x1x64xf32>
    %28 = vector.shape_cast %27 : vector<1x1x64xf32> to vector<1x64xf32>
    %29 = vector.shape_cast %28 : vector<1x64xf32> to vector<1x1x64xf32>
    %30 = vector.broadcast %29 : vector<1x1x64xf32> to vector<16x16x64xf32>
    %31 = arith.mulf %26, %30 : vector<16x16x64xf32>
    %32 = arith.addf %25, %31 : vector<16x16x64xf32>
    %c0_26 = arith.constant 0 : index
    %c2 = arith.constant 2 : index
    %c0_27 = arith.constant 0 : index
    %33 = vector.load %arg18[%c0_26, %c2, %c0_27] : memref<18x24x64xf32, #tpu.memory_space<vmem>>, vector<16x16x64xf32>
    %c2_28 = arith.constant 2 : index
    %c0_29 = arith.constant 0 : index
    %c0_30 = arith.constant 0 : index
    %34 = vector.load %arg6[%c2_28, %c0_29, %c0_30] : memref<9x1x64xf32, #tpu.memory_space<vmem>>, vector<1x1x64xf32>
    %35 = vector.shape_cast %34 : vector<1x1x64xf32> to vector<1x64xf32>
    %36 = vector.shape_cast %35 : vector<1x64xf32> to vector<1x1x64xf32>
    %37 = vector.broadcast %36 : vector<1x1x64xf32> to vector<16x16x64xf32>
    %38 = arith.mulf %33, %37 : vector<16x16x64xf32>
    %39 = arith.addf %32, %38 : vector<16x16x64xf32>
    %c1_31 = arith.constant 1 : index
    %c0_32 = arith.constant 0 : index
    %c0_33 = arith.constant 0 : index
    %40 = vector.load %arg18[%c1_31, %c0_32, %c0_33] : memref<18x24x64xf32, #tpu.memory_space<vmem>>, vector<16x16x64xf32>
    %c3 = arith.constant 3 : index
    %c0_34 = arith.constant 0 : index
    %c0_35 = arith.constant 0 : index
    %41 = vector.load %arg6[%c3, %c0_34, %c0_35] : memref<9x1x64xf32, #tpu.memory_space<vmem>>, vector<1x1x64xf32>
    %42 = vector.shape_cast %41 : vector<1x1x64xf32> to vector<1x64xf32>
    %43 = vector.shape_cast %42 : vector<1x64xf32> to vector<1x1x64xf32>
    %44 = vector.broadcast %43 : vector<1x1x64xf32> to vector<16x16x64xf32>
    %45 = arith.mulf %40, %44 : vector<16x16x64xf32>
    %46 = arith.addf %39, %45 : vector<16x16x64xf32>
    %c1_36 = arith.constant 1 : index
    %c1_37 = arith.constant 1 : index
    %c0_38 = arith.constant 0 : index
    %47 = vector.load %arg18[%c1_36, %c1_37, %c0_38] : memref<18x24x64xf32, #tpu.memory_space<vmem>>, vector<16x16x64xf32>
    %c4 = arith.constant 4 : index
    %c0_39 = arith.constant 0 : index
    %c0_40 = arith.constant 0 : index
    %48 = vector.load %arg6[%c4, %c0_39, %c0_40] : memref<9x1x64xf32, #tpu.memory_space<vmem>>, vector<1x1x64xf32>
    %49 = vector.shape_cast %48 : vector<1x1x64xf32> to vector<1x64xf32>
    %50 = vector.shape_cast %49 : vector<1x64xf32> to vector<1x1x64xf32>
    %51 = vector.broadcast %50 : vector<1x1x64xf32> to vector<16x16x64xf32>
    %52 = arith.mulf %47, %51 : vector<16x16x64xf32>
    %53 = arith.addf %46, %52 : vector<16x16x64xf32>
    %c1_41 = arith.constant 1 : index
    %c2_42 = arith.constant 2 : index
    %c0_43 = arith.constant 0 : index
    %54 = vector.load %arg18[%c1_41, %c2_42, %c0_43] : memref<18x24x64xf32, #tpu.memory_space<vmem>>, vector<16x16x64xf32>
    %c5 = arith.constant 5 : index
    %c0_44 = arith.constant 0 : index
    %c0_45 = arith.constant 0 : index
    %55 = vector.load %arg6[%c5, %c0_44, %c0_45] : memref<9x1x64xf32, #tpu.memory_space<vmem>>, vector<1x1x64xf32>
    %56 = vector.shape_cast %55 : vector<1x1x64xf32> to vector<1x64xf32>
    %57 = vector.shape_cast %56 : vector<1x64xf32> to vector<1x1x64xf32>
    %58 = vector.broadcast %57 : vector<1x1x64xf32> to vector<16x16x64xf32>
    %59 = arith.mulf %54, %58 : vector<16x16x64xf32>
    %60 = arith.addf %53, %59 : vector<16x16x64xf32>
    %c2_46 = arith.constant 2 : index
    %c0_47 = arith.constant 0 : index
    %c0_48 = arith.constant 0 : index
    %61 = vector.load %arg18[%c2_46, %c0_47, %c0_48] : memref<18x24x64xf32, #tpu.memory_space<vmem>>, vector<16x16x64xf32>
    %c6 = arith.constant 6 : index
    %c0_49 = arith.constant 0 : index
    %c0_50 = arith.constant 0 : index
    %62 = vector.load %arg6[%c6, %c0_49, %c0_50] : memref<9x1x64xf32, #tpu.memory_space<vmem>>, vector<1x1x64xf32>
    %63 = vector.shape_cast %62 : vector<1x1x64xf32> to vector<1x64xf32>
    %64 = vector.shape_cast %63 : vector<1x64xf32> to vector<1x1x64xf32>
    %65 = vector.broadcast %64 : vector<1x1x64xf32> to vector<16x16x64xf32>
    %66 = arith.mulf %61, %65 : vector<16x16x64xf32>
    %67 = arith.addf %60, %66 : vector<16x16x64xf32>
    %c2_51 = arith.constant 2 : index
    %c1_52 = arith.constant 1 : index
    %c0_53 = arith.constant 0 : index
    %68 = vector.load %arg18[%c2_51, %c1_52, %c0_53] : memref<18x24x64xf32, #tpu.memory_space<vmem>>, vector<16x16x64xf32>
    %c7 = arith.constant 7 : index
    %c0_54 = arith.constant 0 : index
    %c0_55 = arith.constant 0 : index
    %69 = vector.load %arg6[%c7, %c0_54, %c0_55] : memref<9x1x64xf32, #tpu.memory_space<vmem>>, vector<1x1x64xf32>
    %70 = vector.shape_cast %69 : vector<1x1x64xf32> to vector<1x64xf32>
    %71 = vector.shape_cast %70 : vector<1x64xf32> to vector<1x1x64xf32>
    %72 = vector.broadcast %71 : vector<1x1x64xf32> to vector<16x16x64xf32>
    %73 = arith.mulf %68, %72 : vector<16x16x64xf32>
    %74 = arith.addf %67, %73 : vector<16x16x64xf32>
    %c2_56 = arith.constant 2 : index
    %c2_57 = arith.constant 2 : index
    %c0_58 = arith.constant 0 : index
    %75 = vector.load %arg18[%c2_56, %c2_57, %c0_58] : memref<18x24x64xf32, #tpu.memory_space<vmem>>, vector<16x16x64xf32>
    %c8 = arith.constant 8 : index
    %c0_59 = arith.constant 0 : index
    %c0_60 = arith.constant 0 : index
    %76 = vector.load %arg6[%c8, %c0_59, %c0_60] : memref<9x1x64xf32, #tpu.memory_space<vmem>>, vector<1x1x64xf32>
    %77 = vector.shape_cast %76 : vector<1x1x64xf32> to vector<1x64xf32>
    %78 = vector.shape_cast %77 : vector<1x64xf32> to vector<1x1x64xf32>
    %79 = vector.broadcast %78 : vector<1x1x64xf32> to vector<16x16x64xf32>
    %80 = arith.mulf %75, %79 : vector<16x16x64xf32>
    %81 = arith.addf %74, %80 : vector<16x16x64xf32>
    %c0_61 = arith.constant 0 : index
    %c0_62 = arith.constant 0 : index
    %82 = vector.load %arg7[%c0_61, %c0_62] : memref<1x64xf32, #tpu.memory_space<vmem>>, vector<1x64xf32>
    %83 = vector.shape_cast %82 : vector<1x64xf32> to vector<1x1x64xf32>
    %84 = vector.broadcast %83 : vector<1x1x64xf32> to vector<16x16x64xf32>
    %85 = arith.mulf %81, %84 : vector<16x16x64xf32>
    %c0_63 = arith.constant 0 : index
    %c0_64 = arith.constant 0 : index
    %86 = vector.load %arg8[%c0_63, %c0_64] : memref<1x64xf32, #tpu.memory_space<vmem>>, vector<1x64xf32>
    %87 = vector.shape_cast %86 : vector<1x64xf32> to vector<1x1x64xf32>
    %88 = vector.broadcast %87 : vector<1x1x64xf32> to vector<16x16x64xf32>
    %89 = arith.addf %85, %88 : vector<16x16x64xf32>
    %cst_65 = arith.constant 0.000000e+00 : f32
    %90 = vector.broadcast %cst_65 : f32 to vector<16x16x64xf32>
    %91 = arith.maximumf %89, %90 : vector<16x16x64xf32>
    %cst_66 = arith.constant dense<0.000000e+00> : vector<64xf32>
    %92 = vector.multi_reduction <add>, %91, %cst_66 [0, 1] : vector<16x16x64xf32> to vector<64xf32>
    %93 = vector.shape_cast %92 : vector<64xf32> to vector<1x1x64xf32>
    %cst_67 = arith.constant 2.560000e+02 : f32
    %94 = vector.broadcast %cst_67 : f32 to vector<1x1x64xf32>
    %95 = arith.divf %93, %94 : vector<1x1x64xf32>
    %96 = vector.shape_cast %95 : vector<1x1x64xf32> to vector<1x64xf32>
    %c0_68 = arith.constant 0 : index
    %c0_69 = arith.constant 0 : index
    %97 = vector.load %arg9[%c0_68, %c0_69] : memref<64x8xf32, #tpu.memory_space<vmem>>, vector<64x8xf32>
    %cst_70 = arith.constant dense<0.000000e+00> : vector<1x8xf32>
    %98 = tpu.matmul %96, %97, %cst_70 {dimension_numbers = #tpu.dot_dimension_numbers<[1], [0], [0], [1], [0, 0, 1, 1], [], []>} : vector<1x64xf32>, vector<64x8xf32>, vector<1x8xf32> -> vector<1x8xf32>
    %c0_71 = arith.constant 0 : index
    %c0_72 = arith.constant 0 : index
    %99 = vector.load %arg10[%c0_71, %c0_72] : memref<1x8xf32, #tpu.memory_space<vmem>>, vector<1x8xf32>
    %100 = arith.addf %98, %99 : vector<1x8xf32>
    %cst_73 = arith.constant 0.000000e+00 : f32
    %101 = vector.broadcast %cst_73 : f32 to vector<1x8xf32>
    %102 = arith.maximumf %100, %101 : vector<1x8xf32>
    %c0_74 = arith.constant 0 : index
    %c0_75 = arith.constant 0 : index
    %103 = vector.load %arg11[%c0_74, %c0_75] : memref<8x64xf32, #tpu.memory_space<vmem>>, vector<8x64xf32>
    %cst_76 = arith.constant dense<0.000000e+00> : vector<1x64xf32>
    %104 = tpu.matmul %102, %103, %cst_76 {dimension_numbers = #tpu.dot_dimension_numbers<[1], [0], [0], [1], [0, 0, 1, 1], [], []>} : vector<1x8xf32>, vector<8x64xf32>, vector<1x64xf32> -> vector<1x64xf32>
    %c0_77 = arith.constant 0 : index
    %c0_78 = arith.constant 0 : index
    %105 = vector.load %arg12[%c0_77, %c0_78] : memref<1x64xf32, #tpu.memory_space<vmem>>, vector<1x64xf32>
    %106 = arith.addf %104, %105 : vector<1x64xf32>
    %cst_79 = arith.constant 0.000000e+00 : f32
    %107 = vector.broadcast %cst_79 : f32 to vector<1x64xf32>
    %108 = arith.subf %107, %106 : vector<1x64xf32>
    %109 = math.exp %108 : vector<1x64xf32>
    %cst_80 = arith.constant 1.000000e+00 : f32
    %110 = vector.broadcast %cst_80 : f32 to vector<1x64xf32>
    %111 = arith.addf %110, %109 : vector<1x64xf32>
    %112 = tpu.reciprocal %111 {approx = true} : vector<1x64xf32> -> vector<1x64xf32>
    %113 = vector.shape_cast %91 : vector<16x16x64xf32> to vector<256x64xf32>
    %114 = vector.broadcast %112 : vector<1x64xf32> to vector<256x64xf32>
    %115 = arith.mulf %113, %114 : vector<256x64xf32>
    %116 = arith.truncf %115 : vector<256x64xf32> to vector<256x64xbf16>
    %c0_81 = arith.constant 0 : index
    %c0_82 = arith.constant 0 : index
    %117 = vector.load %arg13[%c0_81, %c0_82] : memref<64x16xbf16, #tpu.memory_space<vmem>>, vector<64x16xbf16>
    %cst_83 = arith.constant dense<0.000000e+00> : vector<256x16xf32>
    %118 = tpu.matmul %116, %117, %cst_83 {dimension_numbers = #tpu.dot_dimension_numbers<[1], [0], [0], [1], [0, 0, 1, 1], [], []>} : vector<256x64xbf16>, vector<64x16xbf16>, vector<256x16xf32> -> vector<256x16xf32>
    %c0_84 = arith.constant 0 : index
    %c0_85 = arith.constant 0 : index
    %119 = vector.load %arg14[%c0_84, %c0_85] : memref<1x16xf32, #tpu.memory_space<vmem>>, vector<1x16xf32>
    %120 = vector.broadcast %119 : vector<1x16xf32> to vector<256x16xf32>
    %121 = arith.mulf %118, %120 : vector<256x16xf32>
    %c0_86 = arith.constant 0 : index
    %c0_87 = arith.constant 0 : index
    %122 = vector.load %arg15[%c0_86, %c0_87] : memref<1x16xf32, #tpu.memory_space<vmem>>, vector<1x16xf32>
    %123 = vector.broadcast %122 : vector<1x16xf32> to vector<256x16xf32>
    %124 = arith.addf %121, %123 : vector<256x16xf32>
    %c0_88 = arith.constant 0 : index
    %c0_89 = arith.constant 0 : index
    %c0_90 = arith.constant 0 : index
    %125 = vector.load %arg16[%c0_88, %c0_89, %c0_90] : memref<1x256x16xbf16, #tpu.memory_space<vmem>>, vector<1x256x16xbf16>
    %126 = vector.shape_cast %125 : vector<1x256x16xbf16> to vector<256x16xbf16>
    %127 = arith.extf %126 : vector<256x16xbf16> to vector<256x16xf32>
    %128 = arith.addf %124, %127 : vector<256x16xf32>
    %c0_91 = arith.constant 0 : index
    %c0_92 = arith.constant 0 : index
    %c0_93 = arith.constant 0 : index
    %129 = vector.load %arg17[%c0_91, %c0_92, %c0_93] : memref<1x256x16xf32, #tpu.memory_space<vmem>>, vector<1x256x16xf32>
    %130 = vector.shape_cast %129 : vector<1x256x16xf32> to vector<256x16xf32>
    %131 = vector.shape_cast %128 : vector<256x16xf32> to vector<1x256x16xf32>
    tpu.vector_store %arg17[%c0_91, %c0_92, %c0_93], %131 {strides = array<i32>} : memref<1x256x16xf32, #tpu.memory_space<vmem>>, vector<1x256x16xf32>,
    return
  }
  func.func @transform_0(%arg0: i32) -> (i32, i32, i32, i32) {
    %c0_i32 = arith.constant 0 : i32
    %c0_i32_0 = arith.constant 0 : i32
    %c0_i32_1 = arith.constant 0 : i32
    %c0_i32_2 = arith.constant 0 : i32
    return %arg0, %c0_i32, %c0_i32_0, %c0_i32_1 : i32, i32, i32, i32
  }
  func.func @transform_1(%arg0: i32) -> (i32, i32) {
    %c0_i32 = arith.constant 0 : i32
    %c0_i32_0 = arith.constant 0 : i32
    %c0_i32_1 = arith.constant 0 : i32
    return %c0_i32, %c0_i32_0 : i32, i32
  }
  func.func @transform_2(%arg0: i32) -> (i32, i32) {
    %c0_i32 = arith.constant 0 : i32
    %c0_i32_0 = arith.constant 0 : i32
    %c0_i32_1 = arith.constant 0 : i32
    return %c0_i32, %c0_i32_0 : i32, i32
  }
  func.func @transform_3(%arg0: i32) -> (i32, i32) {
    %c0_i32 = arith.constant 0 : i32
    %c0_i32_0 = arith.constant 0 : i32
    %c0_i32_1 = arith.constant 0 : i32
    return %c0_i32, %c0_i32_0 : i32, i32
  }
  func.func @transform_4(%arg0: i32) -> (i32, i32) {
    %c0_i32 = arith.constant 0 : i32
    %c0_i32_0 = arith.constant 0 : i32
    %c0_i32_1 = arith.constant 0 : i32
    return %c0_i32, %c0_i32_0 : i32, i32
  }
  func.func @transform_5(%arg0: i32) -> (i32, i32, i32) {
    %c0_i32 = arith.constant 0 : i32
    %c0_i32_0 = arith.constant 0 : i32
    %c0_i32_1 = arith.constant 0 : i32
    %c0_i32_2 = arith.constant 0 : i32
    return %c0_i32, %c0_i32_0, %c0_i32_1 : i32, i32, i32
  }
  func.func @transform_6(%arg0: i32) -> (i32, i32) {
    %c0_i32 = arith.constant 0 : i32
    %c0_i32_0 = arith.constant 0 : i32
    %c0_i32_1 = arith.constant 0 : i32
    return %c0_i32, %c0_i32_0 : i32, i32
  }
  func.func @transform_7(%arg0: i32) -> (i32, i32) {
    %c0_i32 = arith.constant 0 : i32
    %c0_i32_0 = arith.constant 0 : i32
    %c0_i32_1 = arith.constant 0 : i32
    return %c0_i32, %c0_i32_0 : i32, i32
  }
  func.func @transform_8(%arg0: i32) -> (i32, i32) {
    %c0_i32 = arith.constant 0 : i32
    %c0_i32_0 = arith.constant 0 : i32
    %c0_i32_1 = arith.constant 0 : i32
    return %c0_i32, %c0_i32_0 : i32, i32
  }
  func.func @transform_9(%arg0: i32) -> (i32, i32) {
    %c0_i32 = arith.constant 0 : i32
    %c0_i32_0 = arith.constant 0 : i32
    %c0_i32_1 = arith.constant 0 : i32
    return %c0_i32, %c0_i32_0 : i32, i32
  }
  func.func @transform_10(%arg0: i32) -> (i32, i32) {
    %c0_i32 = arith.constant 0 : i32
    %c0_i32_0 = arith.constant 0 : i32
    %c0_i32_1 = arith.constant 0 : i32
    return %c0_i32, %c0_i32_0 : i32, i32
  }
  func.func @transform_11(%arg0: i32) -> (i32, i32) {
    %c0_i32 = arith.constant 0 : i32
    %c0_i32_0 = arith.constant 0 : i32
    %c0_i32_1 = arith.constant 0 : i32
    return %c0_i32, %c0_i32_0 : i32, i32
  }
  func.func @transform_12(%arg0: i32) -> (i32, i32) {
    %c0_i32 = arith.constant 0 : i32
    %c0_i32_0 = arith.constant 0 : i32
    %c0_i32_1 = arith.constant 0 : i32
    return %c0_i32, %c0_i32_0 : i32, i32
  }
  func.func @transform_13(%arg0: i32) -> (i32, i32) {
    %c0_i32 = arith.constant 0 : i32
    %c0_i32_0 = arith.constant 0 : i32
    %c0_i32_1 = arith.constant 0 : i32
    return %c0_i32, %c0_i32_0 : i32, i32
  }
  func.func @transform_14(%arg0: i32) -> (i32, i32) {
    %c0_i32 = arith.constant 0 : i32
    %c0_i32_0 = arith.constant 0 : i32
    %c0_i32_1 = arith.constant 0 : i32
    return %c0_i32, %c0_i32_0 : i32, i32
  }
  func.func @transform_15(%arg0: i32) -> (i32, i32, i32) {
    %c0_i32 = arith.constant 0 : i32
    %c0_i32_0 = arith.constant 0 : i32
    %c0_i32_1 = arith.constant 0 : i32
    return %arg0, %c0_i32, %c0_i32_0 : i32, i32, i32
  }
  func.func @transform_16(%arg0: i32) -> (i32, i32, i32) {
    %c0_i32 = arith.constant 0 : i32
    %c0_i32_0 = arith.constant 0 : i32
    %c0_i32_1 = arith.constant 0 : i32
    return %arg0, %c0_i32, %c0_i32_0 : i32, i32, i32
  }
}

</mosaic_0001>

<llo_original>
// kernel: _lambda_.1
$region0: #{_lambda_.1}
  #allocation0 [shape = 'u32[]', space=smem, size = 0x4, offset = 0x4, fixed_abs, tag = 'smem constant byte address 0x4 - core index']
  #allocation1 [shape = 'u32[144,128]{1,0:T(1,128)}', space=vmem, size = 0x12000, scoped, tag = 'internal scratch']
  #allocation2 [shape = 'f32[18,24,64]{2,1,0:T(8,128)}', space=vmem, size = 0x36000, scoped, tag = 'scratch operand']
  %s0 = inlined_call_operand.vmem [shape: bf16[2,18,24,16], index: 0, kind: input, shape index: {}]
  %s1 = inlined_call_operand.vmem [shape: f32[432,1], index: 1, kind: input, shape index: {}]
  %s2 = inlined_call_operand.vmem [shape: bf16[16,64], index: 2, kind: input, shape index: {}]
  %s3 = inlined_call_operand.vmem [shape: f32[1,64], index: 3, kind: input, shape index: {}]
  %s4 = inlined_call_operand.vmem [shape: f32[1,64], index: 4, kind: input, shape index: {}]
  %s5 = inlined_call_operand.vmem [shape: f32[9,1,64], index: 5, kind: input, shape index: {}]
  %s6 = inlined_call_operand.vmem [shape: f32[1,64], index: 6, kind: input, shape index: {}]
  %s7 = inlined_call_operand.vmem [shape: f32[1,64], index: 7, kind: input, shape index: {}]
  %s8 = inlined_call_operand.vmem [shape: f32[64,8], index: 8, kind: input, shape index: {}]
  %s9 = inlined_call_operand.vmem [shape: f32[1,8], index: 9, kind: input, shape index: {}]
  %s10 = inlined_call_operand.vmem [shape: f32[8,64], index: 10, kind: input, shape index: {}]
  %s11 = inlined_call_operand.vmem [shape: f32[1,64], index: 11, kind: input, shape index: {}]
  %s12 = inlined_call_operand.vmem [shape: bf16[64,16], index: 12, kind: input, shape index: {}]
  %s13 = inlined_call_operand.vmem [shape: f32[1,16], index: 13, kind: input, shape index: {}]
  %s14 = inlined_call_operand.vmem [shape: f32[1,16], index: 14, kind: input, shape index: {}]
  %s15 = inlined_call_operand.vmem [shape: bf16[2,256,16], index: 15, kind: input, shape index: {}]
  %s16 = inlined_call_operand.vmem [shape: f32[2,256,16], index: 16, kind: output, shape index: {}]
  %s17 = sld [smem:[#allocation0]]
  $region97: #{_lambda_.1} parent=0
    _
  %s19 = ssub.s32 1, %s17
  %s20 = scalar_select 0, %s19, %s17
  loop: start=0, step=1, limit=4
  $region2: #{_lambda_.1} parent=0 // loop_pre_header
    _
  $region3: #{_lambda_.1} parent=0 // loop_header
    %s22 = sphi 0, %s26
    %p23 = scmp.ge.s32.totalorder %s22, 4
    %s32 = sphi 0, %s34
    %s35 = sphi 0, %s32
    %s36 = sphi 0, %s35
    %s52 = sphi 0, %s36
    %s56 = sphi 0, %s56
    %s58 = sphi 0, %s56
    %s59 = sphi 0, %s58
    %s73 = sphi 0, %s59
    %s77 = sphi 0, %s77
    %s79 = sphi 0, %s77
    %s80 = sphi 0, %s79
    %s94 = sphi 0, %s80
    %s98 = sphi 0, %s98
    %s100 = sphi 0, %s98
    %s101 = sphi 0, %s100
    %s115 = sphi 0, %s101
    %s119 = sphi 0, %s119
    %s121 = sphi 0, %s119
    %s122 = sphi 0, %s121
    %s136 = sphi 0, %s122
    %s140 = sphi 0, %s140
    %s142 = sphi 0, %s140
    %s143 = sphi 0, %s142
    %s157 = sphi 0, %s143
    %s161 = sphi 0, %s161
    %s163 = sphi 0, %s161
    %s164 = sphi 0, %s163
    %s178 = sphi 0, %s164
    %s182 = sphi 0, %s182
    %s184 = sphi 0, %s182
    %s185 = sphi 0, %s184
    %s199 = sphi 0, %s185
    %s203 = sphi 0, %s203
    %s205 = sphi 0, %s203
    %s206 = sphi 0, %s205
    %s220 = sphi 0, %s206
    %s224 = sphi 0, %s224
    %s226 = sphi 0, %s224
    %s227 = sphi 0, %s226
    %s241 = sphi 0, %s227
    %s245 = sphi 0, %s245
    %s247 = sphi 0, %s245
    %s248 = sphi 0, %s247
    %s262 = sphi 0, %s248
    %s266 = sphi 0, %s266
    %s268 = sphi 0, %s266
    %s269 = sphi 0, %s268
    %s283 = sphi 0, %s269
    %s287 = sphi 0, %s287
    %s289 = sphi 0, %s287
    %s290 = sphi 0, %s289
    %s304 = sphi 0, %s290
    %s308 = sphi 0, %s308
    %s310 = sphi 0, %s308
    %s311 = sphi 0, %s310
    %s325 = sphi 0, %s311
    %s329 = sphi 0, %s329
    %s331 = sphi 0, %s329
    %s332 = sphi 0, %s331
    %s346 = sphi 0, %s332
    %s352 = sphi 0, %s354
    %s355 = sphi 0, %s352
    %s356 = sphi 0, %s355
    %s372 = sphi 0, %s356
    %s378 = sphi 0, %s380
    %s381 = sphi 0, %s378
    %s382 = sphi 0, %s381
    %s398 = sphi 0, %s382
  $region4: #{_lambda_.1} parent=0 // loop_header_branch
    %25 = sbr.rel (%p23) target = $region8
  $region5: #{_lambda_.1} parent=0 // loop_body
    %s27 = ssub.s32 %s22, 1
    %s28 = ssub.s32 %s22, 2
    %s29 = sadd.s32 %s22, 1
    %s30 = ssub.s32 %s22, %s29
    %p31 = scmp.eq.s32.totalorder %s30, 0
    %s33 = sadd.s32 %s32, 1
    %s34 = scalar_select %p31, %s32, %s33
    %p37 = pneg %p31
    %p38 = scmp.eq.s32.totalorder %s22, 1
    %p39 = por %p37, %p38
    %p40 = scmp.ne.s32.totalorder %s32, %s35
    %p41 = scmp.eq.s32.totalorder %s22, 0
    %p42 = por %p40, %p41
    %p43 = scmp.ne.s32.totalorder %s32, %s35
    %p44 = scmp.eq.s32.totalorder %s27, 1
    %p45 = por %p43, %p44
    %p46 = scmp.ne.s32.totalorder %s35, %s36
    %p47 = scmp.eq.s32.totalorder %s27, 0
    %p48 = por %p46, %p47
    %p49 = scmp.ne.s32.totalorder %s35, %s36
    %p50 = scmp.eq.s32.totalorder %s28, 1
    %p51 = por %p49, %p50
    %p53 = scmp.ne.s32.totalorder %s36, %s52
    %p54 = scmp.eq.s32.totalorder %s28, 0
    %p55 = por %p53, %p54
    %s57 = sadd.s32 %s56, 1
    %p60 = scmp.eq.s32.totalorder %s22, 1
    %p61 = scmp.ne.s32.totalorder %s56, %s58
    %p62 = scmp.eq.s32.totalorder %s22, 0
    %p63 = por %p61, %p62
    %p64 = scmp.ne.s32.totalorder %s56, %s58
    %p65 = scmp.eq.s32.totalorder %s27, 1
    %p66 = por %p64, %p65
    %p67 = scmp.ne.s32.totalorder %s58, %s59
    %p68 = scmp.eq.s32.totalorder %s27, 0
    %p69 = por %p67, %p68
    %p70 = scmp.ne.s32.totalorder %s58, %s59
    %p71 = scmp.eq.s32.totalorder %s28, 1
    %p72 = por %p70, %p71
    %p74 = scmp.ne.s32.totalorder %s59, %s73
    %p75 = scmp.eq.s32.totalorder %s28, 0
    %p76 = por %p74, %p75
    %s78 = sadd.s32 %s77, 1
    %p81 = scmp.eq.s32.totalorder %s22, 1
    %p82 = scmp.ne.s32.totalorder %s77, %s79
    %p83 = scmp.eq.s32.totalorder %s22, 0
    %p84 = por %p82, %p83
    %p85 = scmp.ne.s32.totalorder %s77, %s79
    %p86 = scmp.eq.s32.totalorder %s27, 1
    %p87 = por %p85, %p86
    %p88 = scmp.ne.s32.totalorder %s79, %s80
    %p89 = scmp.eq.s32.totalorder %s27, 0
    %p90 = por %p88, %p89
    %p91 = scmp.ne.s32.totalorder %s79, %s80
    %p92 = scmp.eq.s32.totalorder %s28, 1
    %p93 = por %p91, %p92
    %p95 = scmp.ne.s32.totalorder %s80, %s94
    %p96 = scmp.eq.s32.totalorder %s28, 0
    %p97 = por %p95, %p96
    %s99 = sadd.s32 %s98, 1
    %p102 = scmp.eq.s32.totalorder %s22, 1
    %p103 = scmp.ne.s32.totalorder %s98, %s100
    %p104 = scmp.eq.s32.totalorder %s22, 0
    %p105 = por %p103, %p104
    %p106 = scmp.ne.s32.totalorder %s98, %s100
    %p107 = scmp.eq.s32.totalorder %s27, 1
    %p108 = por %p106, %p107
    %p109 = scmp.ne.s32.totalorder %s100, %s101
    %p110 = scmp.eq.s32.totalorder %s27, 0
    %p111 = por %p109, %p110
    %p112 = scmp.ne.s32.totalorder %s100, %s101
    %p113 = scmp.eq.s32.totalorder %s28, 1
    %p114 = por %p112, %p113
    %p116 = scmp.ne.s32.totalorder %s101, %s115
    %p117 = scmp.eq.s32.totalorder %s28, 0
    %p118 = por %p116, %p117
    %s120 = sadd.s32 %s119, 1
    %p123 = scmp.eq.s32.totalorder %s22, 1
    %p124 = scmp.ne.s32.totalorder %s119, %s121
    %p125 = scmp.eq.s32.totalorder %s22, 0
    %p126 = por %p124, %p125
    %p127 = scmp.ne.s32.totalorder %s119, %s121
    %p128 = scmp.eq.s32.totalorder %s27, 1
    %p129 = por %p127, %p128
    %p130 = scmp.ne.s32.totalorder %s121, %s122
    %p131 = scmp.eq.s32.totalorder %s27, 0
    %p132 = por %p130, %p131
    %p133 = scmp.ne.s32.totalorder %s121, %s122
    %p134 = scmp.eq.s32.totalorder %s28, 1
    %p135 = por %p133, %p134
    %p137 = scmp.ne.s32.totalorder %s122, %s136
    %p138 = scmp.eq.s32.totalorder %s28, 0
    %p139 = por %p137, %p138
    %s141 = sadd.s32 %s140, 1
    %p144 = scmp.eq.s32.totalorder %s22, 1
    %p145 = scmp.ne.s32.totalorder %s140, %s142
    %p146 = scmp.eq.s32.totalorder %s22, 0
    %p147 = por %p145, %p146
    %p148 = scmp.ne.s32.totalorder %s140, %s142
    %p149 = scmp.eq.s32.totalorder %s27, 1
    %p150 = por %p148, %p149
    %p151 = scmp.ne.s32.totalorder %s142, %s143
    %p152 = scmp.eq.s32.totalorder %s27, 0
    %p153 = por %p151, %p152
    %p154 = scmp.ne.s32.totalorder %s142, %s143
    %p155 = scmp.eq.s32.totalorder %s28, 1
    %p156 = por %p154, %p155
    %p158 = scmp.ne.s32.totalorder %s143, %s157
    %p159 = scmp.eq.s32.totalorder %s28, 0
    %p160 = por %p158, %p159
    %s162 = sadd.s32 %s161, 1
    %p165 = scmp.eq.s32.totalorder %s22, 1
    %p166 = scmp.ne.s32.totalorder %s161, %s163
    %p167 = scmp.eq.s32.totalorder %s22, 0
    %p168 = por %p166, %p167
    %p169 = scmp.ne.s32.totalorder %s161, %s163
    %p170 = scmp.eq.s32.totalorder %s27, 1
    %p171 = por %p169, %p170
    %p172 = scmp.ne.s32.totalorder %s163, %s164
    %p173 = scmp.eq.s32.totalorder %s27, 0
    %p174 = por %p172, %p173
    %p175 = scmp.ne.s32.totalorder %s163, %s164
    %p176 = scmp.eq.s32.totalorder %s28, 1
    %p177 = por %p175, %p176
    %p179 = scmp.ne.s32.totalorder %s164, %s178
    %p180 = scmp.eq.s32.totalorder %s28, 0
    %p181 = por %p179, %p180
    %s183 = sadd.s32 %s182, 1
    %p186 = scmp.eq.s32.totalorder %s22, 1
    %p187 = scmp.ne.s32.totalorder %s182, %s184
    %p188 = scmp.eq.s32.totalorder %s22, 0
    %p189 = por %p187, %p188
    %p190 = scmp.ne.s32.totalorder %s182, %s184
    %p191 = scmp.eq.s32.totalorder %s27, 1
    %p192 = por %p190, %p191
    %p193 = scmp.ne.s32.totalorder %s184, %s185
    %p194 = scmp.eq.s32.totalorder %s27, 0
    %p195 = por %p193, %p194
    %p196 = scmp.ne.s32.totalorder %s184, %s185
    %p197 = scmp.eq.s32.totalorder %s28, 1
    %p198 = por %p196, %p197
    %p200 = scmp.ne.s32.totalorder %s185, %s199
    %p201 = scmp.eq.s32.totalorder %s28, 0
    %p202 = por %p200, %p201
    %s204 = sadd.s32 %s203, 1
    %p207 = scmp.eq.s32.totalorder %s22, 1
    %p208 = scmp.ne.s32.totalorder %s203, %s205
    %p209 = scmp.eq.s32.totalorder %s22, 0
    %p210 = por %p208, %p209
    %p211 = scmp.ne.s32.totalorder %s203, %s205
    %p212 = scmp.eq.s32.totalorder %s27, 1
    %p213 = por %p211, %p212
    %p214 = scmp.ne.s32.totalorder %s205, %s206
    %p215 = scmp.eq.s32.totalorder %s27, 0
    %p216 = por %p214, %p215
    %p217 = scmp.ne.s32.totalorder %s205, %s206
    %p218 = scmp.eq.s32.totalorder %s28, 1
    %p219 = por %p217, %p218
    %p221 = scmp.ne.s32.totalorder %s206, %s220
    %p222 = scmp.eq.s32.totalorder %s28, 0
    %p223 = por %p221, %p222
    %s225 = sadd.s32 %s224, 1
    %p228 = scmp.eq.s32.totalorder %s22, 1
    %p229 = scmp.ne.s32.totalorder %s224, %s226
    %p230 = scmp.eq.s32.totalorder %s22, 0
    %p231 = por %p229, %p230
    %p232 = scmp.ne.s32.totalorder %s224, %s226
    %p233 = scmp.eq.s32.totalorder %s27, 1
    %p234 = por %p232, %p233
    %p235 = scmp.ne.s32.totalorder %s226, %s227
    %p236 = scmp.eq.s32.totalorder %s27, 0
    %p237 = por %p235, %p236
    %p238 = scmp.ne.s32.totalorder %s226, %s227
    %p239 = scmp.eq.s32.totalorder %s28, 1
    %p240 = por %p238, %p239
    %p242 = scmp.ne.s32.totalorder %s227, %s241
    %p243 = scmp.eq.s32.totalorder %s28, 0
    %p244 = por %p242, %p243
    %s246 = sadd.s32 %s245, 1
    %p249 = scmp.eq.s32.totalorder %s22, 1
    %p250 = scmp.ne.s32.totalorder %s245, %s247
    %p251 = scmp.eq.s32.totalorder %s22, 0
    %p252 = por %p250, %p251
    %p253 = scmp.ne.s32.totalorder %s245, %s247
    %p254 = scmp.eq.s32.totalorder %s27, 1
    %p255 = por %p253, %p254
    %p256 = scmp.ne.s32.totalorder %s247, %s248
    %p257 = scmp.eq.s32.totalorder %s27, 0
    %p258 = por %p256, %p257
    %p259 = scmp.ne.s32.totalorder %s247, %s248
    %p260 = scmp.eq.s32.totalorder %s28, 1
    %p261 = por %p259, %p260
    %p263 = scmp.ne.s32.totalorder %s248, %s262
    %p264 = scmp.eq.s32.totalorder %s28, 0
    %p265 = por %p263, %p264
    %s267 = sadd.s32 %s266, 1
    %p270 = scmp.eq.s32.totalorder %s22, 1
    %p271 = scmp.ne.s32.totalorder %s266, %s268
    %p272 = scmp.eq.s32.totalorder %s22, 0
    %p273 = por %p271, %p272
    %p274 = scmp.ne.s32.totalorder %s266, %s268
    %p275 = scmp.eq.s32.totalorder %s27, 1
    %p276 = por %p274, %p275
    %p277 = scmp.ne.s32.totalorder %s268, %s269
    %p278 = scmp.eq.s32.totalorder %s27, 0
    %p279 = por %p277, %p278
    %p280 = scmp.ne.s32.totalorder %s268, %s269
    %p281 = scmp.eq.s32.totalorder %s28, 1
    %p282 = por %p280, %p281
    %p284 = scmp.ne.s32.totalorder %s269, %s283
    %p285 = scmp.eq.s32.totalorder %s28, 0
    %p286 = por %p284, %p285
    %s288 = sadd.s32 %s287, 1
    %p291 = scmp.eq.s32.totalorder %s22, 1
    %p292 = scmp.ne.s32.totalorder %s287, %s289
    %p293 = scmp.eq.s32.totalorder %s22, 0
    %p294 = por %p292, %p293
    %p295 = scmp.ne.s32.totalorder %s287, %s289
    %p296 = scmp.eq.s32.totalorder %s27, 1
    %p297 = por %p295, %p296
    %p298 = scmp.ne.s32.totalorder %s289, %s290
    %p299 = scmp.eq.s32.totalorder %s27, 0
    %p300 = por %p298, %p299
    %p301 = scmp.ne.s32.totalorder %s289, %s290
    %p302 = scmp.eq.s32.totalorder %s28, 1
    %p303 = por %p301, %p302
    %p305 = scmp.ne.s32.totalorder %s290, %s304
    %p306 = scmp.eq.s32.totalorder %s28, 0
    %p307 = por %p305, %p306
    %s309 = sadd.s32 %s308, 1
    %p312 = scmp.eq.s32.totalorder %s22, 1
    %p313 = scmp.ne.s32.totalorder %s308, %s310
    %p314 = scmp.eq.s32.totalorder %s22, 0
    %p315 = por %p313, %p314
    %p316 = scmp.ne.s32.totalorder %s308, %s310
    %p317 = scmp.eq.s32.totalorder %s27, 1
    %p318 = por %p316, %p317
    %p319 = scmp.ne.s32.totalorder %s310, %s311
    %p320 = scmp.eq.s32.totalorder %s27, 0
    %p321 = por %p319, %p320
    %p322 = scmp.ne.s32.totalorder %s310, %s311
    %p323 = scmp.eq.s32.totalorder %s28, 1
    %p324 = por %p322, %p323
    %p326 = scmp.ne.s32.totalorder %s311, %s325
    %p327 = scmp.eq.s32.totalorder %s28, 0
    %p328 = por %p326, %p327
    %s330 = sadd.s32 %s329, 1
    %p333 = scmp.eq.s32.totalorder %s22, 1
    %p334 = scmp.ne.s32.totalorder %s329, %s331
    %p335 = scmp.eq.s32.totalorder %s22, 0
    %p336 = por %p334, %p335
    %p337 = scmp.ne.s32.totalorder %s329, %s331
    %p338 = scmp.eq.s32.totalorder %s27, 1
    %p339 = por %p337, %p338
    %p340 = scmp.ne.s32.totalorder %s331, %s332
    %p341 = scmp.eq.s32.totalorder %s27, 0
    %p342 = por %p340, %p341
    %p343 = scmp.ne.s32.totalorder %s331, %s332
    %p344 = scmp.eq.s32.totalorder %s28, 1
    %p345 = por %p343, %p344
    %p347 = scmp.ne.s32.totalorder %s332, %s346
    %p348 = scmp.eq.s32.totalorder %s28, 0
    %p349 = por %p347, %p348
    %s350 = ssub.s32 %s22, %s29
    %p351 = scmp.eq.s32.totalorder %s350, 0
    %s353 = sadd.s32 %s352, 1
    %s354 = scalar_select %p351, %s352, %s353
    %p357 = pneg %p351
    %p358 = scmp.eq.s32.totalorder %s22, 1
    %p359 = por %p357, %p358
    %p360 = scmp.ne.s32.totalorder %s352, %s355
    %p361 = scmp.eq.s32.totalorder %s22, 0
    %p362 = por %p360, %p361
    %p363 = scmp.ne.s32.totalorder %s352, %s355
    %p364 = scmp.eq.s32.totalorder %s27, 1
    %p365 = por %p363, %p364
    %p366 = scmp.ne.s32.totalorder %s355, %s356
    %p367 = scmp.eq.s32.totalorder %s27, 0
    %p368 = por %p366, %p367
    %p369 = scmp.ne.s32.totalorder %s355, %s356
    %p370 = scmp.eq.s32.totalorder %s28, 1
    %p371 = por %p369, %p370
    %p373 = scmp.ne.s32.totalorder %s356, %s372
    %p374 = scmp.eq.s32.totalorder %s28, 0
    %p375 = por %p373, %p374
    %s376 = ssub.s32 %s22, %s29
    %p377 = scmp.eq.s32.totalorder %s376, 0
    %s379 = sadd.s32 %s378, 1
    %s380 = scalar_select %p377, %s378, %s379
    %p383 = pneg %p377
    %p384 = scmp.eq.s32.totalorder %s22, 1
    %p385 = por %p383, %p384
    %p386 = scmp.ne.s32.totalorder %s378, %s381
    %p387 = scmp.eq.s32.totalorder %s22, 0
    %p388 = por %p386, %p387
    %p389 = scmp.ne.s32.totalorder %s378, %s381
    %p390 = scmp.eq.s32.totalorder %s27, 1
    %p391 = por %p389, %p390
    %p392 = scmp.ne.s32.totalorder %s381, %s382
    %p393 = scmp.eq.s32.totalorder %s27, 0
    %p394 = por %p392, %p393
    %p395 = scmp.ne.s32.totalorder %s381, %s382
    %p396 = scmp.eq.s32.totalorder %s28, 1
    %p397 = por %p395, %p396
    %p399 = scmp.ne.s32.totalorder %s382, %s398
    %p400 = scmp.eq.s32.totalorder %s28, 0
    %p401 = por %p399, %p400
    %p402 = scmp.le.s32.totalorder 1, %s22
    %p403 = scmp.lt.s32.totalorder %s22, 3
    %p404 = pnand %p402, %p403
    %p405 = pneg %p404
    // Predicated region
    $region9: #{_lambda_.1} parent=5 // pred_check
      _
    $region10: #{_lambda_.1} parent=5 // pred_check_branch
      %407 = sbr.rel (%p404) target = $region12
    $region11: #{_lambda_.1} parent=5 // pred_region
      %s408 = ssub.s32 %s22, 1
      // Predicated region
      $region13: #{_lambda_.1} parent=11 // pred_check
        %p409 = pneg %p69
      $region14: #{_lambda_.1} parent=11 // pred_check_branch
        %411 = sbr.rel (%p409) target = $region16
      $region15: #{_lambda_.1} parent=11 // pred_region
        _
      $region16: #{_lambda_.1} parent=11 // pred_fallthru
        _
      // Predicated region
      $region17: #{_lambda_.1} parent=11 // pred_check
        %p412 = pneg %p90
      $region18: #{_lambda_.1} parent=11 // pred_check_branch
        %414 = sbr.rel (%p412) target = $region20
      $region19: #{_lambda_.1} parent=11 // pred_region
        _
      $region20: #{_lambda_.1} parent=11 // pred_fallthru
        _
      // Predicated region
      $region21: #{_lambda_.1} parent=11 // pred_check
        %p415 = pneg %p111
      $region22: #{_lambda_.1} parent=11 // pred_check_branch
        %417 = sbr.rel (%p415) target = $region24
      $region23: #{_lambda_.1} parent=11 // pred_region
        _
      $region24: #{_lambda_.1} parent=11 // pred_fallthru
        _
      // Predicated region
      $region25: #{_lambda_.1} parent=11 // pred_check
        %p418 = pneg %p132
      $region26: #{_lambda_.1} parent=11 // pred_check_branch
        %420 = sbr.rel (%p418) target = $region28
      $region27: #{_lambda_.1} parent=11 // pred_region
        _
      $region28: #{_lambda_.1} parent=11 // pred_fallthru
        _
      // Predicated region
      $region29: #{_lambda_.1} parent=11 // pred_check
        %p421 = pneg %p153
      $region30: #{_lambda_.1} parent=11 // pred_check_branch
        %423 = sbr.rel (%p421) target = $region32
      $region31: #{_lambda_.1} parent=11 // pred_region
        _
      $region32: #{_lambda_.1} parent=11 // pred_fallthru
        _
      // Predicated region
      $region33: #{_lambda_.1} parent=11 // pred_check
        %p424 = pneg %p174
      $region34: #{_lambda_.1} parent=11 // pred_check_branch
        %426 = sbr.rel (%p424) target = $region36
      $region35: #{_lambda_.1} parent=11 // pred_region
        _
      $region36: #{_lambda_.1} parent=11 // pred_fallthru
        _
      // Predicated region
      $region37: #{_lambda_.1} parent=11 // pred_check
        %p427 = pneg %p195
      $region38: #{_lambda_.1} parent=11 // pred_check_branch
        %429 = sbr.rel (%p427) target = $region40
      $region39: #{_lambda_.1} parent=11 // pred_region
        _
      $region40: #{_lambda_.1} parent=11 // pred_fallthru
        _
      // Predicated region
      $region41: #{_lambda_.1} parent=11 // pred_check
        %p430 = pneg %p216
      $region42: #{_lambda_.1} parent=11 // pred_check_branch
        %432 = sbr.rel (%p430) target = $region44
      $region43: #{_lambda_.1} parent=11 // pred_region
        _
      $region44: #{_lambda_.1} parent=11 // pred_fallthru
        _
      // Predicated region
      $region45: #{_lambda_.1} parent=11 // pred_check
        %p433 = pneg %p237
      $region46: #{_lambda_.1} parent=11 // pred_check_branch
        %435 = sbr.rel (%p433) target = $region48
      $region47: #{_lambda_.1} parent=11 // pred_region
        _
      $region48: #{_lambda_.1} parent=11 // pred_fallthru
        _
      // Predicated region
      $region49: #{_lambda_.1} parent=11 // pred_check
        %p436 = pneg %p258
      $region50: #{_lambda_.1} parent=11 // pred_check_branch
        %438 = sbr.rel (%p436) target = $region52
      $region51: #{_lambda_.1} parent=11 // pred_region
        _
      $region52: #{_lambda_.1} parent=11 // pred_fallthru
        _
      // Predicated region
      $region53: #{_lambda_.1} parent=11 // pred_check
        %p439 = pneg %p279
      $region54: #{_lambda_.1} parent=11 // pred_check_branch
        %441 = sbr.rel (%p439) target = $region56
      $region55: #{_lambda_.1} parent=11 // pred_region
        _
      $region56: #{_lambda_.1} parent=11 // pred_fallthru
        _
      // Predicated region
      $region57: #{_lambda_.1} parent=11 // pred_check
        %p442 = pneg %p300
      $region58: #{_lambda_.1} parent=11 // pred_check_branch
        %444 = sbr.rel (%p442) target = $region60
      $region59: #{_lambda_.1} parent=11 // pred_region
        _
      $region60: #{_lambda_.1} parent=11 // pred_fallthru
        _
      // Predicated region
      $region61: #{_lambda_.1} parent=11 // pred_check
        %p445 = pneg %p321
      $region62: #{_lambda_.1} parent=11 // pred_check_branch
        %447 = sbr.rel (%p445) target = $region64
      $region63: #{_lambda_.1} parent=11 // pred_region
        _
      $region64: #{_lambda_.1} parent=11 // pred_fallthru
        _
      // Predicated region
      $region65: #{_lambda_.1} parent=11 // pred_check
        %p448 = pneg %p342
      $region66: #{_lambda_.1} parent=11 // pred_check_branch
        %450 = sbr.rel (%p448) target = $region68
      $region67: #{_lambda_.1} parent=11 // pred_region
        _
      $region68: #{_lambda_.1} parent=11 // pred_fallthru
        _
    $region12: #{_lambda_.1} parent=5 // pred_fallthru
      _
    %p451 = scmp.lt.s32.totalorder %s22, 2
    // Predicated region
    $region69: #{_lambda_.1} parent=5 // pred_check
      %p452 = pneg %p451
    $region70: #{_lambda_.1} parent=5 // pred_check_branch
      %454 = sbr.rel (%p452) target = $region72
    $region71: #{_lambda_.1} parent=5 // pred_region
      // Predicated region
      $region73: #{_lambda_.1} parent=71 // pred_check
        %p455 = pneg %p42
      $region74: #{_lambda_.1} parent=71 // pred_check_branch
        %457 = sbr.rel (%p455) target = $region76
      $region75: #{_lambda_.1} parent=71 // pred_region
        %p458 = scmp.lt.s32.totalorder %s22, 1
        %s459 = scalar_select %p458, %s22, 1
        %s460 = smul.addr %s459, 54
        %s461 = smul.addr %s460, 4
        %s462 = scalar_lea.vmem %s0, %s461
      $region76: #{_lambda_.1} parent=71 // pred_fallthru
        _
      // Predicated region
      $region77: #{_lambda_.1} parent=71 // pred_check
        %p463 = pneg %p362
      $region78: #{_lambda_.1} parent=71 // pred_check_branch
        %465 = sbr.rel (%p463) target = $region80
      $region79: #{_lambda_.1} parent=71 // pred_region
        %p466 = scmp.lt.s32.totalorder %s22, 1
        %s467 = scalar_select %p466, %s22, 1
        %s468 = smul.addr %s467, 32
        %s469 = smul.addr %s468, 4
        %s470 = scalar_lea.vmem %s15, %s469
      $region80: #{_lambda_.1} parent=71 // pred_fallthru
        _
    $region72: #{_lambda_.1} parent=5 // pred_fallthru
      _
    %p471 = scmp.le.s32.totalorder 1, %s22
    %p472 = scmp.lt.s32.totalorder %s22, 3
    %p473 = pnand %p471, %p472
    %p474 = pneg %p473
    // Predicated region
    $region81: #{_lambda_.1} parent=5 // pred_check
      _
    $region82: #{_lambda_.1} parent=5 // pred_check_branch
      %476 = sbr.rel (%p473) target = $region84
    $region83: #{_lambda_.1} parent=5 // pred_region
      %s477 = ssub.s32 %s22, 1
      %p478 = scmp.lt.s32.totalorder %s27, 1
      %s479 = scalar_select %p478, %s27, 1
      %s480 = smul.addr %s479, 54
      %s481 = smul.addr %s480, 4
      %s482 = scalar_lea.vmem %s0, %s481
      %p483 = pneg %p48
      %p484 = pneg %p45
      %p485 = pneg %p69
      %p486 = pneg %p66
      %p487 = pneg %p90
      %p488 = pneg %p87
      %p489 = pneg %p111
      %p490 = pneg %p108
      %p491 = pneg %p132
      %p492 = pneg %p129
      %p493 = pneg %p153
      %p494 = pneg %p150
      %p495 = pneg %p174
      %p496 = pneg %p171
      %p497 = pneg %p195
      %p498 = pneg %p192
      %p499 = pneg %p216
      %p500 = pneg %p213
      %p501 = pneg %p237
      %p502 = pneg %p234
      %p503 = pneg %p258
      %p504 = pneg %p255
      %p505 = pneg %p279
      %p506 = pneg %p276
      %p507 = pneg %p300
      %p508 = pneg %p297
      %p509 = pneg %p321
      %p510 = pneg %p318
      %p511 = pneg %p342
      %p512 = pneg %p339
      %p513 = scmp.lt.s32.totalorder %s27, 1
      %s514 = scalar_select %p513, %s27, 1
      %s515 = smul.addr %s514, 32
      %s516 = smul.addr %s515, 4
      %s517 = scalar_lea.vmem %s15, %s516
      %p518 = pneg %p368
      %p519 = pneg %p365
      %p520 = pneg %p394
      %p521 = pneg %p391
      %p522 = scmp.lt.s32.totalorder %s27, 1
      %s523 = scalar_select %p522, %s27, 1
      %s524 = smul.addr %s523, 32
      %s525 = smul.addr %s524, 8
      %s526 = scalar_lea.vmem %s16, %s525
      %p527 = scmp.lt.s32.totalorder %s27, 1
      %s528 = scalar_select %p527, %s27, 1
      %s529 = smul.addr %s528, 54
      %s530 = smul.addr %s529, 4
      %s531 = scalar_lea.vmem %s0, %s530
      %p532 = scmp.lt.s32.totalorder %s27, 1
      %s533 = scalar_select %p532, %s27, 1
      %s534 = smul.addr %s533, 32
      %s535 = smul.addr %s534, 4
      %s536 = scalar_lea.vmem %s15, %s535
      %p537 = scmp.lt.s32.totalorder %s27, 1
      %s538 = scalar_select %p537, %s27, 1
      %s539 = smul.addr %s538, 32
      %s540 = smul.addr %s539, 8
      %s541 = scalar_lea.vmem %s16, %s540
      %v543 = vld [vmem:[%s531] sm:$0xf]
      %v544 = vld [vmem:[%s531 + $0x4] sm:$0xf]
      %v545 = vld [vmem:[%s531 + $0x8] sm:$0xf]
      %v546 = vld [vmem:[%s531 + $0xc] sm:$0xf]
      %v547 = vld [vmem:[%s531 + $0x10] sm:$0xf]
      %v548 = vld [vmem:[%s531 + $0x14] sm:$0xf]
      %v549 = vld [vmem:[%s531 + $0x18] sm:$0xf]
      %v550 = vld [vmem:[%s531 + $0x1c] sm:$0xf]
      %v551 = vld [vmem:[%s531 + $0x20] sm:$0xf]
      %v552 = vld [vmem:[%s531 + $0x24] sm:$0xf]
      %v553 = vld [vmem:[%s531 + $0x28] sm:$0xf]
      %v554 = vld [vmem:[%s531 + $0x2c] sm:$0xf]
      %v555 = vld [vmem:[%s531 + $0x30] sm:$0xf]
      %v556 = vld [vmem:[%s531 + $0x34] sm:$0xf]
      %v557 = vld [vmem:[%s531 + $0x38] sm:$0xf]
      %v558 = vld [vmem:[%s531 + $0x3c] sm:$0xf]
      %v559 = vld [vmem:[%s531 + $0x40] sm:$0xf]
      %v560 = vld [vmem:[%s531 + $0x44] sm:$0xf]
      %v561 = vld [vmem:[%s531 + $0x48] sm:$0xf]
      %v562 = vld [vmem:[%s531 + $0x4c] sm:$0xf]
      %v563 = vld [vmem:[%s531 + $0x50] sm:$0xf]
      %v564 = vld [vmem:[%s531 + $0x54] sm:$0xf]
      %v565 = vld [vmem:[%s531 + $0x58] sm:$0xf]
      %v566 = vld [vmem:[%s531 + $0x5c] sm:$0xf]
      %v567 = vld [vmem:[%s531 + $0x60] sm:$0xf]
      %v568 = vld [vmem:[%s531 + $0x64] sm:$0xf]
      %v569 = vld [vmem:[%s531 + $0x68] sm:$0xf]
      %v570 = vld [vmem:[%s531 + $0x6c] sm:$0xf]
      %v571 = vld [vmem:[%s531 + $0x70] sm:$0xf]
      %v572 = vld [vmem:[%s531 + $0x74] sm:$0xf]
      %v573 = vld [vmem:[%s531 + $0x78] sm:$0xf]
      %v574 = vld [vmem:[%s531 + $0x7c] sm:$0xf]
      %v575 = vld [vmem:[%s531 + $0x80] sm:$0xf]
      %v576 = vld [vmem:[%s531 + $0x84] sm:$0xf]
      %v577 = vld [vmem:[%s531 + $0x88] sm:$0xf]
      %v578 = vld [vmem:[%s531 + $0x8c] sm:$0xf]
      %v579 = vld [vmem:[%s531 + $0x90] sm:$0xf]
      %v580 = vld [vmem:[%s531 + $0x94] sm:$0xf]
      %v581 = vld [vmem:[%s531 + $0x98] sm:$0xf]
      %v582 = vld [vmem:[%s531 + $0x9c] sm:$0xf]
      %v583 = vld [vmem:[%s531 + $0xa0] sm:$0xf]
      %v584 = vld [vmem:[%s531 + $0xa4] sm:$0xf]
      %v585 = vld [vmem:[%s531 + $0xa8] sm:$0xf]
      %v586 = vld [vmem:[%s531 + $0xac] sm:$0xf]
      %v587 = vld [vmem:[%s531 + $0xb0] sm:$0xf]
      %v588 = vld [vmem:[%s531 + $0xb4] sm:$0xf]
      %v589 = vld [vmem:[%s531 + $0xb8] sm:$0xf]
      %v590 = vld [vmem:[%s531 + $0xbc] sm:$0xf]
      %v591 = vld [vmem:[%s531 + $0xc0] sm:$0xf]
      %v592 = vld [vmem:[%s531 + $0xc4] sm:$0xf]
      %v593 = vld [vmem:[%s531 + $0xc8] sm:$0xf]
      %v594 = vld [vmem:[%s531 + $0xcc] sm:$0xf]
      %v595 = vld [vmem:[%s531 + $0xd0] sm:$0xf]
      %v596 = vld [vmem:[%s531 + $0xd4] sm:$0xf]
      %v597 = vunpack.c.l.bf16 %v543
      %v598 = vunpack.c.l.bf16 %v544
      %v599 = vunpack.c.l.bf16 %v545
      %v600 = vunpack.c.l.bf16 %v546
      %v601 = vunpack.c.l.bf16 %v547
      %v602 = vunpack.c.l.bf16 %v548
      %v603 = vunpack.c.l.bf16 %v549
      %v604 = vunpack.c.l.bf16 %v550
      %v605 = vunpack.c.l.bf16 %v551
      %v606 = vunpack.c.l.bf16 %v552
      %v607 = vunpack.c.l.bf16 %v553
      %v608 = vunpack.c.l.bf16 %v554
      %v609 = vunpack.c.l.bf16 %v555
      %v610 = vunpack.c.l.bf16 %v556
      %v611 = vunpack.c.l.bf16 %v557
      %v612 = vunpack.c.l.bf16 %v558
      %v613 = vunpack.c.l.bf16 %v559
      %v614 = vunpack.c.l.bf16 %v560
      %v615 = vunpack.c.l.bf16 %v561
      %v616 = vunpack.c.l.bf16 %v562
      %v617 = vunpack.c.l.bf16 %v563
      %v618 = vunpack.c.l.bf16 %v564
      %v619 = vunpack.c.l.bf16 %v565
      %v620 = vunpack.c.l.bf16 %v566
      %v621 = vunpack.c.l.bf16 %v567
      %v622 = vunpack.c.l.bf16 %v568
      %v623 = vunpack.c.l.bf16 %v569
      %v624 = vunpack.c.l.bf16 %v570
      %v625 = vunpack.c.l.bf16 %v571
      %v626 = vunpack.c.l.bf16 %v572
      %v627 = vunpack.c.l.bf16 %v573
      %v628 = vunpack.c.l.bf16 %v574
      %v629 = vunpack.c.l.bf16 %v575
      %v630 = vunpack.c.l.bf16 %v576
      %v631 = vunpack.c.l.bf16 %v577
      %v632 = vunpack.c.l.bf16 %v578
      %v633 = vunpack.c.l.bf16 %v579
      %v634 = vunpack.c.l.bf16 %v580
      %v635 = vunpack.c.l.bf16 %v581
      %v636 = vunpack.c.l.bf16 %v582
      %v637 = vunpack.c.l.bf16 %v583
      %v638 = vunpack.c.l.bf16 %v584
      %v639 = vunpack.c.l.bf16 %v585
      %v640 = vunpack.c.l.bf16 %v586
      %v641 = vunpack.c.l.bf16 %v587
      %v642 = vunpack.c.l.bf16 %v588
      %v643 = vunpack.c.l.bf16 %v589
      %v644 = vunpack.c.l.bf16 %v590
      %v645 = vunpack.c.l.bf16 %v591
      %v646 = vunpack.c.l.bf16 %v592
      %v647 = vunpack.c.l.bf16 %v593
      %v648 = vunpack.c.l.bf16 %v594
      %v649 = vunpack.c.l.bf16 %v595
      %v650 = vunpack.c.l.bf16 %v596
      %v651 = vpack.c.bf16 %v598, %v597
      %v652 = vpack.c.bf16 %v600, %v599
      %v653 = vpack.c.bf16 %v602, %v601
      %v654 = vpack.c.bf16 %v604, %v603
      %v655 = vpack.c.bf16 %v606, %v605
      %v656 = vpack.c.bf16 %v608, %v607
      %v657 = vpack.c.bf16 %v610, %v609
      %v658 = vpack.c.bf16 %v612, %v611
      %v659 = vpack.c.bf16 %v614, %v613
      %v660 = vpack.c.bf16 %v616, %v615
      %v661 = vpack.c.bf16 %v618, %v617
      %v662 = vpack.c.bf16 %v620, %v619
      %v663 = vpack.c.bf16 %v622, %v621
      %v664 = vpack.c.bf16 %v624, %v623
      %v665 = vpack.c.bf16 %v626, %v625
      %v666 = vpack.c.bf16 %v628, %v627
      %v667 = vpack.c.bf16 %v630, %v629
      %v668 = vpack.c.bf16 %v632, %v631
      %v669 = vpack.c.bf16 %v634, %v633
      %v670 = vpack.c.bf16 %v636, %v635
      %v671 = vpack.c.bf16 %v638, %v637
      %v672 = vpack.c.bf16 %v640, %v639
      %v673 = vpack.c.bf16 %v642, %v641
      %v674 = vpack.c.bf16 %v644, %v643
      %v675 = vpack.c.bf16 %v646, %v645
      %v676 = vpack.c.bf16 %v648, %v647
      %v677 = vpack.c.bf16 %v650, %v649
      %v678 = vld [vmem:[%s2] sm:$0xf]
      %v679 = vld [vmem:[%s2 + $0x4] sm:$0xf]
      %v682 = vunpack.c.l.b16 %v678
      %v683 = vunpack.c.l.b16 %v679
      %v684 = vpack.c.b16 %v683, %v682
      %vm686 = vcmask 130048
      %v688 = vsel %vm686, %v651, 0
      %v691 = vsel %vm686, %v652, 0
      %v694 = vsel %vm686, %v653, 0
      %v697 = vsel %vm686, %v654, 0
      %v700 = vsel %vm686, %v655, 0
      %v703 = vsel %vm686, %v656, 0
      %v706 = vsel %vm686, %v657, 0
      %v709 = vsel %vm686, %v658, 0
      %v712 = vsel %vm686, %v659, 0
      %v715 = vsel %vm686, %v660, 0
      %v718 = vsel %vm686, %v661, 0
      %v721 = vsel %vm686, %v662, 0
      %v724 = vsel %vm686, %v663, 0
      %v727 = vsel %vm686, %v664, 0
      %v730 = vsel %vm686, %v665, 0
      %v733 = vsel %vm686, %v666, 0
      %v736 = vsel %vm686, %v667, 0
      %v739 = vsel %vm686, %v668, 0
      %v742 = vsel %vm686, %v669, 0
      %v745 = vsel %vm686, %v670, 0
      %v748 = vsel %vm686, %v671, 0
      %v751 = vsel %vm686, %v672, 0
      %v754 = vsel %vm686, %v673, 0
      %v757 = vsel %vm686, %v674, 0
      %v760 = vsel %vm686, %v675, 0
      %v763 = vsel %vm686, %v676, 0
      %v766 = vsel %vm686, %v677, 0
      %768 = vmatprep.subr.bf16.mxu0 0
      %769 = vmatpush1.bf16.msra.mxu0 0
      %770 = vmatprep.subr.bf16.mxu0 0
      %771 = vmatpush1.bf16.msra.mxu0 0
      %772 = vmatprep.subr.bf16.mxu0 0
      %773 = vmatpush1.bf16.msra.mxu0 0
      %774 = vmatprep.subr.bf16.mxu0 0
      %775 = vmatpush1.bf16.msra.mxu0 0
      %776 = vmatprep.subr.bf16.mxu0 0
      %777 = vmatpush1.bf16.msra.mxu0 0
      %778 = vmatprep.subr.bf16.mxu0 0
      %779 = vmatpush1.bf16.msra.mxu0 0
      %780 = vmatprep.subr.bf16.mxu0 0
      %781 = vmatpush1.bf16.msra.mxu0 0
      %782 = vmatprep.subr.bf16.mxu0 0
      %783 = vmatpush1.bf16.msra.mxu0 %v684
      %784 = vmatprep.subr.bf16.mxu0 0
      %785 = vmatpush2.bf16.msra.mxu0 0
      %786 = vmatprep.subr.bf16.mxu0 0
      %787 = vmatpush2.bf16.msra.mxu0 0
      %788 = vmatprep.subr.bf16.mxu0 0
      %789 = vmatpush2.bf16.msra.mxu0 0
      %790 = vmatprep.subr.bf16.mxu0 0
      %791 = vmatpush2.bf16.msra.mxu0 0
      %792 = vmatprep.subr.bf16.mxu0 0
      %793 = vmatpush2.bf16.msra.mxu0 0
      %794 = vmatprep.subr.bf16.mxu0 0
      %795 = vmatpush2.bf16.msra.mxu0 0
      %796 = vmatprep.subr.bf16.mxu0 0
      %797 = vmatpush2.bf16.msra.mxu0 0
      %798 = vmatprep.subr.bf16.mxu0 0
      %799 = vmatpush2.bf16.msra.mxu0 0
      %800 = vmatprep.mubr.bf16.mxu0 0
      %801 = vmatmul.mubr.bf16.gmra.mxu0 %v688
      %v802 = vpop.f32.mrf.mxu0
      %v803 = vadd.f32 0.0, %v802
      %v804 = vpop.f32.mrf.mxu0
      %v805 = vpop.f32.mrf.mxu0
      %v806 = vadd.f32 0.0, %v805
      %v807 = vpop.f32.mrf.mxu0
      %808 = vmatprep.mubr.bf16.mxu0 0
      %809 = vmatmul.mubr.bf16.gmra.mxu0 %v691
      %v810 = vpop.f32.mrf.mxu0
      %v811 = vadd.f32 0.0, %v810
      %v812 = vpop.f32.mrf.mxu0
      %v813 = vpop.f32.mrf.mxu0
      %v814 = vadd.f32 0.0, %v813
      %v815 = vpop.f32.mrf.mxu0
      %816 = vmatprep.mubr.bf16.mxu0 0
      %817 = vmatmul.mubr.bf16.gmra.mxu0 %v694
      %v818 = vpop.f32.mrf.mxu0
      %v819 = vadd.f32 0.0, %v818
      %v820 = vpop.f32.mrf.mxu0
      %v821 = vpop.f32.mrf.mxu0
      %v822 = vadd.f32 0.0, %v821
      %v823 = vpop.f32.mrf.mxu0
      %824 = vmatprep.mubr.bf16.mxu0 0
      %825 = vmatmul.mubr.bf16.gmra.mxu0 %v697
      %v826 = vpop.f32.mrf.mxu0
      %v827 = vadd.f32 0.0, %v826
      %v828 = vpop.f32.mrf.mxu0
      %v829 = vpop.f32.mrf.mxu0
      %v830 = vadd.f32 0.0, %v829
      %v831 = vpop.f32.mrf.mxu0
      %832 = vmatprep.mubr.bf16.mxu0 0
      %833 = vmatmul.mubr.bf16.gmra.mxu0 %v700
      %v834 = vpop.f32.mrf.mxu0
      %v835 = vadd.f32 0.0, %v834
      %v836 = vpop.f32.mrf.mxu0
      %v837 = vpop.f32.mrf.mxu0
      %v838 = vadd.f32 0.0, %v837
      %v839 = vpop.f32.mrf.mxu0
      %840 = vmatprep.mubr.bf16.mxu0 0
      %841 = vmatmul.mubr.bf16.gmra.mxu0 %v703
      %v842 = vpop.f32.mrf.mxu0
      %v843 = vadd.f32 0.0, %v842
      %v844 = vpop.f32.mrf.mxu0
      %v845 = vpop.f32.mrf.mxu0
      %v846 = vadd.f32 0.0, %v845
      %v847 = vpop.f32.mrf.mxu0
      %848 = vmatprep.mubr.bf16.mxu0 0
      %849 = vmatmul.mubr.bf16.gmra.mxu0 %v706
      %v850 = vpop.f32.mrf.mxu0
      %v851 = vadd.f32 0.0, %v850
      %v852 = vpop.f32.mrf.mxu0
      %v853 = vpop.f32.mrf.mxu0
      %v854 = vadd.f32 0.0, %v853
      %v855 = vpop.f32.mrf.mxu0
      %856 = vmatprep.mubr.bf16.mxu0 0
      %857 = vmatmul.mubr.bf16.gmra.mxu0 %v709
      %v858 = vpop.f32.mrf.mxu0
      %v859 = vadd.f32 0.0, %v858
      %v860 = vpop.f32.mrf.mxu0
      %v861 = vpop.f32.mrf.mxu0
      %v862 = vadd.f32 0.0, %v861
      %v863 = vpop.f32.mrf.mxu0
      %864 = vmatprep.mubr.bf16.mxu0 0
      %865 = vmatmul.mubr.bf16.gmra.mxu0 %v712
      %v866 = vpop.f32.mrf.mxu0
      %v867 = vadd.f32 0.0, %v866
      %v868 = vpop.f32.mrf.mxu0
      %v869 = vpop.f32.mrf.mxu0
      %v870 = vadd.f32 0.0, %v869
      %v871 = vpop.f32.mrf.mxu0
      %872 = vmatprep.mubr.bf16.mxu0 0
      %873 = vmatmul.mubr.bf16.gmra.mxu0 %v715
      %v874 = vpop.f32.mrf.mxu0
      %v875 = vadd.f32 0.0, %v874
      %v876 = vpop.f32.mrf.mxu0
      %v877 = vpop.f32.mrf.mxu0
      %v878 = vadd.f32 0.0, %v877
      %v879 = vpop.f32.mrf.mxu0
      %880 = vmatprep.mubr.bf16.mxu0 0
      %881 = vmatmul.mubr.bf16.gmra.mxu0 %v718
      %v882 = vpop.f32.mrf.mxu0
      %v883 = vadd.f32 0.0, %v882
      %v884 = vpop.f32.mrf.mxu0
      %v885 = vpop.f32.mrf.mxu0
      %v886 = vadd.f32 0.0, %v885
      %v887 = vpop.f32.mrf.mxu0
      %888 = vmatprep.mubr.bf16.mxu0 0
      %889 = vmatmul.mubr.bf16.gmra.mxu0 %v721
      %v890 = vpop.f32.mrf.mxu0
      %v891 = vadd.f32 0.0, %v890
      %v892 = vpop.f32.mrf.mxu0
      %v893 = vpop.f32.mrf.mxu0
      %v894 = vadd.f32 0.0, %v893
      %v895 = vpop.f32.mrf.mxu0
      %896 = vmatprep.mubr.bf16.mxu0 0
      %897 = vmatmul.mubr.bf16.gmra.mxu0 %v724
      %v898 = vpop.f32.mrf.mxu0
      %v899 = vadd.f32 0.0, %v898
      %v900 = vpop.f32.mrf.mxu0
      %v901 = vpop.f32.mrf.mxu0
      %v902 = vadd.f32 0.0, %v901
      %v903 = vpop.f32.mrf.mxu0
      %904 = vmatprep.mubr.bf16.mxu0 0
      %905 = vmatmul.mubr.bf16.gmra.mxu0 %v727
      %v906 = vpop.f32.mrf.mxu0
      %v907 = vadd.f32 0.0, %v906
      %v908 = vpop.f32.mrf.mxu0
      %v909 = vpop.f32.mrf.mxu0
      %v910 = vadd.f32 0.0, %v909
      %v911 = vpop.f32.mrf.mxu0
      %912 = vmatprep.mubr.bf16.mxu0 0
      %913 = vmatmul.mubr.bf16.gmra.mxu0 %v730
      %v914 = vpop.f32.mrf.mxu0
      %v915 = vadd.f32 0.0, %v914
      %v916 = vpop.f32.mrf.mxu0
      %v917 = vpop.f32.mrf.mxu0
      %v918 = vadd.f32 0.0, %v917
      %v919 = vpop.f32.mrf.mxu0
      %920 = vmatprep.mubr.bf16.mxu0 0
      %921 = vmatmul.mubr.bf16.gmra.mxu0 %v733
      %v922 = vpop.f32.mrf.mxu0
      %v923 = vadd.f32 0.0, %v922
      %v924 = vpop.f32.mrf.mxu0
      %v925 = vpop.f32.mrf.mxu0
      %v926 = vadd.f32 0.0, %v925
      %v927 = vpop.f32.mrf.mxu0
      %928 = vmatprep.mubr.bf16.mxu0 0
      %929 = vmatmul.mubr.bf16.gmra.mxu0 %v736
      %v930 = vpop.f32.mrf.mxu0
      %v931 = vadd.f32 0.0, %v930
      %v932 = vpop.f32.mrf.mxu0
      %v933 = vpop.f32.mrf.mxu0
      %v934 = vadd.f32 0.0, %v933
      %v935 = vpop.f32.mrf.mxu0
      %936 = vmatprep.mubr.bf16.mxu0 0
      %937 = vmatmul.mubr.bf16.gmra.mxu0 %v739
      %v938 = vpop.f32.mrf.mxu0
      %v939 = vadd.f32 0.0, %v938
      %v940 = vpop.f32.mrf.mxu0
      %v941 = vpop.f32.mrf.mxu0
      %v942 = vadd.f32 0.0, %v941
      %v943 = vpop.f32.mrf.mxu0
      %944 = vmatprep.mubr.bf16.mxu0 0
      %945 = vmatmul.mubr.bf16.gmra.mxu0 %v742
      %v946 = vpop.f32.mrf.mxu0
      %v947 = vadd.f32 0.0, %v946
      %v948 = vpop.f32.mrf.mxu0
      %v949 = vpop.f32.mrf.mxu0
      %v950 = vadd.f32 0.0, %v949
      %v951 = vpop.f32.mrf.mxu0
      %952 = vmatprep.mubr.bf16.mxu0 0
      %953 = vmatmul.mubr.bf16.gmra.mxu0 %v745
      %v954 = vpop.f32.mrf.mxu0
      %v955 = vadd.f32 0.0, %v954
      %v956 = vpop.f32.mrf.mxu0
      %v957 = vpop.f32.mrf.mxu0
      %v958 = vadd.f32 0.0, %v957
      %v959 = vpop.f32.mrf.mxu0
      %960 = vmatprep.mubr.bf16.mxu0 0
      %961 = vmatmul.mubr.bf16.gmra.mxu0 %v748
      %v962 = vpop.f32.mrf.mxu0
      %v963 = vadd.f32 0.0, %v962
      %v964 = vpop.f32.mrf.mxu0
      %v965 = vpop.f32.mrf.mxu0
      %v966 = vadd.f32 0.0, %v965
      %v967 = vpop.f32.mrf.mxu0
      %968 = vmatprep.mubr.bf16.mxu0 0
      %969 = vmatmul.mubr.bf16.gmra.mxu0 %v751
      %v970 = vpop.f32.mrf.mxu0
      %v971 = vadd.f32 0.0, %v970
      %v972 = vpop.f32.mrf.mxu0
      %v973 = vpop.f32.mrf.mxu0
      %v974 = vadd.f32 0.0, %v973
      %v975 = vpop.f32.mrf.mxu0
      %976 = vmatprep.mubr.bf16.mxu0 0
      %977 = vmatmul.mubr.bf16.gmra.mxu0 %v754
      %v978 = vpop.f32.mrf.mxu0
      %v979 = vadd.f32 0.0, %v978
      %v980 = vpop.f32.mrf.mxu0
      %v981 = vpop.f32.mrf.mxu0
      %v982 = vadd.f32 0.0, %v981
      %v983 = vpop.f32.mrf.mxu0
      %984 = vmatprep.mubr.bf16.mxu0 0
      %985 = vmatmul.mubr.bf16.gmra.mxu0 %v757
      %v986 = vpop.f32.mrf.mxu0
      %v987 = vadd.f32 0.0, %v986
      %v988 = vpop.f32.mrf.mxu0
      %v989 = vpop.f32.mrf.mxu0
      %v990 = vadd.f32 0.0, %v989
      %v991 = vpop.f32.mrf.mxu0
      %992 = vmatprep.mubr.bf16.mxu0 0
      %993 = vmatmul.mubr.bf16.gmra.mxu0 %v760
      %v994 = vpop.f32.mrf.mxu0
      %v995 = vadd.f32 0.0, %v994
      %v996 = vpop.f32.mrf.mxu0
      %v997 = vpop.f32.mrf.mxu0
      %v998 = vadd.f32 0.0, %v997
      %v999 = vpop.f32.mrf.mxu0
      %1000 = vmatprep.mubr.bf16.mxu0 0
      %1001 = vmatmul.mubr.bf16.gmra.mxu0 %v763
      %v1002 = vpop.f32.mrf.mxu0
      %v1003 = vadd.f32 0.0, %v1002
      %v1004 = vpop.f32.mrf.mxu0
      %v1005 = vpop.f32.mrf.mxu0
      %v1006 = vadd.f32 0.0, %v1005
      %v1007 = vpop.f32.mrf.mxu0
      %1008 = vmatprep.mubr.bf16.mxu0 0
      %1009 = vmatmul.mubr.bf16.gmra.mxu0 %v766
      %v1010 = vpop.f32.mrf.mxu0
      %v1011 = vadd.f32 0.0, %v1010
      %v1012 = vpop.f32.mrf.mxu0
      %v1013 = vpop.f32.mrf.mxu0
      %v1014 = vadd.f32 0.0, %v1013
      %v1015 = vpop.f32.mrf.mxu0
      %1016 = vdwg.mxu0
      %v1017 = vld [vmem:[%s3] sm:$0x1]
      %v1019 = vlaneseq
      %v1020 = vshrl.u32 %v1019, 7
      %v1021 = vsub.s32 0, %v1020
      %v1022 = vrot.slane %v1017, %v1021
      %v1024 = vmul.f32 %v803, %v1022
      %v1025 = vmul.f32 %v806, %v1022
      %v1026 = vmul.f32 %v811, %v1022
      %v1027 = vmul.f32 %v814, %v1022
      %v1028 = vmul.f32 %v819, %v1022
      %v1029 = vmul.f32 %v822, %v1022
      %v1030 = vmul.f32 %v827, %v1022
      %v1031 = vmul.f32 %v830, %v1022
      %v1032 = vmul.f32 %v835, %v1022
      %v1033 = vmul.f32 %v838, %v1022
      %v1034 = vmul.f32 %v843, %v1022
      %v1035 = vmul.f32 %v846, %v1022
      %v1036 = vmul.f32 %v851, %v1022
      %v1037 = vmul.f32 %v854, %v1022
      %v1038 = vmul.f32 %v859, %v1022
      %v1039 = vmul.f32 %v862, %v1022
      %v1040 = vmul.f32 %v867, %v1022
      %v1041 = vmul.f32 %v870, %v1022
      %v1042 = vmul.f32 %v875, %v1022
      %v1043 = vmul.f32 %v878, %v1022
      %v1044 = vmul.f32 %v883, %v1022
      %v1045 = vmul.f32 %v886, %v1022
      %v1046 = vmul.f32 %v891, %v1022
      %v1047 = vmul.f32 %v894, %v1022
      %v1048 = vmul.f32 %v899, %v1022
      %v1049 = vmul.f32 %v902, %v1022
      %v1050 = vmul.f32 %v907, %v1022
      %v1051 = vmul.f32 %v910, %v1022
      %v1052 = vmul.f32 %v915, %v1022
      %v1053 = vmul.f32 %v918, %v1022
      %v1054 = vmul.f32 %v923, %v1022
      %v1055 = vmul.f32 %v926, %v1022
      %v1056 = vmul.f32 %v931, %v1022
      %v1057 = vmul.f32 %v934, %v1022
      %v1058 = vmul.f32 %v939, %v1022
      %v1059 = vmul.f32 %v942, %v1022
      %v1060 = vmul.f32 %v947, %v1022
      %v1061 = vmul.f32 %v950, %v1022
      %v1062 = vmul.f32 %v955, %v1022
      %v1063 = vmul.f32 %v958, %v1022
      %v1064 = vmul.f32 %v963, %v1022
      %v1065 = vmul.f32 %v966, %v1022
      %v1066 = vmul.f32 %v971, %v1022
      %v1067 = vmul.f32 %v974, %v1022
      %v1068 = vmul.f32 %v979, %v1022
      %v1069 = vmul.f32 %v982, %v1022
      %v1070 = vmul.f32 %v987, %v1022
      %v1071 = vmul.f32 %v990, %v1022
      %v1072 = vmul.f32 %v995, %v1022
      %v1073 = vmul.f32 %v998, %v1022
      %v1074 = vmul.f32 %v1003, %v1022
      %v1075 = vmul.f32 %v1006, %v1022
      %v1076 = vmul.f32 %v1011, %v1022
      %v1077 = vmul.f32 %v1014, %v1022
      %v1078 = vld [vmem:[%s4] sm:$0x1]
      %v1080 = vlaneseq
      %v1081 = vshrl.u32 %v1080, 7
      %v1082 = vsub.s32 0, %v1081
      %v1083 = vrot.slane %v1078, %v1082
      %v1085 = vadd.f32 %v1024, %v1083
      %v1086 = vadd.f32 %v1025, %v1083
      %v1087 = vadd.f32 %v1026, %v1083
      %v1088 = vadd.f32 %v1027, %v1083
      %v1089 = vadd.f32 %v1028, %v1083
      %v1090 = vadd.f32 %v1029, %v1083
      %v1091 = vadd.f32 %v1030, %v1083
      %v1092 = vadd.f32 %v1031, %v1083
      %v1093 = vadd.f32 %v1032, %v1083
      %v1094 = vadd.f32 %v1033, %v1083
      %v1095 = vadd.f32 %v1034, %v1083
      %v1096 = vadd.f32 %v1035, %v1083
      %v1097 = vadd.f32 %v1036, %v1083
      %v1098 = vadd.f32 %v1037, %v1083
      %v1099 = vadd.f32 %v1038, %v1083
      %v1100 = vadd.f32 %v1039, %v1083
      %v1101 = vadd.f32 %v1040, %v1083
      %v1102 = vadd.f32 %v1041, %v1083
      %v1103 = vadd.f32 %v1042, %v1083
      %v1104 = vadd.f32 %v1043, %v1083
      %v1105 = vadd.f32 %v1044, %v1083
      %v1106 = vadd.f32 %v1045, %v1083
      %v1107 = vadd.f32 %v1046, %v1083
      %v1108 = vadd.f32 %v1047, %v1083
      %v1109 = vadd.f32 %v1048, %v1083
      %v1110 = vadd.f32 %v1049, %v1083
      %v1111 = vadd.f32 %v1050, %v1083
      %v1112 = vadd.f32 %v1051, %v1083
      %v1113 = vadd.f32 %v1052, %v1083
      %v1114 = vadd.f32 %v1053, %v1083
      %v1115 = vadd.f32 %v1054, %v1083
      %v1116 = vadd.f32 %v1055, %v1083
      %v1117 = vadd.f32 %v1056, %v1083
      %v1118 = vadd.f32 %v1057, %v1083
      %v1119 = vadd.f32 %v1058, %v1083
      %v1120 = vadd.f32 %v1059, %v1083
      %v1121 = vadd.f32 %v1060, %v1083
      %v1122 = vadd.f32 %v1061, %v1083
      %v1123 = vadd.f32 %v1062, %v1083
      %v1124 = vadd.f32 %v1063, %v1083
      %v1125 = vadd.f32 %v1064, %v1083
      %v1126 = vadd.f32 %v1065, %v1083
      %v1127 = vadd.f32 %v1066, %v1083
      %v1128 = vadd.f32 %v1067, %v1083
      %v1129 = vadd.f32 %v1068, %v1083
      %v1130 = vadd.f32 %v1069, %v1083
      %v1131 = vadd.f32 %v1070, %v1083
      %v1132 = vadd.f32 %v1071, %v1083
      %v1133 = vadd.f32 %v1072, %v1083
      %v1134 = vadd.f32 %v1073, %v1083
      %v1135 = vadd.f32 %v1074, %v1083
      %v1136 = vadd.f32 %v1075, %v1083
      %v1137 = vadd.f32 %v1076, %v1083
      %v1138 = vadd.f32 %v1077, %v1083
      %v1139 = vmax.f32 %v1085, 0.0
      %v1140 = vmax.f32 %v1086, 0.0
      %v1141 = vmax.f32 %v1087, 0.0
      %v1142 = vmax.f32 %v1088, 0.0
      %v1143 = vmax.f32 %v1089, 0.0
      %v1144 = vmax.f32 %v1090, 0.0
      %v1145 = vmax.f32 %v1091, 0.0
      %v1146 = vmax.f32 %v1092, 0.0
      %v1147 = vmax.f32 %v1093, 0.0
      %v1148 = vmax.f32 %v1094, 0.0
      %v1149 = vmax.f32 %v1095, 0.0
      %v1150 = vmax.f32 %v1096, 0.0
      %v1151 = vmax.f32 %v1097, 0.0
      %v1152 = vmax.f32 %v1098, 0.0
      %v1153 = vmax.f32 %v1099, 0.0
      %v1154 = vmax.f32 %v1100, 0.0
      %v1155 = vmax.f32 %v1101, 0.0
      %v1156 = vmax.f32 %v1102, 0.0
      %v1157 = vmax.f32 %v1103, 0.0
      %v1158 = vmax.f32 %v1104, 0.0
      %v1159 = vmax.f32 %v1105, 0.0
      %v1160 = vmax.f32 %v1106, 0.0
      %v1161 = vmax.f32 %v1107, 0.0
      %v1162 = vmax.f32 %v1108, 0.0
      %v1163 = vmax.f32 %v1109, 0.0
      %v1164 = vmax.f32 %v1110, 0.0
      %v1165 = vmax.f32 %v1111, 0.0
      %v1166 = vmax.f32 %v1112, 0.0
      %v1167 = vmax.f32 %v1113, 0.0
      %v1168 = vmax.f32 %v1114, 0.0
      %v1169 = vmax.f32 %v1115, 0.0
      %v1170 = vmax.f32 %v1116, 0.0
      %v1171 = vmax.f32 %v1117, 0.0
      %v1172 = vmax.f32 %v1118, 0.0
      %v1173 = vmax.f32 %v1119, 0.0
      %v1174 = vmax.f32 %v1120, 0.0
      %v1175 = vmax.f32 %v1121, 0.0
      %v1176 = vmax.f32 %v1122, 0.0
      %v1177 = vmax.f32 %v1123, 0.0
      %v1178 = vmax.f32 %v1124, 0.0
      %v1179 = vmax.f32 %v1125, 0.0
      %v1180 = vmax.f32 %v1126, 0.0
      %v1181 = vmax.f32 %v1127, 0.0
      %v1182 = vmax.f32 %v1128, 0.0
      %v1183 = vmax.f32 %v1129, 0.0
      %v1184 = vmax.f32 %v1130, 0.0
      %v1185 = vmax.f32 %v1131, 0.0
      %v1186 = vmax.f32 %v1132, 0.0
      %v1187 = vmax.f32 %v1133, 0.0
      %v1188 = vmax.f32 %v1134, 0.0
      %v1189 = vmax.f32 %v1135, 0.0
      %v1190 = vmax.f32 %v1136, 0.0
      %v1191 = vmax.f32 %v1137, 0.0
      %v1192 = vmax.f32 %v1138, 0.0
      %v1193 = vld [vmem:[%s1] sm:$0xff]
      %v1194 = vld [vmem:[%s1 + $0x8] sm:$0xff]
      %v1195 = vld [vmem:[%s1 + $0x10] sm:$0xff]
      %v1196 = vld [vmem:[%s1 + $0x18] sm:$0xff]
      %v1197 = vld [vmem:[%s1 + $0x20] sm:$0xff]
      %v1198 = vld [vmem:[%s1 + $0x28] sm:$0xff]
      %v1199 = vld [vmem:[%s1 + $0x30] sm:$0xff]
      %v1200 = vld [vmem:[%s1 + $0x38] sm:$0xff]
      %v1201 = vld [vmem:[%s1 + $0x40] sm:$0xff]
      %v1202 = vld [vmem:[%s1 + $0x48] sm:$0xff]
      %v1203 = vld [vmem:[%s1 + $0x50] sm:$0xff]
      %v1204 = vld [vmem:[%s1 + $0x58] sm:$0xff]
      %v1205 = vld [vmem:[%s1 + $0x60] sm:$0xff]
      %v1206 = vld [vmem:[%s1 + $0x68] sm:$0xff]
      %v1207 = vld [vmem:[%s1 + $0x70] sm:$0xff]
      %v1208 = vld [vmem:[%s1 + $0x78] sm:$0xff]
      %v1209 = vld [vmem:[%s1 + $0x80] sm:$0xff]
      %v1210 = vld [vmem:[%s1 + $0x88] sm:$0xff]
      %v1211 = vld [vmem:[%s1 + $0x90] sm:$0xff]
      %v1212 = vld [vmem:[%s1 + $0x98] sm:$0xff]
      %v1213 = vld [vmem:[%s1 + $0xa0] sm:$0xff]
      %v1214 = vld [vmem:[%s1 + $0xa8] sm:$0xff]
      %v1215 = vld [vmem:[%s1 + $0xb0] sm:$0xff]
      %v1216 = vld [vmem:[%s1 + $0xb8] sm:$0xff]
      %v1217 = vld [vmem:[%s1 + $0xc0] sm:$0xff]
      %v1218 = vld [vmem:[%s1 + $0xc8] sm:$0xff]
      %v1219 = vld [vmem:[%s1 + $0xd0] sm:$0xff]
      %v1220 = vld [vmem:[%s1 + $0xd8] sm:$0xff]
      %v1221 = vld [vmem:[%s1 + $0xe0] sm:$0xff]
      %v1222 = vld [vmem:[%s1 + $0xe8] sm:$0xff]
      %v1223 = vld [vmem:[%s1 + $0xf0] sm:$0xff]
      %v1224 = vld [vmem:[%s1 + $0xf8] sm:$0xff]
      %v1225 = vld [vmem:[%s1 + $0x100] sm:$0xff]
      %v1226 = vld [vmem:[%s1 + $0x108] sm:$0xff]
      %v1227 = vld [vmem:[%s1 + $0x110] sm:$0xff]
      %v1228 = vld [vmem:[%s1 + $0x118] sm:$0xff]
      %v1229 = vld [vmem:[%s1 + $0x120] sm:$0xff]
      %v1230 = vld [vmem:[%s1 + $0x128] sm:$0xff]
      %v1231 = vld [vmem:[%s1 + $0x130] sm:$0xff]
      %v1232 = vld [vmem:[%s1 + $0x138] sm:$0xff]
      %v1233 = vld [vmem:[%s1 + $0x140] sm:$0xff]
      %v1234 = vld [vmem:[%s1 + $0x148] sm:$0xff]
      %v1235 = vld [vmem:[%s1 + $0x150] sm:$0xff]
      %v1236 = vld [vmem:[%s1 + $0x158] sm:$0xff]
      %v1237 = vld [vmem:[%s1 + $0x160] sm:$0xff]
      %v1238 = vld [vmem:[%s1 + $0x168] sm:$0xff]
      %v1239 = vld [vmem:[%s1 + $0x170] sm:$0xff]
      %v1240 = vld [vmem:[%s1 + $0x178] sm:$0xff]
      %v1241 = vld [vmem:[%s1 + $0x180] sm:$0xff]
      %v1242 = vld [vmem:[%s1 + $0x188] sm:$0xff]
      %v1243 = vld [vmem:[%s1 + $0x190] sm:$0xff]
      %v1244 = vld [vmem:[%s1 + $0x198] sm:$0xff]
      %v1245 = vld [vmem:[%s1 + $0x1a0] sm:$0xff]
      %v1246 = vld [vmem:[%s1 + $0x1a8] sm:$0xff]
      %1248 = vset.pattern.permute.xlu0 0
      %1249 = vperm.xlu0 %1248, %v1193
      %v1250 = vpop.permute.xlu0 %1249
      %1253 = vset.pattern.permute.xlu0 0
      %1254 = vperm.xlu0 %1253, %v1194
      %v1255 = vpop.permute.xlu0 %1254
      %1258 = vset.pattern.permute.xlu0 0
      %1259 = vperm.xlu0 %1258, %v1195
      %v1260 = vpop.permute.xlu0 %1259
      %1263 = vset.pattern.permute.xlu0 0
      %1264 = vperm.xlu0 %1263, %v1196
      %v1265 = vpop.permute.xlu0 %1264
      %1268 = vset.pattern.permute.xlu0 0
      %1269 = vperm.xlu0 %1268, %v1197
      %v1270 = vpop.permute.xlu0 %1269
      %1273 = vset.pattern.permute.xlu0 0
      %1274 = vperm.xlu0 %1273, %v1198
      %v1275 = vpop.permute.xlu0 %1274
      %1278 = vset.pattern.permute.xlu0 0
      %1279 = vperm.xlu0 %1278, %v1199
      %v1280 = vpop.permute.xlu0 %1279
      %1283 = vset.pattern.permute.xlu0 0
      %1284 = vperm.xlu0 %1283, %v1200
      %v1285 = vpop.permute.xlu0 %1284
      %1288 = vset.pattern.permute.xlu0 0
      %1289 = vperm.xlu0 %1288, %v1201
      %v1290 = vpop.permute.xlu0 %1289
      %1293 = vset.pattern.permute.xlu0 0
      %1294 = vperm.xlu0 %1293, %v1202
      %v1295 = vpop.permute.xlu0 %1294
      %1298 = vset.pattern.permute.xlu0 0
      %1299 = vperm.xlu0 %1298, %v1203
      %v1300 = vpop.permute.xlu0 %1299
      %1303 = vset.pattern.permute.xlu0 0
      %1304 = vperm.xlu0 %1303, %v1204
      %v1305 = vpop.permute.xlu0 %1304
      %1308 = vset.pattern.permute.xlu0 0
      %1309 = vperm.xlu0 %1308, %v1205
      %v1310 = vpop.permute.xlu0 %1309
      %1313 = vset.pattern.permute.xlu0 0
      %1314 = vperm.xlu0 %1313, %v1206
      %v1315 = vpop.permute.xlu0 %1314
      %1318 = vset.pattern.permute.xlu0 0
      %1319 = vperm.xlu0 %1318, %v1207
      %v1320 = vpop.permute.xlu0 %1319
      %1323 = vset.pattern.permute.xlu0 0
      %1324 = vperm.xlu0 %1323, %v1208
      %v1325 = vpop.permute.xlu0 %1324
      %1328 = vset.pattern.permute.xlu0 0
      %1329 = vperm.xlu0 %1328, %v1209
      %v1330 = vpop.permute.xlu0 %1329
      %1333 = vset.pattern.permute.xlu0 0
      %1334 = vperm.xlu0 %1333, %v1210
      %v1335 = vpop.permute.xlu0 %1334
      %1338 = vset.pattern.permute.xlu0 0
      %1339 = vperm.xlu0 %1338, %v1211
      %v1340 = vpop.permute.xlu0 %1339
      %1343 = vset.pattern.permute.xlu0 0
      %1344 = vperm.xlu0 %1343, %v1212
      %v1345 = vpop.permute.xlu0 %1344
      %1348 = vset.pattern.permute.xlu0 0
      %1349 = vperm.xlu0 %1348, %v1213
      %v1350 = vpop.permute.xlu0 %1349
      %1353 = vset.pattern.permute.xlu0 0
      %1354 = vperm.xlu0 %1353, %v1214
      %v1355 = vpop.permute.xlu0 %1354
      %1358 = vset.pattern.permute.xlu0 0
      %1359 = vperm.xlu0 %1358, %v1215
      %v1360 = vpop.permute.xlu0 %1359
      %1363 = vset.pattern.permute.xlu0 0
      %1364 = vperm.xlu0 %1363, %v1216
      %v1365 = vpop.permute.xlu0 %1364
      %1368 = vset.pattern.permute.xlu0 0
      %1369 = vperm.xlu0 %1368, %v1217
      %v1370 = vpop.permute.xlu0 %1369
      %1373 = vset.pattern.permute.xlu0 0
      %1374 = vperm.xlu0 %1373, %v1218
      %v1375 = vpop.permute.xlu0 %1374
      %1378 = vset.pattern.permute.xlu0 0
      %1379 = vperm.xlu0 %1378, %v1219
      %v1380 = vpop.permute.xlu0 %1379
      %1383 = vset.pattern.permute.xlu0 0
      %1384 = vperm.xlu0 %1383, %v1220
      %v1385 = vpop.permute.xlu0 %1384
      %1388 = vset.pattern.permute.xlu0 0
      %1389 = vperm.xlu0 %1388, %v1221
      %v1390 = vpop.permute.xlu0 %1389
      %1393 = vset.pattern.permute.xlu0 0
      %1394 = vperm.xlu0 %1393, %v1222
      %v1395 = vpop.permute.xlu0 %1394
      %1398 = vset.pattern.permute.xlu0 0
      %1399 = vperm.xlu0 %1398, %v1223
      %v1400 = vpop.permute.xlu0 %1399
      %1403 = vset.pattern.permute.xlu0 0
      %1404 = vperm.xlu0 %1403, %v1224
      %v1405 = vpop.permute.xlu0 %1404
      %1408 = vset.pattern.permute.xlu0 0
      %1409 = vperm.xlu0 %1408, %v1225
      %v1410 = vpop.permute.xlu0 %1409
      %1413 = vset.pattern.permute.xlu0 0
      %1414 = vperm.xlu0 %1413, %v1226
      %v1415 = vpop.permute.xlu0 %1414
      %1418 = vset.pattern.permute.xlu0 0
      %1419 = vperm.xlu0 %1418, %v1227
      %v1420 = vpop.permute.xlu0 %1419
      %1423 = vset.pattern.permute.xlu0 0
      %1424 = vperm.xlu0 %1423, %v1228
      %v1425 = vpop.permute.xlu0 %1424
      %1428 = vset.pattern.permute.xlu0 0
      %1429 = vperm.xlu0 %1428, %v1229
      %v1430 = vpop.permute.xlu0 %1429
      %1433 = vset.pattern.permute.xlu0 0
      %1434 = vperm.xlu0 %1433, %v1230
      %v1435 = vpop.permute.xlu0 %1434
      %1438 = vset.pattern.permute.xlu0 0
      %1439 = vperm.xlu0 %1438, %v1231
      %v1440 = vpop.permute.xlu0 %1439
      %1443 = vset.pattern.permute.xlu0 0
      %1444 = vperm.xlu0 %1443, %v1232
      %v1445 = vpop.permute.xlu0 %1444
      %1448 = vset.pattern.permute.xlu0 0
      %1449 = vperm.xlu0 %1448, %v1233
      %v1450 = vpop.permute.xlu0 %1449
      %1453 = vset.pattern.permute.xlu0 0
      %1454 = vperm.xlu0 %1453, %v1234
      %v1455 = vpop.permute.xlu0 %1454
      %1458 = vset.pattern.permute.xlu0 0
      %1459 = vperm.xlu0 %1458, %v1235
      %v1460 = vpop.permute.xlu0 %1459
      %1463 = vset.pattern.permute.xlu0 0
      %1464 = vperm.xlu0 %1463, %v1236
      %v1465 = vpop.permute.xlu0 %1464
      %1468 = vset.pattern.permute.xlu0 0
      %1469 = vperm.xlu0 %1468, %v1237
      %v1470 = vpop.permute.xlu0 %1469
      %1473 = vset.pattern.permute.xlu0 0
      %1474 = vperm.xlu0 %1473, %v1238
      %v1475 = vpop.permute.xlu0 %1474
      %1478 = vset.pattern.permute.xlu0 0
      %1479 = vperm.xlu0 %1478, %v1239
      %v1480 = vpop.permute.xlu0 %1479
      %1483 = vset.pattern.permute.xlu0 0
      %1484 = vperm.xlu0 %1483, %v1240
      %v1485 = vpop.permute.xlu0 %1484
      %1488 = vset.pattern.permute.xlu0 0
      %1489 = vperm.xlu0 %1488, %v1241
      %v1490 = vpop.permute.xlu0 %1489
      %1493 = vset.pattern.permute.xlu0 0
      %1494 = vperm.xlu0 %1493, %v1242
      %v1495 = vpop.permute.xlu0 %1494
      %1498 = vset.pattern.permute.xlu0 0
      %1499 = vperm.xlu0 %1498, %v1243
      %v1500 = vpop.permute.xlu0 %1499
      %1503 = vset.pattern.permute.xlu0 0
      %1504 = vperm.xlu0 %1503, %v1244
      %v1505 = vpop.permute.xlu0 %1504
      %1508 = vset.pattern.permute.xlu0 0
      %1509 = vperm.xlu0 %1508, %v1245
      %v1510 = vpop.permute.xlu0 %1509
      %1513 = vset.pattern.permute.xlu0 0
      %1514 = vperm.xlu0 %1513, %v1246
      %v1515 = vpop.permute.xlu0 %1514
      %v1517 = vmul.f32 %v1139, %v1250
      %v1518 = vmul.f32 %v1140, %v1255
      %v1519 = vmul.f32 %v1141, %v1260
      %v1520 = vmul.f32 %v1142, %v1265
      %v1521 = vmul.f32 %v1143, %v1270
      %v1522 = vmul.f32 %v1144, %v1275
      %v1523 = vmul.f32 %v1145, %v1280
      %v1524 = vmul.f32 %v1146, %v1285
      %v1525 = vmul.f32 %v1147, %v1290
      %v1526 = vmul.f32 %v1148, %v1295
      %v1527 = vmul.f32 %v1149, %v1300
      %v1528 = vmul.f32 %v1150, %v1305
      %v1529 = vmul.f32 %v1151, %v1310
      %v1530 = vmul.f32 %v1152, %v1315
      %v1531 = vmul.f32 %v1153, %v1320
      %v1532 = vmul.f32 %v1154, %v1325
      %v1533 = vmul.f32 %v1155, %v1330
      %v1534 = vmul.f32 %v1156, %v1335
      %v1535 = vmul.f32 %v1157, %v1340
      %v1536 = vmul.f32 %v1158, %v1345
      %v1537 = vmul.f32 %v1159, %v1350
      %v1538 = vmul.f32 %v1160, %v1355
      %v1539 = vmul.f32 %v1161, %v1360
      %v1540 = vmul.f32 %v1162, %v1365
      %v1541 = vmul.f32 %v1163, %v1370
      %v1542 = vmul.f32 %v1164, %v1375
      %v1543 = vmul.f32 %v1165, %v1380
      %v1544 = vmul.f32 %v1166, %v1385
      %v1545 = vmul.f32 %v1167, %v1390
      %v1546 = vmul.f32 %v1168, %v1395
      %v1547 = vmul.f32 %v1169, %v1400
      %v1548 = vmul.f32 %v1170, %v1405
      %v1549 = vmul.f32 %v1171, %v1410
      %v1550 = vmul.f32 %v1172, %v1415
      %v1551 = vmul.f32 %v1173, %v1420
      %v1552 = vmul.f32 %v1174, %v1425
      %v1553 = vmul.f32 %v1175, %v1430
      %v1554 = vmul.f32 %v1176, %v1435
      %v1555 = vmul.f32 %v1177, %v1440
      %v1556 = vmul.f32 %v1178, %v1445
      %v1557 = vmul.f32 %v1179, %v1450
      %v1558 = vmul.f32 %v1180, %v1455
      %v1559 = vmul.f32 %v1181, %v1460
      %v1560 = vmul.f32 %v1182, %v1465
      %v1561 = vmul.f32 %v1183, %v1470
      %v1562 = vmul.f32 %v1184, %v1475
      %v1563 = vmul.f32 %v1185, %v1480
      %v1564 = vmul.f32 %v1186, %v1485
      %v1565 = vmul.f32 %v1187, %v1490
      %v1566 = vmul.f32 %v1188, %v1495
      %v1567 = vmul.f32 %v1189, %v1500
      %v1568 = vmul.f32 %v1190, %v1505
      %v1569 = vmul.f32 %v1191, %v1510
      %v1570 = vmul.f32 %v1192, %v1515
      %vm1571 = vcmask 523264
      %1572 = vst.msk [vmem:[#allocation2] sm:$0xff] %vm1571, %v1517
      %1573 = vst.msk [vmem:[#allocation2 + $0x8] sm:$0xff] %vm1571, %v1518
      %1574 = vst.msk [vmem:[#allocation2 + $0x10] sm:$0xff] %vm1571, %v1519
      %1575 = vst.msk [vmem:[#allocation2 + $0x18] sm:$0xff] %vm1571, %v1520
      %1576 = vst.msk [vmem:[#allocation2 + $0x20] sm:$0xff] %vm1571, %v1521
      %1577 = vst.msk [vmem:[#allocation2 + $0x28] sm:$0xff] %vm1571, %v1522
      %1578 = vst.msk [vmem:[#allocation2 + $0x30] sm:$0xff] %vm1571, %v1523
      %1579 = vst.msk [vmem:[#allocation2 + $0x38] sm:$0xff] %vm1571, %v1524
      %1580 = vst.msk [vmem:[#allocation2 + $0x40] sm:$0xff] %vm1571, %v1525
      %1581 = vst.msk [vmem:[#allocation2 + $0x48] sm:$0xff] %vm1571, %v1526
      %1582 = vst.msk [vmem:[#allocation2 + $0x50] sm:$0xff] %vm1571, %v1527
      %1583 = vst.msk [vmem:[#allocation2 + $0x58] sm:$0xff] %vm1571, %v1528
      %1584 = vst.msk [vmem:[#allocation2 + $0x60] sm:$0xff] %vm1571, %v1529
      %1585 = vst.msk [vmem:[#allocation2 + $0x68] sm:$0xff] %vm1571, %v1530
      %1586 = vst.msk [vmem:[#allocation2 + $0x70] sm:$0xff] %vm1571, %v1531
      %1587 = vst.msk [vmem:[#allocation2 + $0x78] sm:$0xff] %vm1571, %v1532
      %1588 = vst.msk [vmem:[#allocation2 + $0x80] sm:$0xff] %vm1571, %v1533
      %1589 = vst.msk [vmem:[#allocation2 + $0x88] sm:$0xff] %vm1571, %v1534
      %1590 = vst.msk [vmem:[#allocation2 + $0x90] sm:$0xff] %vm1571, %v1535
      %1591 = vst.msk [vmem:[#allocation2 + $0x98] sm:$0xff] %vm1571, %v1536
      %1592 = vst.msk [vmem:[#allocation2 + $0xa0] sm:$0xff] %vm1571, %v1537
      %1593 = vst.msk [vmem:[#allocation2 + $0xa8] sm:$0xff] %vm1571, %v1538
      %1594 = vst.msk [vmem:[#allocation2 + $0xb0] sm:$0xff] %vm1571, %v1539
      %1595 = vst.msk [vmem:[#allocation2 + $0xb8] sm:$0xff] %vm1571, %v1540
      %1596 = vst.msk [vmem:[#allocation2 + $0xc0] sm:$0xff] %vm1571, %v1541
      %1597 = vst.msk [vmem:[#allocation2 + $0xc8] sm:$0xff] %vm1571, %v1542
      %1598 = vst.msk [vmem:[#allocation2 + $0xd0] sm:$0xff] %vm1571, %v1543
      %1599 = vst.msk [vmem:[#allocation2 + $0xd8] sm:$0xff] %vm1571, %v1544
      %1600 = vst.msk [vmem:[#allocation2 + $0xe0] sm:$0xff] %vm1571, %v1545
      %1601 = vst.msk [vmem:[#allocation2 + $0xe8] sm:$0xff] %vm1571, %v1546
      %1602 = vst.msk [vmem:[#allocation2 + $0xf0] sm:$0xff] %vm1571, %v1547
      %1603 = vst.msk [vmem:[#allocation2 + $0xf8] sm:$0xff] %vm1571, %v1548
      %1604 = vst.msk [vmem:[#allocation2 + $0x100] sm:$0xff] %vm1571, %v1549
      %1605 = vst.msk [vmem:[#allocation2 + $0x108] sm:$0xff] %vm1571, %v1550
      %1606 = vst.msk [vmem:[#allocation2 + $0x110] sm:$0xff] %vm1571, %v1551
      %1607 = vst.msk [vmem:[#allocation2 + $0x118] sm:$0xff] %vm1571, %v1552
      %1608 = vst.msk [vmem:[#allocation2 + $0x120] sm:$0xff] %vm1571, %v1553
      %1609 = vst.msk [vmem:[#allocation2 + $0x128] sm:$0xff] %vm1571, %v1554
      %1610 = vst.msk [vmem:[#allocation2 + $0x130] sm:$0xff] %vm1571, %v1555
      %1611 = vst.msk [vmem:[#allocation2 + $0x138] sm:$0xff] %vm1571, %v1556
      %1612 = vst.msk [vmem:[#allocation2 + $0x140] sm:$0xff] %vm1571, %v1557
      %1613 = vst.msk [vmem:[#allocation2 + $0x148] sm:$0xff] %vm1571, %v1558
      %1614 = vst.msk [vmem:[#allocation2 + $0x150] sm:$0xff] %vm1571, %v1559
      %1615 = vst.msk [vmem:[#allocation2 + $0x158] sm:$0xff] %vm1571, %v1560
      %1616 = vst.msk [vmem:[#allocation2 + $0x160] sm:$0xff] %vm1571, %v1561
      %1617 = vst.msk [vmem:[#allocation2 + $0x168] sm:$0xff] %vm1571, %v1562
      %1618 = vst.msk [vmem:[#allocation2 + $0x170] sm:$0xff] %vm1571, %v1563
      %1619 = vst.msk [vmem:[#allocation2 + $0x178] sm:$0xff] %vm1571, %v1564
      %1620 = vst.msk [vmem:[#allocation2 + $0x180] sm:$0xff] %vm1571, %v1565
      %1621 = vst.msk [vmem:[#allocation2 + $0x188] sm:$0xff] %vm1571, %v1566
      %1622 = vst.msk [vmem:[#allocation2 + $0x190] sm:$0xff] %vm1571, %v1567
      %1623 = vst.msk [vmem:[#allocation2 + $0x198] sm:$0xff] %vm1571, %v1568
      %1624 = vst.msk [vmem:[#allocation2 + $0x1a0] sm:$0xff] %vm1571, %v1569
      %1625 = vst.msk [vmem:[#allocation2 + $0x1a8] sm:$0xff] %vm1571, %v1570
      %v1626 = vld [vmem:[#allocation2] sm:$0xff]
      %v1627 = vld [vmem:[#allocation2 + $0x8] sm:$0xff]
      %v1628 = vld [vmem:[#allocation2 + $0x18] sm:$0xff]
      %v1629 = vld [vmem:[#allocation2 + $0x20] sm:$0xff]
      %v1630 = vld [vmem:[#allocation2 + $0x30] sm:$0xff]
      %v1631 = vld [vmem:[#allocation2 + $0x38] sm:$0xff]
      %v1632 = vld [vmem:[#allocation2 + $0x48] sm:$0xff]
      %v1633 = vld [vmem:[#allocation2 + $0x50] sm:$0xff]
      %v1634 = vld [vmem:[#allocation2 + $0x60] sm:$0xff]
      %v1635 = vld [vmem:[#allocation2 + $0x68] sm:$0xff]
      %v1636 = vld [vmem:[#allocation2 + $0x78] sm:$0xff]
      %v1637 = vld [vmem:[#allocation2 + $0x80] sm:$0xff]
      %v1638 = vld [vmem:[#allocation2 + $0x90] sm:$0xff]
      %v1639 = vld [vmem:[#allocation2 + $0x98] sm:$0xff]
      %v1640 = vld [vmem:[#allocation2 + $0xa8] sm:$0xff]
      %v1641 = vld [vmem:[#allocation2 + $0xb0] sm:$0xff]
      %v1642 = vld [vmem:[#allocation2 + $0xc0] sm:$0xff]
      %v1643 = vld [vmem:[#allocation2 + $0xc8] sm:$0xff]
      %v1644 = vld [vmem:[#allocation2 + $0xd8] sm:$0xff]
      %v1645 = vld [vmem:[#allocation2 + $0xe0] sm:$0xff]
      %v1646 = vld [vmem:[#allocation2 + $0xf0] sm:$0xff]
      %v1647 = vld [vmem:[#allocation2 + $0xf8] sm:$0xff]
      %v1648 = vld [vmem:[#allocation2 + $0x108] sm:$0xff]
      %v1649 = vld [vmem:[#allocation2 + $0x110] sm:$0xff]
      %v1650 = vld [vmem:[#allocation2 + $0x120] sm:$0xff]
      %v1651 = vld [vmem:[#allocation2 + $0x128] sm:$0xff]
      %v1652 = vld [vmem:[#allocation2 + $0x138] sm:$0xff]
      %v1653 = vld [vmem:[#allocation2 + $0x140] sm:$0xff]
      %v1654 = vld [vmem:[#allocation2 + $0x150] sm:$0xff]
      %v1655 = vld [vmem:[#allocation2 + $0x158] sm:$0xff]
      %v1656 = vld [vmem:[#allocation2 + $0x168] sm:$0xff]
      %v1657 = vld [vmem:[#allocation2 + $0x170] sm:$0xff]
      %v1658 = vld [vmem:[%s5] sm:$0x1]
      %v1660 = vlaneseq
      %v1661 = vshrl.u32 %v1660, 7
      %v1662 = vsub.s32 0, %v1661
      %v1663 = vrot.slane %v1658, %v1662
      %v1665 = vmul.f32 %v1626, %v1663
      %v1666 = vmul.f32 %v1627, %v1663
      %v1667 = vmul.f32 %v1628, %v1663
      %v1668 = vmul.f32 %v1629, %v1663
      %v1669 = vmul.f32 %v1630, %v1663
      %v1670 = vmul.f32 %v1631, %v1663
      %v1671 = vmul.f32 %v1632, %v1663
      %v1672 = vmul.f32 %v1633, %v1663
      %v1673 = vmul.f32 %v1634, %v1663
      %v1674 = vmul.f32 %v1635, %v1663
      %v1675 = vmul.f32 %v1636, %v1663
      %v1676 = vmul.f32 %v1637, %v1663
      %v1677 = vmul.f32 %v1638, %v1663
      %v1678 = vmul.f32 %v1639, %v1663
      %v1679 = vmul.f32 %v1640, %v1663
      %v1680 = vmul.f32 %v1641, %v1663
      %v1681 = vmul.f32 %v1642, %v1663
      %v1682 = vmul.f32 %v1643, %v1663
      %v1683 = vmul.f32 %v1644, %v1663
      %v1684 = vmul.f32 %v1645, %v1663
      %v1685 = vmul.f32 %v1646, %v1663
      %v1686 = vmul.f32 %v1647, %v1663
      %v1687 = vmul.f32 %v1648, %v1663
      %v1688 = vmul.f32 %v1649, %v1663
      %v1689 = vmul.f32 %v1650, %v1663
      %v1690 = vmul.f32 %v1651, %v1663
      %v1691 = vmul.f32 %v1652, %v1663
      %v1692 = vmul.f32 %v1653, %v1663
      %v1693 = vmul.f32 %v1654, %v1663
      %v1694 = vmul.f32 %v1655, %v1663
      %v1695 = vmul.f32 %v1656, %v1663
      %v1696 = vmul.f32 %v1657, %v1663
      %v1697 = vld [vmem:[#allocation2 + $0x1] sm:$0xff]
      %v1698 = vld [vmem:[#allocation2 + $0x9] sm:$0xff]
      %v1699 = vld [vmem:[#allocation2 + $0x19] sm:$0xff]
      %v1700 = vld [vmem:[#allocation2 + $0x21] sm:$0xff]
      %v1701 = vld [vmem:[#allocation2 + $0x31] sm:$0xff]
      %v1702 = vld [vmem:[#allocation2 + $0x39] sm:$0xff]
      %v1703 = vld [vmem:[#allocation2 + $0x49] sm:$0xff]
      %v1704 = vld [vmem:[#allocation2 + $0x51] sm:$0xff]
      %v1705 = vld [vmem:[#allocation2 + $0x61] sm:$0xff]
      %v1706 = vld [vmem:[#allocation2 + $0x69] sm:$0xff]
      %v1707 = vld [vmem:[#allocation2 + $0x79] sm:$0xff]
      %v1708 = vld [vmem:[#allocation2 + $0x81] sm:$0xff]
      %v1709 = vld [vmem:[#allocation2 + $0x91] sm:$0xff]
      %v1710 = vld [vmem:[#allocation2 + $0x99] sm:$0xff]
      %v1711 = vld [vmem:[#allocation2 + $0xa9] sm:$0xff]
      %v1712 = vld [vmem:[#allocation2 + $0xb1] sm:$0xff]
      %v1713 = vld [vmem:[#allocation2 + $0xc1] sm:$0xff]
      %v1714 = vld [vmem:[#allocation2 + $0xc9] sm:$0xff]
      %v1715 = vld [vmem:[#allocation2 + $0xd9] sm:$0xff]
      %v1716 = vld [vmem:[#allocation2 + $0xe1] sm:$0xff]
      %v1717 = vld [vmem:[#allocation2 + $0xf1] sm:$0xff]
      %v1718 = vld [vmem:[#allocation2 + $0xf9] sm:$0xff]
      %v1719 = vld [vmem:[#allocation2 + $0x109] sm:$0xff]
      %v1720 = vld [vmem:[#allocation2 + $0x111] sm:$0xff]
      %v1721 = vld [vmem:[#allocation2 + $0x121] sm:$0xff]
      %v1722 = vld [vmem:[#allocation2 + $0x129] sm:$0xff]
      %v1723 = vld [vmem:[#allocation2 + $0x139] sm:$0xff]
      %v1724 = vld [vmem:[#allocation2 + $0x141] sm:$0xff]
      %v1725 = vld [vmem:[#allocation2 + $0x151] sm:$0xff]
      %v1726 = vld [vmem:[#allocation2 + $0x159] sm:$0xff]
      %v1727 = vld [vmem:[#allocation2 + $0x169] sm:$0xff]
      %v1728 = vld [vmem:[#allocation2 + $0x171] sm:$0xff]
      %s1729 = scalar_lea.vmem %s5, 1
      %v1730 = vld [vmem:[%s1729] sm:$0x1]
      %v1732 = vlaneseq
      %v1733 = vshrl.u32 %v1732, 7
      %v1734 = vsub.s32 0, %v1733
      %v1735 = vrot.slane %v1730, %v1734
      %v1737 = vmul.f32 %v1697, %v1735
      %v1738 = vmul.f32 %v1698, %v1735
      %v1739 = vmul.f32 %v1699, %v1735
      %v1740 = vmul.f32 %v1700, %v1735
      %v1741 = vmul.f32 %v1701, %v1735
      %v1742 = vmul.f32 %v1702, %v1735
      %v1743 = vmul.f32 %v1703, %v1735
      %v1744 = vmul.f32 %v1704, %v1735
      %v1745 = vmul.f32 %v1705, %v1735
      %v1746 = vmul.f32 %v1706, %v1735
      %v1747 = vmul.f32 %v1707, %v1735
      %v1748 = vmul.f32 %v1708, %v1735
      %v1749 = vmul.f32 %v1709, %v1735
      %v1750 = vmul.f32 %v1710, %v1735
      %v1751 = vmul.f32 %v1711, %v1735
      %v1752 = vmul.f32 %v1712, %v1735
      %v1753 = vmul.f32 %v1713, %v1735
      %v1754 = vmul.f32 %v1714, %v1735
      %v1755 = vmul.f32 %v1715, %v1735
      %v1756 = vmul.f32 %v1716, %v1735
      %v1757 = vmul.f32 %v1717, %v1735
      %v1758 = vmul.f32 %v1718, %v1735
      %v1759 = vmul.f32 %v1719, %v1735
      %v1760 = vmul.f32 %v1720, %v1735
      %v1761 = vmul.f32 %v1721, %v1735
      %v1762 = vmul.f32 %v1722, %v1735
      %v1763 = vmul.f32 %v1723, %v1735
      %v1764 = vmul.f32 %v1724, %v1735
      %v1765 = vmul.f32 %v1725, %v1735
      %v1766 = vmul.f32 %v1726, %v1735
      %v1767 = vmul.f32 %v1727, %v1735
      %v1768 = vmul.f32 %v1728, %v1735
      %v1769 = vadd.f32 %v1665, %v1737
      %v1770 = vadd.f32 %v1666, %v1738
      %v1771 = vadd.f32 %v1667, %v1739
      %v1772 = vadd.f32 %v1668, %v1740
      %v1773 = vadd.f32 %v1669, %v1741
      %v1774 = vadd.f32 %v1670, %v1742
      %v1775 = vadd.f32 %v1671, %v1743
      %v1776 = vadd.f32 %v1672, %v1744
      %v1777 = vadd.f32 %v1673, %v1745
      %v1778 = vadd.f32 %v1674, %v1746
      %v1779 = vadd.f32 %v1675, %v1747
      %v1780 = vadd.f32 %v1676, %v1748
      %v1781 = vadd.f32 %v1677, %v1749
      %v1782 = vadd.f32 %v1678, %v1750
      %v1783 = vadd.f32 %v1679, %v1751
      %v1784 = vadd.f32 %v1680, %v1752
      %v1785 = vadd.f32 %v1681, %v1753
      %v1786 = vadd.f32 %v1682, %v1754
      %v1787 = vadd.f32 %v1683, %v1755
      %v1788 = vadd.f32 %v1684, %v1756
      %v1789 = vadd.f32 %v1685, %v1757
      %v1790 = vadd.f32 %v1686, %v1758
      %v1791 = vadd.f32 %v1687, %v1759
      %v1792 = vadd.f32 %v1688, %v1760
      %v1793 = vadd.f32 %v1689, %v1761
      %v1794 = vadd.f32 %v1690, %v1762
      %v1795 = vadd.f32 %v1691, %v1763
      %v1796 = vadd.f32 %v1692, %v1764
      %v1797 = vadd.f32 %v1693, %v1765
      %v1798 = vadd.f32 %v1694, %v1766
      %v1799 = vadd.f32 %v1695, %v1767
      %v1800 = vadd.f32 %v1696, %v1768
      %v1801 = vld [vmem:[#allocation2 + $0x2] sm:$0xff]
      %v1802 = vld [vmem:[#allocation2 + $0xa] sm:$0xff]
      %v1803 = vld [vmem:[#allocation2 + $0x1a] sm:$0xff]
      %v1804 = vld [vmem:[#allocation2 + $0x22] sm:$0xff]
      %v1805 = vld [vmem:[#allocation2 + $0x32] sm:$0xff]
      %v1806 = vld [vmem:[#allocation2 + $0x3a] sm:$0xff]
      %v1807 = vld [vmem:[#allocation2 + $0x4a] sm:$0xff]
      %v1808 = vld [vmem:[#allocation2 + $0x52] sm:$0xff]
      %v1809 = vld [vmem:[#allocation2 + $0x62] sm:$0xff]
      %v1810 = vld [vmem:[#allocation2 + $0x6a] sm:$0xff]
      %v1811 = vld [vmem:[#allocation2 + $0x7a] sm:$0xff]
      %v1812 = vld [vmem:[#allocation2 + $0x82] sm:$0xff]
      %v1813 = vld [vmem:[#allocation2 + $0x92] sm:$0xff]
      %v1814 = vld [vmem:[#allocation2 + $0x9a] sm:$0xff]
      %v1815 = vld [vmem:[#allocation2 + $0xaa] sm:$0xff]
      %v1816 = vld [vmem:[#allocation2 + $0xb2] sm:$0xff]
      %v1817 = vld [vmem:[#allocation2 + $0xc2] sm:$0xff]
      %v1818 = vld [vmem:[#allocation2 + $0xca] sm:$0xff]
      %v1819 = vld [vmem:[#allocation2 + $0xda] sm:$0xff]
      %v1820 = vld [vmem:[#allocation2 + $0xe2] sm:$0xff]
      %v1821 = vld [vmem:[#allocation2 + $0xf2] sm:$0xff]
      %v1822 = vld [vmem:[#allocation2 + $0xfa] sm:$0xff]
      %v1823 = vld [vmem:[#allocation2 + $0x10a] sm:$0xff]
      %v1824 = vld [vmem:[#allocation2 + $0x112] sm:$0xff]
      %v1825 = vld [vmem:[#allocation2 + $0x122] sm:$0xff]
      %v1826 = vld [vmem:[#allocation2 + $0x12a] sm:$0xff]
      %v1827 = vld [vmem:[#allocation2 + $0x13a] sm:$0xff]
      %v1828 = vld [vmem:[#allocation2 + $0x142] sm:$0xff]
      %v1829 = vld [vmem:[#allocation2 + $0x152] sm:$0xff]
      %v1830 = vld [vmem:[#allocation2 + $0x15a] sm:$0xff]
      %v1831 = vld [vmem:[#allocation2 + $0x16a] sm:$0xff]
      %v1832 = vld [vmem:[#allocation2 + $0x172] sm:$0xff]
      %s1833 = scalar_lea.vmem %s5, 2
      %v1834 = vld [vmem:[%s1833] sm:$0x1]
      %v1836 = vlaneseq
      %v1837 = vshrl.u32 %v1836, 7
      %v1838 = vsub.s32 0, %v1837
      %v1839 = vrot.slane %v1834, %v1838
      %v1841 = vmul.f32 %v1801, %v1839
      %v1842 = vmul.f32 %v1802, %v1839
      %v1843 = vmul.f32 %v1803, %v1839
      %v1844 = vmul.f32 %v1804, %v1839
      %v1845 = vmul.f32 %v1805, %v1839
      %v1846 = vmul.f32 %v1806, %v1839
      %v1847 = vmul.f32 %v1807, %v1839
      %v1848 = vmul.f32 %v1808, %v1839
      %v1849 = vmul.f32 %v1809, %v1839
      %v1850 = vmul.f32 %v1810, %v1839
      %v1851 = vmul.f32 %v1811, %v1839
      %v1852 = vmul.f32 %v1812, %v1839
      %v1853 = vmul.f32 %v1813, %v1839
      %v1854 = vmul.f32 %v1814, %v1839
      %v1855 = vmul.f32 %v1815, %v1839
      %v1856 = vmul.f32 %v1816, %v1839
      %v1857 = vmul.f32 %v1817, %v1839
      %v1858 = vmul.f32 %v1818, %v1839
      %v1859 = vmul.f32 %v1819, %v1839
      %v1860 = vmul.f32 %v1820, %v1839
      %v1861 = vmul.f32 %v1821, %v1839
      %v1862 = vmul.f32 %v1822, %v1839
      %v1863 = vmul.f32 %v1823, %v1839
      %v1864 = vmul.f32 %v1824, %v1839
      %v1865 = vmul.f32 %v1825, %v1839
      %v1866 = vmul.f32 %v1826, %v1839
      %v1867 = vmul.f32 %v1827, %v1839
      %v1868 = vmul.f32 %v1828, %v1839
      %v1869 = vmul.f32 %v1829, %v1839
      %v1870 = vmul.f32 %v1830, %v1839
      %v1871 = vmul.f32 %v1831, %v1839
      %v1872 = vmul.f32 %v1832, %v1839
      %v1873 = vadd.f32 %v1769, %v1841
      %v1874 = vadd.f32 %v1770, %v1842
      %v1875 = vadd.f32 %v1771, %v1843
      %v1876 = vadd.f32 %v1772, %v1844
      %v1877 = vadd.f32 %v1773, %v1845
      %v1878 = vadd.f32 %v1774, %v1846
      %v1879 = vadd.f32 %v1775, %v1847
      %v1880 = vadd.f32 %v1776, %v1848
      %v1881 = vadd.f32 %v1777, %v1849
      %v1882 = vadd.f32 %v1778, %v1850
      %v1883 = vadd.f32 %v1779, %v1851
      %v1884 = vadd.f32 %v1780, %v1852
      %v1885 = vadd.f32 %v1781, %v1853
      %v1886 = vadd.f32 %v1782, %v1854
      %v1887 = vadd.f32 %v1783, %v1855
      %v1888 = vadd.f32 %v1784, %v1856
      %v1889 = vadd.f32 %v1785, %v1857
      %v1890 = vadd.f32 %v1786, %v1858
      %v1891 = vadd.f32 %v1787, %v1859
      %v1892 = vadd.f32 %v1788, %v1860
      %v1893 = vadd.f32 %v1789, %v1861
      %v1894 = vadd.f32 %v1790, %v1862
      %v1895 = vadd.f32 %v1791, %v1863
      %v1896 = vadd.f32 %v1792, %v1864
      %v1897 = vadd.f32 %v1793, %v1865
      %v1898 = vadd.f32 %v1794, %v1866
      %v1899 = vadd.f32 %v1795, %v1867
      %v1900 = vadd.f32 %v1796, %v1868
      %v1901 = vadd.f32 %v1797, %v1869
      %v1902 = vadd.f32 %v1798, %v1870
      %v1903 = vadd.f32 %v1799, %v1871
      %v1904 = vadd.f32 %v1800, %v1872
      %s1905 = scalar_lea.vmem [#allocation2], 24
      %v1906 = vld [vmem:[%s1905] sm:$0xff]
      %v1907 = vld [vmem:[%s1905 + $0x8] sm:$0xff]
      %v1908 = vld [vmem:[%s1905 + $0x18] sm:$0xff]
      %v1909 = vld [vmem:[%s1905 + $0x20] sm:$0xff]
      %v1910 = vld [vmem:[%s1905 + $0x30] sm:$0xff]
      %v1911 = vld [vmem:[%s1905 + $0x38] sm:$0xff]
      %v1912 = vld [vmem:[%s1905 + $0x48] sm:$0xff]
      %v1913 = vld [vmem:[%s1905 + $0x50] sm:$0xff]
      %v1914 = vld [vmem:[%s1905 + $0x60] sm:$0xff]
      %v1915 = vld [vmem:[%s1905 + $0x68] sm:$0xff]
      %v1916 = vld [vmem:[%s1905 + $0x78] sm:$0xff]
      %v1917 = vld [vmem:[%s1905 + $0x80] sm:$0xff]
      %v1918 = vld [vmem:[%s1905 + $0x90] sm:$0xff]
      %v1919 = vld [vmem:[%s1905 + $0x98] sm:$0xff]
      %v1920 = vld [vmem:[%s1905 + $0xa8] sm:$0xff]
      %v1921 = vld [vmem:[%s1905 + $0xb0] sm:$0xff]
      %v1922 = vld [vmem:[%s1905 + $0xc0] sm:$0xff]
      %v1923 = vld [vmem:[%s1905 + $0xc8] sm:$0xff]
      %v1924 = vld [vmem:[%s1905 + $0xd8] sm:$0xff]
      %v1925 = vld [vmem:[%s1905 + $0xe0] sm:$0xff]
      %v1926 = vld [vmem:[%s1905 + $0xf0] sm:$0xff]
      %v1927 = vld [vmem:[%s1905 + $0xf8] sm:$0xff]
      %v1928 = vld [vmem:[%s1905 + $0x108] sm:$0xff]
      %v1929 = vld [vmem:[%s1905 + $0x110] sm:$0xff]
      %v1930 = vld [vmem:[%s1905 + $0x120] sm:$0xff]
      %v1931 = vld [vmem:[%s1905 + $0x128] sm:$0xff]
      %v1932 = vld [vmem:[%s1905 + $0x138] sm:$0xff]
      %v1933 = vld [vmem:[%s1905 + $0x140] sm:$0xff]
      %v1934 = vld [vmem:[%s1905 + $0x150] sm:$0xff]
      %v1935 = vld [vmem:[%s1905 + $0x158] sm:$0xff]
      %v1936 = vld [vmem:[%s1905 + $0x168] sm:$0xff]
      %v1937 = vld [vmem:[%s1905 + $0x170] sm:$0xff]
      %s1938 = scalar_lea.vmem %s5, 3
      %v1939 = vld [vmem:[%s1938] sm:$0x1]
      %v1941 = vlaneseq
      %v1942 = vshrl.u32 %v1941, 7
      %v1943 = vsub.s32 0, %v1942
      %v1944 = vrot.slane %v1939, %v1943
      %v1946 = vmul.f32 %v1906, %v1944
      %v1947 = vmul.f32 %v1907, %v1944
      %v1948 = vmul.f32 %v1908, %v1944
      %v1949 = vmul.f32 %v1909, %v1944
      %v1950 = vmul.f32 %v1910, %v1944
      %v1951 = vmul.f32 %v1911, %v1944
      %v1952 = vmul.f32 %v1912, %v1944
      %v1953 = vmul.f32 %v1913, %v1944
      %v1954 = vmul.f32 %v1914, %v1944
      %v1955 = vmul.f32 %v1915, %v1944
      %v1956 = vmul.f32 %v1916, %v1944
      %v1957 = vmul.f32 %v1917, %v1944
      %v1958 = vmul.f32 %v1918, %v1944
      %v1959 = vmul.f32 %v1919, %v1944
      %v1960 = vmul.f32 %v1920, %v1944
      %v1961 = vmul.f32 %v1921, %v1944
      %v1962 = vmul.f32 %v1922, %v1944
      %v1963 = vmul.f32 %v1923, %v1944
      %v1964 = vmul.f32 %v1924, %v1944
      %v1965 = vmul.f32 %v1925, %v1944
      %v1966 = vmul.f32 %v1926, %v1944
      %v1967 = vmul.f32 %v1927, %v1944
      %v1968 = vmul.f32 %v1928, %v1944
      %v1969 = vmul.f32 %v1929, %v1944
      %v1970 = vmul.f32 %v1930, %v1944
      %v1971 = vmul.f32 %v1931, %v1944
      %v1972 = vmul.f32 %v1932, %v1944
      %v1973 = vmul.f32 %v1933, %v1944
      %v1974 = vmul.f32 %v1934, %v1944
      %v1975 = vmul.f32 %v1935, %v1944
      %v1976 = vmul.f32 %v1936, %v1944
      %v1977 = vmul.f32 %v1937, %v1944
      %v1978 = vadd.f32 %v1873, %v1946
      %v1979 = vadd.f32 %v1874, %v1947
      %v1980 = vadd.f32 %v1875, %v1948
      %v1981 = vadd.f32 %v1876, %v1949
      %v1982 = vadd.f32 %v1877, %v1950
      %v1983 = vadd.f32 %v1878, %v1951
      %v1984 = vadd.f32 %v1879, %v1952
      %v1985 = vadd.f32 %v1880, %v1953
      %v1986 = vadd.f32 %v1881, %v1954
      %v1987 = vadd.f32 %v1882, %v1955
      %v1988 = vadd.f32 %v1883, %v1956
      %v1989 = vadd.f32 %v1884, %v1957
      %v1990 = vadd.f32 %v1885, %v1958
      %v1991 = vadd.f32 %v1886, %v1959
      %v1992 = vadd.f32 %v1887, %v1960
      %v1993 = vadd.f32 %v1888, %v1961
      %v1994 = vadd.f32 %v1889, %v1962
      %v1995 = vadd.f32 %v1890, %v1963
      %v1996 = vadd.f32 %v1891, %v1964
      %v1997 = vadd.f32 %v1892, %v1965
      %v1998 = vadd.f32 %v1893, %v1966
      %v1999 = vadd.f32 %v1894, %v1967
      %v2000 = vadd.f32 %v1895, %v1968
      %v2001 = vadd.f32 %v1896, %v1969
      %v2002 = vadd.f32 %v1897, %v1970
      %v2003 = vadd.f32 %v1898, %v1971
      %v2004 = vadd.f32 %v1899, %v1972
      %v2005 = vadd.f32 %v1900, %v1973
      %v2006 = vadd.f32 %v1901, %v1974
      %v2007 = vadd.f32 %v1902, %v1975
      %v2008 = vadd.f32 %v1903, %v1976
      %v2009 = vadd.f32 %v1904, %v1977
      %v2010 = vld [vmem:[%s1905 + $0x1] sm:$0xff]
      %v2011 = vld [vmem:[%s1905 + $0x9] sm:$0xff]
      %v2012 = vld [vmem:[%s1905 + $0x19] sm:$0xff]
      %v2013 = vld [vmem:[%s1905 + $0x21] sm:$0xff]
      %v2014 = vld [vmem:[%s1905 + $0x31] sm:$0xff]
      %v2015 = vld [vmem:[%s1905 + $0x39] sm:$0xff]
      %v2016 = vld [vmem:[%s1905 + $0x49] sm:$0xff]
      %v2017 = vld [vmem:[%s1905 + $0x51] sm:$0xff]
      %v2018 = vld [vmem:[%s1905 + $0x61] sm:$0xff]
      %v2019 = vld [vmem:[%s1905 + $0x69] sm:$0xff]
      %v2020 = vld [vmem:[%s1905 + $0x79] sm:$0xff]
      %v2021 = vld [vmem:[%s1905 + $0x81] sm:$0xff]
      %v2022 = vld [vmem:[%s1905 + $0x91] sm:$0xff]
      %v2023 = vld [vmem:[%s1905 + $0x99] sm:$0xff]
      %v2024 = vld [vmem:[%s1905 + $0xa9] sm:$0xff]
      %v2025 = vld [vmem:[%s1905 + $0xb1] sm:$0xff]
      %v2026 = vld [vmem:[%s1905 + $0xc1] sm:$0xff]
      %v2027 = vld [vmem:[%s1905 + $0xc9] sm:$0xff]
      %v2028 = vld [vmem:[%s1905 + $0xd9] sm:$0xff]
      %v2029 = vld [vmem:[%s1905 + $0xe1] sm:$0xff]
      %v2030 = vld [vmem:[%s1905 + $0xf1] sm:$0xff]
      %v2031 = vld [vmem:[%s1905 + $0xf9] sm:$0xff]
      %v2032 = vld [vmem:[%s1905 + $0x109] sm:$0xff]
      %v2033 = vld [vmem:[%s1905 + $0x111] sm:$0xff]
      %v2034 = vld [vmem:[%s1905 + $0x121] sm:$0xff]
      %v2035 = vld [vmem:[%s1905 + $0x129] sm:$0xff]
      %v2036 = vld [vmem:[%s1905 + $0x139] sm:$0xff]
      %v2037 = vld [vmem:[%s1905 + $0x141] sm:$0xff]
      %v2038 = vld [vmem:[%s1905 + $0x151] sm:$0xff]
      %v2039 = vld [vmem:[%s1905 + $0x159] sm:$0xff]
      %v2040 = vld [vmem:[%s1905 + $0x169] sm:$0xff]
      %v2041 = vld [vmem:[%s1905 + $0x171] sm:$0xff]
      %s2042 = scalar_lea.vmem %s5, 4
      %v2043 = vld [vmem:[%s2042] sm:$0x1]
      %v2045 = vlaneseq
      %v2046 = vshrl.u32 %v2045, 7
      %v2047 = vsub.s32 0, %v2046
      %v2048 = vrot.slane %v2043, %v2047
      %v2050 = vmul.f32 %v2010, %v2048
      %v2051 = vmul.f32 %v2011, %v2048
      %v2052 = vmul.f32 %v2012, %v2048
      %v2053 = vmul.f32 %v2013, %v2048
      %v2054 = vmul.f32 %v2014, %v2048
      %v2055 = vmul.f32 %v2015, %v2048
      %v2056 = vmul.f32 %v2016, %v2048
      %v2057 = vmul.f32 %v2017, %v2048
      %v2058 = vmul.f32 %v2018, %v2048
      %v2059 = vmul.f32 %v2019, %v2048
      %v2060 = vmul.f32 %v2020, %v2048
      %v2061 = vmul.f32 %v2021, %v2048
      %v2062 = vmul.f32 %v2022, %v2048
      %v2063 = vmul.f32 %v2023, %v2048
      %v2064 = vmul.f32 %v2024, %v2048
      %v2065 = vmul.f32 %v2025, %v2048
      %v2066 = vmul.f32 %v2026, %v2048
      %v2067 = vmul.f32 %v2027, %v2048
      %v2068 = vmul.f32 %v2028, %v2048
      %v2069 = vmul.f32 %v2029, %v2048
      %v2070 = vmul.f32 %v2030, %v2048
      %v2071 = vmul.f32 %v2031, %v2048
      %v2072 = vmul.f32 %v2032, %v2048
      %v2073 = vmul.f32 %v2033, %v2048
      %v2074 = vmul.f32 %v2034, %v2048
      %v2075 = vmul.f32 %v2035, %v2048
      %v2076 = vmul.f32 %v2036, %v2048
      %v2077 = vmul.f32 %v2037, %v2048
      %v2078 = vmul.f32 %v2038, %v2048
      %v2079 = vmul.f32 %v2039, %v2048
      %v2080 = vmul.f32 %v2040, %v2048
      %v2081 = vmul.f32 %v2041, %v2048
      %v2082 = vadd.f32 %v1978, %v2050
      %v2083 = vadd.f32 %v1979, %v2051
      %v2084 = vadd.f32 %v1980, %v2052
      %v2085 = vadd.f32 %v1981, %v2053
      %v2086 = vadd.f32 %v1982, %v2054
      %v2087 = vadd.f32 %v1983, %v2055
      %v2088 = vadd.f32 %v1984, %v2056
      %v2089 = vadd.f32 %v1985, %v2057
      %v2090 = vadd.f32 %v1986, %v2058
      %v2091 = vadd.f32 %v1987, %v2059
      %v2092 = vadd.f32 %v1988, %v2060
      %v2093 = vadd.f32 %v1989, %v2061
      %v2094 = vadd.f32 %v1990, %v2062
      %v2095 = vadd.f32 %v1991, %v2063
      %v2096 = vadd.f32 %v1992, %v2064
      %v2097 = vadd.f32 %v1993, %v2065
      %v2098 = vadd.f32 %v1994, %v2066
      %v2099 = vadd.f32 %v1995, %v2067
      %v2100 = vadd.f32 %v1996, %v2068
      %v2101 = vadd.f32 %v1997, %v2069
      %v2102 = vadd.f32 %v1998, %v2070
      %v2103 = vadd.f32 %v1999, %v2071
      %v2104 = vadd.f32 %v2000, %v2072
      %v2105 = vadd.f32 %v2001, %v2073
      %v2106 = vadd.f32 %v2002, %v2074
      %v2107 = vadd.f32 %v2003, %v2075
      %v2108 = vadd.f32 %v2004, %v2076
      %v2109 = vadd.f32 %v2005, %v2077
      %v2110 = vadd.f32 %v2006, %v2078
      %v2111 = vadd.f32 %v2007, %v2079
      %v2112 = vadd.f32 %v2008, %v2080
      %v2113 = vadd.f32 %v2009, %v2081
      %v2114 = vld [vmem:[%s1905 + $0x2] sm:$0xff]
      %v2115 = vld [vmem:[%s1905 + $0xa] sm:$0xff]
      %v2116 = vld [vmem:[%s1905 + $0x1a] sm:$0xff]
      %v2117 = vld [vmem:[%s1905 + $0x22] sm:$0xff]
      %v2118 = vld [vmem:[%s1905 + $0x32] sm:$0xff]
      %v2119 = vld [vmem:[%s1905 + $0x3a] sm:$0xff]
      %v2120 = vld [vmem:[%s1905 + $0x4a] sm:$0xff]
      %v2121 = vld [vmem:[%s1905 + $0x52] sm:$0xff]
      %v2122 = vld [vmem:[%s1905 + $0x62] sm:$0xff]
      %v2123 = vld [vmem:[%s1905 + $0x6a] sm:$0xff]
      %v2124 = vld [vmem:[%s1905 + $0x7a] sm:$0xff]
      %v2125 = vld [vmem:[%s1905 + $0x82] sm:$0xff]
      %v2126 = vld [vmem:[%s1905 + $0x92] sm:$0xff]
      %v2127 = vld [vmem:[%s1905 + $0x9a] sm:$0xff]
      %v2128 = vld [vmem:[%s1905 + $0xaa] sm:$0xff]
      %v2129 = vld [vmem:[%s1905 + $0xb2] sm:$0xff]
      %v2130 = vld [vmem:[%s1905 + $0xc2] sm:$0xff]
      %v2131 = vld [vmem:[%s1905 + $0xca] sm:$0xff]
      %v2132 = vld [vmem:[%s1905 + $0xda] sm:$0xff]
      %v2133 = vld [vmem:[%s1905 + $0xe2] sm:$0xff]
      %v2134 = vld [vmem:[%s1905 + $0xf2] sm:$0xff]
      %v2135 = vld [vmem:[%s1905 + $0xfa] sm:$0xff]
      %v2136 = vld [vmem:[%s1905 + $0x10a] sm:$0xff]
      %v2137 = vld [vmem:[%s1905 + $0x112] sm:$0xff]
      %v2138 = vld [vmem:[%s1905 + $0x122] sm:$0xff]
      %v2139 = vld [vmem:[%s1905 + $0x12a] sm:$0xff]
      %v2140 = vld [vmem:[%s1905 + $0x13a] sm:$0xff]
      %v2141 = vld [vmem:[%s1905 + $0x142] sm:$0xff]
      %v2142 = vld [vmem:[%s1905 + $0x152] sm:$0xff]
      %v2143 = vld [vmem:[%s1905 + $0x15a] sm:$0xff]
      %v2144 = vld [vmem:[%s1905 + $0x16a] sm:$0xff]
      %v2145 = vld [vmem:[%s1905 + $0x172] sm:$0xff]
      %s2146 = scalar_lea.vmem %s5, 5
      %v2147 = vld [vmem:[%s2146] sm:$0x1]
      %v2149 = vlaneseq
      %v2150 = vshrl.u32 %v2149, 7
      %v2151 = vsub.s32 0, %v2150
      %v2152 = vrot.slane %v2147, %v2151
      %v2154 = vmul.f32 %v2114, %v2152
      %v2155 = vmul.f32 %v2115, %v2152
      %v2156 = vmul.f32 %v2116, %v2152
      %v2157 = vmul.f32 %v2117, %v2152
      %v2158 = vmul.f32 %v2118, %v2152
      %v2159 = vmul.f32 %v2119, %v2152
      %v2160 = vmul.f32 %v2120, %v2152
      %v2161 = vmul.f32 %v2121, %v2152
      %v2162 = vmul.f32 %v2122, %v2152
      %v2163 = vmul.f32 %v2123, %v2152
      %v2164 = vmul.f32 %v2124, %v2152
      %v2165 = vmul.f32 %v2125, %v2152
      %v2166 = vmul.f32 %v2126, %v2152
      %v2167 = vmul.f32 %v2127, %v2152
      %v2168 = vmul.f32 %v2128, %v2152
      %v2169 = vmul.f32 %v2129, %v2152
      %v2170 = vmul.f32 %v2130, %v2152
      %v2171 = vmul.f32 %v2131, %v2152
      %v2172 = vmul.f32 %v2132, %v2152
      %v2173 = vmul.f32 %v2133, %v2152
      %v2174 = vmul.f32 %v2134, %v2152
      %v2175 = vmul.f32 %v2135, %v2152
      %v2176 = vmul.f32 %v2136, %v2152
      %v2177 = vmul.f32 %v2137, %v2152
      %v2178 = vmul.f32 %v2138, %v2152
      %v2179 = vmul.f32 %v2139, %v2152
      %v2180 = vmul.f32 %v2140, %v2152
      %v2181 = vmul.f32 %v2141, %v2152
      %v2182 = vmul.f32 %v2142, %v2152
      %v2183 = vmul.f32 %v2143, %v2152
      %v2184 = vmul.f32 %v2144, %v2152
      %v2185 = vmul.f32 %v2145, %v2152
      %v2186 = vadd.f32 %v2082, %v2154
      %v2187 = vadd.f32 %v2083, %v2155
      %v2188 = vadd.f32 %v2084, %v2156
      %v2189 = vadd.f32 %v2085, %v2157
      %v2190 = vadd.f32 %v2086, %v2158
      %v2191 = vadd.f32 %v2087, %v2159
      %v2192 = vadd.f32 %v2088, %v2160
      %v2193 = vadd.f32 %v2089, %v2161
      %v2194 = vadd.f32 %v2090, %v2162
      %v2195 = vadd.f32 %v2091, %v2163
      %v2196 = vadd.f32 %v2092, %v2164
      %v2197 = vadd.f32 %v2093, %v2165
      %v2198 = vadd.f32 %v2094, %v2166
      %v2199 = vadd.f32 %v2095, %v2167
      %v2200 = vadd.f32 %v2096, %v2168
      %v2201 = vadd.f32 %v2097, %v2169
      %v2202 = vadd.f32 %v2098, %v2170
      %v2203 = vadd.f32 %v2099, %v2171
      %v2204 = vadd.f32 %v2100, %v2172
      %v2205 = vadd.f32 %v2101, %v2173
      %v2206 = vadd.f32 %v2102, %v2174
      %v2207 = vadd.f32 %v2103, %v2175
      %v2208 = vadd.f32 %v2104, %v2176
      %v2209 = vadd.f32 %v2105, %v2177
      %v2210 = vadd.f32 %v2106, %v2178
      %v2211 = vadd.f32 %v2107, %v2179
      %v2212 = vadd.f32 %v2108, %v2180
      %v2213 = vadd.f32 %v2109, %v2181
      %v2214 = vadd.f32 %v2110, %v2182
      %v2215 = vadd.f32 %v2111, %v2183
      %v2216 = vadd.f32 %v2112, %v2184
      %v2217 = vadd.f32 %v2113, %v2185
      %s2218 = scalar_lea.vmem [#allocation2], 48
      %v2219 = vld [vmem:[%s2218] sm:$0xff]
      %v2220 = vld [vmem:[%s2218 + $0x8] sm:$0xff]
      %v2221 = vld [vmem:[%s2218 + $0x18] sm:$0xff]
      %v2222 = vld [vmem:[%s2218 + $0x20] sm:$0xff]
      %v2223 = vld [vmem:[%s2218 + $0x30] sm:$0xff]
      %v2224 = vld [vmem:[%s2218 + $0x38] sm:$0xff]
      %v2225 = vld [vmem:[%s2218 + $0x48] sm:$0xff]
      %v2226 = vld [vmem:[%s2218 + $0x50] sm:$0xff]
      %v2227 = vld [vmem:[%s2218 + $0x60] sm:$0xff]
      %v2228 = vld [vmem:[%s2218 + $0x68] sm:$0xff]
      %v2229 = vld [vmem:[%s2218 + $0x78] sm:$0xff]
      %v2230 = vld [vmem:[%s2218 + $0x80] sm:$0xff]
      %v2231 = vld [vmem:[%s2218 + $0x90] sm:$0xff]
      %v2232 = vld [vmem:[%s2218 + $0x98] sm:$0xff]
      %v2233 = vld [vmem:[%s2218 + $0xa8] sm:$0xff]
      %v2234 = vld [vmem:[%s2218 + $0xb0] sm:$0xff]
      %v2235 = vld [vmem:[%s2218 + $0xc0] sm:$0xff]
      %v2236 = vld [vmem:[%s2218 + $0xc8] sm:$0xff]
      %v2237 = vld [vmem:[%s2218 + $0xd8] sm:$0xff]
      %v2238 = vld [vmem:[%s2218 + $0xe0] sm:$0xff]
      %v2239 = vld [vmem:[%s2218 + $0xf0] sm:$0xff]
      %v2240 = vld [vmem:[%s2218 + $0xf8] sm:$0xff]
      %v2241 = vld [vmem:[%s2218 + $0x108] sm:$0xff]
      %v2242 = vld [vmem:[%s2218 + $0x110] sm:$0xff]
      %v2243 = vld [vmem:[%s2218 + $0x120] sm:$0xff]
      %v2244 = vld [vmem:[%s2218 + $0x128] sm:$0xff]
      %v2245 = vld [vmem:[%s2218 + $0x138] sm:$0xff]
      %v2246 = vld [vmem:[%s2218 + $0x140] sm:$0xff]
      %v2247 = vld [vmem:[%s2218 + $0x150] sm:$0xff]
      %v2248 = vld [vmem:[%s2218 + $0x158] sm:$0xff]
      %v2249 = vld [vmem:[%s2218 + $0x168] sm:$0xff]
      %v2250 = vld [vmem:[%s2218 + $0x170] sm:$0xff]
      %s2251 = scalar_lea.vmem %s5, 6
      %v2252 = vld [vmem:[%s2251] sm:$0x1]
      %v2254 = vlaneseq
      %v2255 = vshrl.u32 %v2254, 7
      %v2256 = vsub.s32 0, %v2255
      %v2257 = vrot.slane %v2252, %v2256
      %v2259 = vmul.f32 %v2219, %v2257
      %v2260 = vmul.f32 %v2220, %v2257
      %v2261 = vmul.f32 %v2221, %v2257
      %v2262 = vmul.f32 %v2222, %v2257
      %v2263 = vmul.f32 %v2223, %v2257
      %v2264 = vmul.f32 %v2224, %v2257
      %v2265 = vmul.f32 %v2225, %v2257
      %v2266 = vmul.f32 %v2226, %v2257
      %v2267 = vmul.f32 %v2227, %v2257
      %v2268 = vmul.f32 %v2228, %v2257
      %v2269 = vmul.f32 %v2229, %v2257
      %v2270 = vmul.f32 %v2230, %v2257
      %v2271 = vmul.f32 %v2231, %v2257
      %v2272 = vmul.f32 %v2232, %v2257
      %v2273 = vmul.f32 %v2233, %v2257
      %v2274 = vmul.f32 %v2234, %v2257
      %v2275 = vmul.f32 %v2235, %v2257
      %v2276 = vmul.f32 %v2236, %v2257
      %v2277 = vmul.f32 %v2237, %v2257
      %v2278 = vmul.f32 %v2238, %v2257
      %v2279 = vmul.f32 %v2239, %v2257
      %v2280 = vmul.f32 %v2240, %v2257
      %v2281 = vmul.f32 %v2241, %v2257
      %v2282 = vmul.f32 %v2242, %v2257
      %v2283 = vmul.f32 %v2243, %v2257
      %v2284 = vmul.f32 %v2244, %v2257
      %v2285 = vmul.f32 %v2245, %v2257
      %v2286 = vmul.f32 %v2246, %v2257
      %v2287 = vmul.f32 %v2247, %v2257
      %v2288 = vmul.f32 %v2248, %v2257
      %v2289 = vmul.f32 %v2249, %v2257
      %v2290 = vmul.f32 %v2250, %v2257
      %v2291 = vadd.f32 %v2186, %v2259
      %v2292 = vadd.f32 %v2187, %v2260
      %v2293 = vadd.f32 %v2188, %v2261
      %v2294 = vadd.f32 %v2189, %v2262
      %v2295 = vadd.f32 %v2190, %v2263
      %v2296 = vadd.f32 %v2191, %v2264
      %v2297 = vadd.f32 %v2192, %v2265
      %v2298 = vadd.f32 %v2193, %v2266
      %v2299 = vadd.f32 %v2194, %v2267
      %v2300 = vadd.f32 %v2195, %v2268
      %v2301 = vadd.f32 %v2196, %v2269
      %v2302 = vadd.f32 %v2197, %v2270
      %v2303 = vadd.f32 %v2198, %v2271
      %v2304 = vadd.f32 %v2199, %v2272
      %v2305 = vadd.f32 %v2200, %v2273
      %v2306 = vadd.f32 %v2201, %v2274
      %v2307 = vadd.f32 %v2202, %v2275
      %v2308 = vadd.f32 %v2203, %v2276
      %v2309 = vadd.f32 %v2204, %v2277
      %v2310 = vadd.f32 %v2205, %v2278
      %v2311 = vadd.f32 %v2206, %v2279
      %v2312 = vadd.f32 %v2207, %v2280
      %v2313 = vadd.f32 %v2208, %v2281
      %v2314 = vadd.f32 %v2209, %v2282
      %v2315 = vadd.f32 %v2210, %v2283
      %v2316 = vadd.f32 %v2211, %v2284
      %v2317 = vadd.f32 %v2212, %v2285
      %v2318 = vadd.f32 %v2213, %v2286
      %v2319 = vadd.f32 %v2214, %v2287
      %v2320 = vadd.f32 %v2215, %v2288
      %v2321 = vadd.f32 %v2216, %v2289
      %v2322 = vadd.f32 %v2217, %v2290
      %v2323 = vld [vmem:[%s2218 + $0x1] sm:$0xff]
      %v2324 = vld [vmem:[%s2218 + $0x9] sm:$0xff]
      %v2325 = vld [vmem:[%s2218 + $0x19] sm:$0xff]
      %v2326 = vld [vmem:[%s2218 + $0x21] sm:$0xff]
      %v2327 = vld [vmem:[%s2218 + $0x31] sm:$0xff]
      %v2328 = vld [vmem:[%s2218 + $0x39] sm:$0xff]
      %v2329 = vld [vmem:[%s2218 + $0x49] sm:$0xff]
      %v2330 = vld [vmem:[%s2218 + $0x51] sm:$0xff]
      %v2331 = vld [vmem:[%s2218 + $0x61] sm:$0xff]
      %v2332 = vld [vmem:[%s2218 + $0x69] sm:$0xff]
      %v2333 = vld [vmem:[%s2218 + $0x79] sm:$0xff]
      %v2334 = vld [vmem:[%s2218 + $0x81] sm:$0xff]
      %v2335 = vld [vmem:[%s2218 + $0x91] sm:$0xff]
      %v2336 = vld [vmem:[%s2218 + $0x99] sm:$0xff]
      %v2337 = vld [vmem:[%s2218 + $0xa9] sm:$0xff]
      %v2338 = vld [vmem:[%s2218 + $0xb1] sm:$0xff]
      %v2339 = vld [vmem:[%s2218 + $0xc1] sm:$0xff]
      %v2340 = vld [vmem:[%s2218 + $0xc9] sm:$0xff]
      %v2341 = vld [vmem:[%s2218 + $0xd9] sm:$0xff]
      %v2342 = vld [vmem:[%s2218 + $0xe1] sm:$0xff]
      %v2343 = vld [vmem:[%s2218 + $0xf1] sm:$0xff]
      %v2344 = vld [vmem:[%s2218 + $0xf9] sm:$0xff]
      %v2345 = vld [vmem:[%s2218 + $0x109] sm:$0xff]
      %v2346 = vld [vmem:[%s2218 + $0x111] sm:$0xff]
      %v2347 = vld [vmem:[%s2218 + $0x121] sm:$0xff]
      %v2348 = vld [vmem:[%s2218 + $0x129] sm:$0xff]
      %v2349 = vld [vmem:[%s2218 + $0x139] sm:$0xff]
      %v2350 = vld [vmem:[%s2218 + $0x141] sm:$0xff]
      %v2351 = vld [vmem:[%s2218 + $0x151] sm:$0xff]
      %v2352 = vld [vmem:[%s2218 + $0x159] sm:$0xff]
      %v2353 = vld [vmem:[%s2218 + $0x169] sm:$0xff]
      %v2354 = vld [vmem:[%s2218 + $0x171] sm:$0xff]
      %s2355 = scalar_lea.vmem %s5, 7
      %v2356 = vld [vmem:[%s2355] sm:$0x1]
      %v2358 = vlaneseq
      %v2359 = vshrl.u32 %v2358, 7
      %v2360 = vsub.s32 0, %v2359
      %v2361 = vrot.slane %v2356, %v2360
      %v2363 = vmul.f32 %v2323, %v2361
      %v2364 = vmul.f32 %v2324, %v2361
      %v2365 = vmul.f32 %v2325, %v2361
      %v2366 = vmul.f32 %v2326, %v2361
      %v2367 = vmul.f32 %v2327, %v2361
      %v2368 = vmul.f32 %v2328, %v2361
      %v2369 = vmul.f32 %v2329, %v2361
      %v2370 = vmul.f32 %v2330, %v2361
      %v2371 = vmul.f32 %v2331, %v2361
      %v2372 = vmul.f32 %v2332, %v2361
      %v2373 = vmul.f32 %v2333, %v2361
      %v2374 = vmul.f32 %v2334, %v2361
      %v2375 = vmul.f32 %v2335, %v2361
      %v2376 = vmul.f32 %v2336, %v2361
      %v2377 = vmul.f32 %v2337, %v2361
      %v2378 = vmul.f32 %v2338, %v2361
      %v2379 = vmul.f32 %v2339, %v2361
      %v2380 = vmul.f32 %v2340, %v2361
      %v2381 = vmul.f32 %v2341, %v2361
      %v2382 = vmul.f32 %v2342, %v2361
      %v2383 = vmul.f32 %v2343, %v2361
      %v2384 = vmul.f32 %v2344, %v2361
      %v2385 = vmul.f32 %v2345, %v2361
      %v2386 = vmul.f32 %v2346, %v2361
      %v2387 = vmul.f32 %v2347, %v2361
      %v2388 = vmul.f32 %v2348, %v2361
      %v2389 = vmul.f32 %v2349, %v2361
      %v2390 = vmul.f32 %v2350, %v2361
      %v2391 = vmul.f32 %v2351, %v2361
      %v2392 = vmul.f32 %v2352, %v2361
      %v2393 = vmul.f32 %v2353, %v2361
      %v2394 = vmul.f32 %v2354, %v2361
      %v2395 = vadd.f32 %v2291, %v2363
      %v2396 = vadd.f32 %v2292, %v2364
      %v2397 = vadd.f32 %v2293, %v2365
      %v2398 = vadd.f32 %v2294, %v2366
      %v2399 = vadd.f32 %v2295, %v2367
      %v2400 = vadd.f32 %v2296, %v2368
      %v2401 = vadd.f32 %v2297, %v2369
      %v2402 = vadd.f32 %v2298, %v2370
      %v2403 = vadd.f32 %v2299, %v2371
      %v2404 = vadd.f32 %v2300, %v2372
      %v2405 = vadd.f32 %v2301, %v2373
      %v2406 = vadd.f32 %v2302, %v2374
      %v2407 = vadd.f32 %v2303, %v2375
      %v2408 = vadd.f32 %v2304, %v2376
      %v2409 = vadd.f32 %v2305, %v2377
      %v2410 = vadd.f32 %v2306, %v2378
      %v2411 = vadd.f32 %v2307, %v2379
      %v2412 = vadd.f32 %v2308, %v2380
      %v2413 = vadd.f32 %v2309, %v2381
      %v2414 = vadd.f32 %v2310, %v2382
      %v2415 = vadd.f32 %v2311, %v2383
      %v2416 = vadd.f32 %v2312, %v2384
      %v2417 = vadd.f32 %v2313, %v2385
      %v2418 = vadd.f32 %v2314, %v2386
      %v2419 = vadd.f32 %v2315, %v2387
      %v2420 = vadd.f32 %v2316, %v2388
      %v2421 = vadd.f32 %v2317, %v2389
      %v2422 = vadd.f32 %v2318, %v2390
      %v2423 = vadd.f32 %v2319, %v2391
      %v2424 = vadd.f32 %v2320, %v2392
      %v2425 = vadd.f32 %v2321, %v2393
      %v2426 = vadd.f32 %v2322, %v2394
      %v2427 = vld [vmem:[%s2218 + $0x2] sm:$0xff]
      %v2428 = vld [vmem:[%s2218 + $0xa] sm:$0xff]
      %v2429 = vld [vmem:[%s2218 + $0x1a] sm:$0xff]
      %v2430 = vld [vmem:[%s2218 + $0x22] sm:$0xff]
      %v2431 = vld [vmem:[%s2218 + $0x32] sm:$0xff]
      %v2432 = vld [vmem:[%s2218 + $0x3a] sm:$0xff]
      %v2433 = vld [vmem:[%s2218 + $0x4a] sm:$0xff]
      %v2434 = vld [vmem:[%s2218 + $0x52] sm:$0xff]
      %v2435 = vld [vmem:[%s2218 + $0x62] sm:$0xff]
      %v2436 = vld [vmem:[%s2218 + $0x6a] sm:$0xff]
      %v2437 = vld [vmem:[%s2218 + $0x7a] sm:$0xff]
      %v2438 = vld [vmem:[%s2218 + $0x82] sm:$0xff]
      %v2439 = vld [vmem:[%s2218 + $0x92] sm:$0xff]
      %v2440 = vld [vmem:[%s2218 + $0x9a] sm:$0xff]
      %v2441 = vld [vmem:[%s2218 + $0xaa] sm:$0xff]
      %v2442 = vld [vmem:[%s2218 + $0xb2] sm:$0xff]
      %v2443 = vld [vmem:[%s2218 + $0xc2] sm:$0xff]
      %v2444 = vld [vmem:[%s2218 + $0xca] sm:$0xff]
      %v2445 = vld [vmem:[%s2218 + $0xda] sm:$0xff]
      %v2446 = vld [vmem:[%s2218 + $0xe2] sm:$0xff]
      %v2447 = vld [vmem:[%s2218 + $0xf2] sm:$0xff]
      %v2448 = vld [vmem:[%s2218 + $0xfa] sm:$0xff]
      %v2449 = vld [vmem:[%s2218 + $0x10a] sm:$0xff]
      %v2450 = vld [vmem:[%s2218 + $0x112] sm:$0xff]
      %v2451 = vld [vmem:[%s2218 + $0x122] sm:$0xff]
      %v2452 = vld [vmem:[%s2218 + $0x12a] sm:$0xff]
      %v2453 = vld [vmem:[%s2218 + $0x13a] sm:$0xff]
      %v2454 = vld [vmem:[%s2218 + $0x142] sm:$0xff]
      %v2455 = vld [vmem:[%s2218 + $0x152] sm:$0xff]
      %v2456 = vld [vmem:[%s2218 + $0x15a] sm:$0xff]
      %v2457 = vld [vmem:[%s2218 + $0x16a] sm:$0xff]
      %v2458 = vld [vmem:[%s2218 + $0x172] sm:$0xff]
      %s2459 = scalar_lea.vmem %s5, 8
      %v2460 = vld [vmem:[%s2459] sm:$0x1]
      %v2462 = vlaneseq
      %v2463 = vshrl.u32 %v2462, 7
      %v2464 = vsub.s32 0, %v2463
      %v2465 = vrot.slane %v2460, %v2464
      %v2467 = vmul.f32 %v2427, %v2465
      %v2468 = vmul.f32 %v2428, %v2465
      %v2469 = vmul.f32 %v2429, %v2465
      %v2470 = vmul.f32 %v2430, %v2465
      %v2471 = vmul.f32 %v2431, %v2465
      %v2472 = vmul.f32 %v2432, %v2465
      %v2473 = vmul.f32 %v2433, %v2465
      %v2474 = vmul.f32 %v2434, %v2465
      %v2475 = vmul.f32 %v2435, %v2465
      %v2476 = vmul.f32 %v2436, %v2465
      %v2477 = vmul.f32 %v2437, %v2465
      %v2478 = vmul.f32 %v2438, %v2465
      %v2479 = vmul.f32 %v2439, %v2465
      %v2480 = vmul.f32 %v2440, %v2465
      %v2481 = vmul.f32 %v2441, %v2465
      %v2482 = vmul.f32 %v2442, %v2465
      %v2483 = vmul.f32 %v2443, %v2465
      %v2484 = vmul.f32 %v2444, %v2465
      %v2485 = vmul.f32 %v2445, %v2465
      %v2486 = vmul.f32 %v2446, %v2465
      %v2487 = vmul.f32 %v2447, %v2465
      %v2488 = vmul.f32 %v2448, %v2465
      %v2489 = vmul.f32 %v2449, %v2465
      %v2490 = vmul.f32 %v2450, %v2465
      %v2491 = vmul.f32 %v2451, %v2465
      %v2492 = vmul.f32 %v2452, %v2465
      %v2493 = vmul.f32 %v2453, %v2465
      %v2494 = vmul.f32 %v2454, %v2465
      %v2495 = vmul.f32 %v2455, %v2465
      %v2496 = vmul.f32 %v2456, %v2465
      %v2497 = vmul.f32 %v2457, %v2465
      %v2498 = vmul.f32 %v2458, %v2465
      %v2499 = vadd.f32 %v2395, %v2467
      %v2500 = vadd.f32 %v2396, %v2468
      %v2501 = vadd.f32 %v2397, %v2469
      %v2502 = vadd.f32 %v2398, %v2470
      %v2503 = vadd.f32 %v2399, %v2471
      %v2504 = vadd.f32 %v2400, %v2472
      %v2505 = vadd.f32 %v2401, %v2473
      %v2506 = vadd.f32 %v2402, %v2474
      %v2507 = vadd.f32 %v2403, %v2475
      %v2508 = vadd.f32 %v2404, %v2476
      %v2509 = vadd.f32 %v2405, %v2477
      %v2510 = vadd.f32 %v2406, %v2478
      %v2511 = vadd.f32 %v2407, %v2479
      %v2512 = vadd.f32 %v2408, %v2480
      %v2513 = vadd.f32 %v2409, %v2481
      %v2514 = vadd.f32 %v2410, %v2482
      %v2515 = vadd.f32 %v2411, %v2483
      %v2516 = vadd.f32 %v2412, %v2484
      %v2517 = vadd.f32 %v2413, %v2485
      %v2518 = vadd.f32 %v2414, %v2486
      %v2519 = vadd.f32 %v2415, %v2487
      %v2520 = vadd.f32 %v2416, %v2488
      %v2521 = vadd.f32 %v2417, %v2489
      %v2522 = vadd.f32 %v2418, %v2490
      %v2523 = vadd.f32 %v2419, %v2491
      %v2524 = vadd.f32 %v2420, %v2492
      %v2525 = vadd.f32 %v2421, %v2493
      %v2526 = vadd.f32 %v2422, %v2494
      %v2527 = vadd.f32 %v2423, %v2495
      %v2528 = vadd.f32 %v2424, %v2496
      %v2529 = vadd.f32 %v2425, %v2497
      %v2530 = vadd.f32 %v2426, %v2498
      %v2531 = vld [vmem:[%s6] sm:$0x1]
      %v2533 = vlaneseq
      %v2534 = vshrl.u32 %v2533, 7
      %v2535 = vsub.s32 0, %v2534
      %v2536 = vrot.slane %v2531, %v2535
      %v2538 = vmul.f32 %v2499, %v2536
      %v2539 = vmul.f32 %v2500, %v2536
      %v2540 = vmul.f32 %v2501, %v2536
      %v2541 = vmul.f32 %v2502, %v2536
      %v2542 = vmul.f32 %v2503, %v2536
      %v2543 = vmul.f32 %v2504, %v2536
      %v2544 = vmul.f32 %v2505, %v2536
      %v2545 = vmul.f32 %v2506, %v2536
      %v2546 = vmul.f32 %v2507, %v2536
      %v2547 = vmul.f32 %v2508, %v2536
      %v2548 = vmul.f32 %v2509, %v2536
      %v2549 = vmul.f32 %v2510, %v2536
      %v2550 = vmul.f32 %v2511, %v2536
      %v2551 = vmul.f32 %v2512, %v2536
      %v2552 = vmul.f32 %v2513, %v2536
      %v2553 = vmul.f32 %v2514, %v2536
      %v2554 = vmul.f32 %v2515, %v2536
      %v2555 = vmul.f32 %v2516, %v2536
      %v2556 = vmul.f32 %v2517, %v2536
      %v2557 = vmul.f32 %v2518, %v2536
      %v2558 = vmul.f32 %v2519, %v2536
      %v2559 = vmul.f32 %v2520, %v2536
      %v2560 = vmul.f32 %v2521, %v2536
      %v2561 = vmul.f32 %v2522, %v2536
      %v2562 = vmul.f32 %v2523, %v2536
      %v2563 = vmul.f32 %v2524, %v2536
      %v2564 = vmul.f32 %v2525, %v2536
      %v2565 = vmul.f32 %v2526, %v2536
      %v2566 = vmul.f32 %v2527, %v2536
      %v2567 = vmul.f32 %v2528, %v2536
      %v2568 = vmul.f32 %v2529, %v2536
      %v2569 = vmul.f32 %v2530, %v2536
      %v2570 = vld [vmem:[%s7] sm:$0x1]
      %v2572 = vlaneseq
      %v2573 = vshrl.u32 %v2572, 7
      %v2574 = vsub.s32 0, %v2573
      %v2575 = vrot.slane %v2570, %v2574
      %v2577 = vadd.f32 %v2538, %v2575
      %v2578 = vadd.f32 %v2539, %v2575
      %v2579 = vadd.f32 %v2540, %v2575
      %v2580 = vadd.f32 %v2541, %v2575
      %v2581 = vadd.f32 %v2542, %v2575
      %v2582 = vadd.f32 %v2543, %v2575
      %v2583 = vadd.f32 %v2544, %v2575
      %v2584 = vadd.f32 %v2545, %v2575
      %v2585 = vadd.f32 %v2546, %v2575
      %v2586 = vadd.f32 %v2547, %v2575
      %v2587 = vadd.f32 %v2548, %v2575
      %v2588 = vadd.f32 %v2549, %v2575
      %v2589 = vadd.f32 %v2550, %v2575
      %v2590 = vadd.f32 %v2551, %v2575
      %v2591 = vadd.f32 %v2552, %v2575
      %v2592 = vadd.f32 %v2553, %v2575
      %v2593 = vadd.f32 %v2554, %v2575
      %v2594 = vadd.f32 %v2555, %v2575
      %v2595 = vadd.f32 %v2556, %v2575
      %v2596 = vadd.f32 %v2557, %v2575
      %v2597 = vadd.f32 %v2558, %v2575
      %v2598 = vadd.f32 %v2559, %v2575
      %v2599 = vadd.f32 %v2560, %v2575
      %v2600 = vadd.f32 %v2561, %v2575
      %v2601 = vadd.f32 %v2562, %v2575
      %v2602 = vadd.f32 %v2563, %v2575
      %v2603 = vadd.f32 %v2564, %v2575
      %v2604 = vadd.f32 %v2565, %v2575
      %v2605 = vadd.f32 %v2566, %v2575
      %v2606 = vadd.f32 %v2567, %v2575
      %v2607 = vadd.f32 %v2568, %v2575
      %v2608 = vadd.f32 %v2569, %v2575
      %v2609 = vmax.f32 %v2577, 0.0
      %v2610 = vmax.f32 %v2578, 0.0
      %v2611 = vmax.f32 %v2579, 0.0
      %v2612 = vmax.f32 %v2580, 0.0
      %v2613 = vmax.f32 %v2581, 0.0
      %v2614 = vmax.f32 %v2582, 0.0
      %v2615 = vmax.f32 %v2583, 0.0
      %v2616 = vmax.f32 %v2584, 0.0
      %v2617 = vmax.f32 %v2585, 0.0
      %v2618 = vmax.f32 %v2586, 0.0
      %v2619 = vmax.f32 %v2587, 0.0
      %v2620 = vmax.f32 %v2588, 0.0
      %v2621 = vmax.f32 %v2589, 0.0
      %v2622 = vmax.f32 %v2590, 0.0
      %v2623 = vmax.f32 %v2591, 0.0
      %v2624 = vmax.f32 %v2592, 0.0
      %v2625 = vmax.f32 %v2593, 0.0
      %v2626 = vmax.f32 %v2594, 0.0
      %v2627 = vmax.f32 %v2595, 0.0
      %v2628 = vmax.f32 %v2596, 0.0
      %v2629 = vmax.f32 %v2597, 0.0
      %v2630 = vmax.f32 %v2598, 0.0
      %v2631 = vmax.f32 %v2599, 0.0
      %v2632 = vmax.f32 %v2600, 0.0
      %v2633 = vmax.f32 %v2601, 0.0
      %v2634 = vmax.f32 %v2602, 0.0
      %v2635 = vmax.f32 %v2603, 0.0
      %v2636 = vmax.f32 %v2604, 0.0
      %v2637 = vmax.f32 %v2605, 0.0
      %v2638 = vmax.f32 %v2606, 0.0
      %v2639 = vmax.f32 %v2607, 0.0
      %v2640 = vmax.f32 %v2608, 0.0
      %v2641 = vsel %vm1571, %v2609, 0.0
      %v2642 = vsel %vm1571, %v2610, 0.0
      %v2643 = vadd.f32 %v2641, %v2642
      %v2644 = vsel %vm1571, %v2611, 0.0
      %v2645 = vadd.f32 %v2643, %v2644
      %v2646 = vsel %vm1571, %v2612, 0.0
      %v2647 = vadd.f32 %v2645, %v2646
      %v2648 = vsel %vm1571, %v2613, 0.0
      %v2649 = vadd.f32 %v2647, %v2648
      %v2650 = vsel %vm1571, %v2614, 0.0
      %v2651 = vadd.f32 %v2649, %v2650
      %v2652 = vsel %vm1571, %v2615, 0.0
      %v2653 = vadd.f32 %v2651, %v2652
      %v2654 = vsel %vm1571, %v2616, 0.0
      %v2655 = vadd.f32 %v2653, %v2654
      %v2656 = vsel %vm1571, %v2617, 0.0
      %v2657 = vadd.f32 %v2655, %v2656
      %v2658 = vsel %vm1571, %v2618, 0.0
      %v2659 = vadd.f32 %v2657, %v2658
      %v2660 = vsel %vm1571, %v2619, 0.0
      %v2661 = vadd.f32 %v2659, %v2660
      %v2662 = vsel %vm1571, %v2620, 0.0
      %v2663 = vadd.f32 %v2661, %v2662
      %v2664 = vsel %vm1571, %v2621, 0.0
      %v2665 = vadd.f32 %v2663, %v2664
      %v2666 = vsel %vm1571, %v2622, 0.0
      %v2667 = vadd.f32 %v2665, %v2666
      %v2668 = vsel %vm1571, %v2623, 0.0
      %v2669 = vadd.f32 %v2667, %v2668
      %v2670 = vsel %vm1571, %v2624, 0.0
      %v2671 = vadd.f32 %v2669, %v2670
      %v2672 = vsel %vm1571, %v2625, 0.0
      %v2673 = vadd.f32 %v2671, %v2672
      %v2674 = vsel %vm1571, %v2626, 0.0
      %v2675 = vadd.f32 %v2673, %v2674
      %v2676 = vsel %vm1571, %v2627, 0.0
      %v2677 = vadd.f32 %v2675, %v2676
      %v2678 = vsel %vm1571, %v2628, 0.0
      %v2679 = vadd.f32 %v2677, %v2678
      %v2680 = vsel %vm1571, %v2629, 0.0
      %v2681 = vadd.f32 %v2679, %v2680
      %v2682 = vsel %vm1571, %v2630, 0.0
      %v2683 = vadd.f32 %v2681, %v2682
      %v2684 = vsel %vm1571, %v2631, 0.0
      %v2685 = vadd.f32 %v2683, %v2684
      %v2686 = vsel %vm1571, %v2632, 0.0
      %v2687 = vadd.f32 %v2685, %v2686
      %v2688 = vsel %vm1571, %v2633, 0.0
      %v2689 = vadd.f32 %v2687, %v2688
      %v2690 = vsel %vm1571, %v2634, 0.0
      %v2691 = vadd.f32 %v2689, %v2690
      %v2692 = vsel %vm1571, %v2635, 0.0
      %v2693 = vadd.f32 %v2691, %v2692
      %v2694 = vsel %vm1571, %v2636, 0.0
      %v2695 = vadd.f32 %v2693, %v2694
      %v2696 = vsel %vm1571, %v2637, 0.0
      %v2697 = vadd.f32 %v2695, %v2696
      %v2698 = vsel %vm1571, %v2638, 0.0
      %v2699 = vadd.f32 %v2697, %v2698
      %v2700 = vsel %vm1571, %v2639, 0.0
      %v2701 = vadd.f32 %v2699, %v2700
      %v2702 = vsel %vm1571, %v2640, 0.0
      %v2703 = vadd.f32 %v2701, %v2702
      %v2704 = vrot.slane %v2703, 4
      %v2705 = vadd.f32 %v2703, %v2704
      %v2706 = vrot.slane %v2705, 2
      %v2707 = vadd.f32 %v2705, %v2706
      %v2708 = vrot.slane %v2707, 1
      %v2709 = vadd.f32 %v2707, %v2708
      %v2710 = vrcp.pop 256.0
      %v2711 = vmul.f32 %v2709, %v2710
      %v2712 = vld [vmem:[%s8] sm:$0xff]
      %v2713 = vld [vmem:[%s8 + $0x8] sm:$0xff]
      %v2714 = vld [vmem:[%s8 + $0x10] sm:$0xff]
      %v2715 = vld [vmem:[%s8 + $0x18] sm:$0xff]
      %v2716 = vld [vmem:[%s8 + $0x20] sm:$0xff]
      %v2717 = vld [vmem:[%s8 + $0x28] sm:$0xff]
      %v2718 = vld [vmem:[%s8 + $0x30] sm:$0xff]
      %v2719 = vld [vmem:[%s8 + $0x38] sm:$0xff]
      %v2720 = vld [vmem:[%s9] sm:$0x1]
      %v2722 = vsel %vm1571, %v2711, 0
      %2724 = vmatprep.subr.mxu0 0.0
      %2725 = vmatpush1.msra.mxu0 0.0
      %2726 = vmatprep.subr.mxu0 0.0
      %2727 = vmatpush1.msra.mxu0 0.0
      %2728 = vmatprep.subr.mxu0 0.0
      %2729 = vmatpush1.msra.mxu0 0.0
      %2730 = vmatprep.subr.mxu0 0.0
      %2731 = vmatpush1.msra.mxu0 0.0
      %2732 = vmatprep.subr.mxu0 0.0
      %2733 = vmatpush1.msra.mxu0 0.0
      %2734 = vmatprep.subr.mxu0 0.0
      %2735 = vmatpush1.msra.mxu0 0.0
      %2736 = vmatprep.subr.mxu0 0.0
      %2737 = vmatpush1.msra.mxu0 0.0
      %2738 = vmatprep.subr.mxu0 0.0
      %2739 = vmatpush1.msra.mxu0 0.0
      %2740 = vmatprep.subr.mxu0 0.0
      %2741 = vmatpush1.msra.mxu0 %v2719
      %2742 = vmatprep.subr.mxu0 0.0
      %2743 = vmatpush1.msra.mxu0 %v2718
      %2744 = vmatprep.subr.mxu0 0.0
      %2745 = vmatpush1.msra.mxu0 %v2717
      %2746 = vmatprep.subr.mxu0 0.0
      %2747 = vmatpush1.msra.mxu0 %v2716
      %2748 = vmatprep.subr.mxu0 0.0
      %2749 = vmatpush1.msra.mxu0 %v2715
      %2750 = vmatprep.subr.mxu0 0.0
      %2751 = vmatpush1.msra.mxu0 %v2714
      %2752 = vmatprep.subr.mxu0 0.0
      %2753 = vmatpush1.msra.mxu0 %v2713
      %2754 = vmatprep.subr.mxu0 0.0
      %2755 = vmatpush1.msra.mxu0 %v2712
      %2756 = vmatprep.subr.mxu0 0.0
      %2757 = vmatpush2.msra.mxu0 0.0
      %2758 = vmatprep.subr.mxu0 0.0
      %2759 = vmatpush2.msra.mxu0 0.0
      %2760 = vmatprep.subr.mxu0 0.0
      %2761 = vmatpush2.msra.mxu0 0.0
      %2762 = vmatprep.subr.mxu0 0.0
      %2763 = vmatpush2.msra.mxu0 0.0
      %2764 = vmatprep.subr.mxu0 0.0
      %2765 = vmatpush2.msra.mxu0 0.0
      %2766 = vmatprep.subr.mxu0 0.0
      %2767 = vmatpush2.msra.mxu0 0.0
      %2768 = vmatprep.subr.mxu0 0.0
      %2769 = vmatpush2.msra.mxu0 0.0
      %2770 = vmatprep.subr.mxu0 0.0
      %2771 = vmatpush2.msra.mxu0 0.0
      %2772 = vmatprep.subr.mxu0 0.0
      %2773 = vmatpush2.msra.mxu0 0.0
      %2774 = vmatprep.subr.mxu0 0.0
      %2775 = vmatpush2.msra.mxu0 0.0
      %2776 = vmatprep.subr.mxu0 0.0
      %2777 = vmatpush2.msra.mxu0 0.0
      %2778 = vmatprep.subr.mxu0 0.0
      %2779 = vmatpush2.msra.mxu0 0.0
      %2780 = vmatprep.subr.mxu0 0.0
      %2781 = vmatpush2.msra.mxu0 0.0
      %2782 = vmatprep.subr.mxu0 0.0
      %2783 = vmatpush2.msra.mxu0 0.0
      %2784 = vmatprep.subr.mxu0 0.0
      %2785 = vmatpush2.msra.mxu0 0.0
      %2786 = vmatprep.subr.mxu0 0.0
      %2787 = vmatpush2.msra.mxu0 0.0
      %2788 = vmatprep.mubr.f32.mxu0 0.0
      %2789 = vmatmul.mubr.f32.gmra.mxu0 %v2722
      %v2790 = vpop.f32.mrf.mxu0
      %v2791 = vadd.f32 %v2720, %v2790
      %v2792 = vpop.f32.mrf.mxu0
      %2793 = vdwg.mxu0
      %v2794 = vmax.f32 %v2791, 0.0
      %v2795 = vld [vmem:[%s10] sm:$0xff]
      %v2796 = vld [vmem:[%s11] sm:$0x1]
      %vm2797 = vcmask 64512
      %v2799 = vsel %vm2797, %v2794, 0
      %2801 = vmatprep.subr.mxu0 0.0
      %2802 = vmatpush1.msra.mxu0 0.0
      %2803 = vmatprep.subr.mxu0 0.0
      %2804 = vmatpush1.msra.mxu0 0.0
      %2805 = vmatprep.subr.mxu0 0.0
      %2806 = vmatpush1.msra.mxu0 0.0
      %2807 = vmatprep.subr.mxu0 0.0
      %2808 = vmatpush1.msra.mxu0 0.0
      %2809 = vmatprep.subr.mxu0 0.0
      %2810 = vmatpush1.msra.mxu0 0.0
      %2811 = vmatprep.subr.mxu0 0.0
      %2812 = vmatpush1.msra.mxu0 0.0
      %2813 = vmatprep.subr.mxu0 0.0
      %2814 = vmatpush1.msra.mxu0 0.0
      %2815 = vmatprep.subr.mxu0 0.0
      %2816 = vmatpush1.msra.mxu0 0.0
      %2817 = vmatprep.subr.mxu0 0.0
      %2818 = vmatpush1.msra.mxu0 0.0
      %2819 = vmatprep.subr.mxu0 0.0
      %2820 = vmatpush1.msra.mxu0 0.0
      %2821 = vmatprep.subr.mxu0 0.0
      %2822 = vmatpush1.msra.mxu0 0.0
      %2823 = vmatprep.subr.mxu0 0.0
      %2824 = vmatpush1.msra.mxu0 0.0
      %2825 = vmatprep.subr.mxu0 0.0
      %2826 = vmatpush1.msra.mxu0 0.0
      %2827 = vmatprep.subr.mxu0 0.0
      %2828 = vmatpush1.msra.mxu0 0.0
      %2829 = vmatprep.subr.mxu0 0.0
      %2830 = vmatpush1.msra.mxu0 0.0
      %2831 = vmatprep.subr.mxu0 0.0
      %2832 = vmatpush1.msra.mxu0 %v2795
      %2833 = vmatprep.subr.mxu0 0.0
      %2834 = vmatpush2.msra.mxu0 0.0
      %2835 = vmatprep.subr.mxu0 0.0
      %2836 = vmatpush2.msra.mxu0 0.0
      %2837 = vmatprep.subr.mxu0 0.0
      %2838 = vmatpush2.msra.mxu0 0.0
      %2839 = vmatprep.subr.mxu0 0.0
      %2840 = vmatpush2.msra.mxu0 0.0
      %2841 = vmatprep.subr.mxu0 0.0
      %2842 = vmatpush2.msra.mxu0 0.0
      %2843 = vmatprep.subr.mxu0 0.0
      %2844 = vmatpush2.msra.mxu0 0.0
      %2845 = vmatprep.subr.mxu0 0.0
      %2846 = vmatpush2.msra.mxu0 0.0
      %2847 = vmatprep.subr.mxu0 0.0
      %2848 = vmatpush2.msra.mxu0 0.0
      %2849 = vmatprep.subr.mxu0 0.0
      %2850 = vmatpush2.msra.mxu0 0.0
      %2851 = vmatprep.subr.mxu0 0.0
      %2852 = vmatpush2.msra.mxu0 0.0
      %2853 = vmatprep.subr.mxu0 0.0
      %2854 = vmatpush2.msra.mxu0 0.0
      %2855 = vmatprep.subr.mxu0 0.0
      %2856 = vmatpush2.msra.mxu0 0.0
      %2857 = vmatprep.subr.mxu0 0.0
      %2858 = vmatpush2.msra.mxu0 0.0
      %2859 = vmatprep.subr.mxu0 0.0
      %2860 = vmatpush2.msra.mxu0 0.0
      %2861 = vmatprep.subr.mxu0 0.0
      %2862 = vmatpush2.msra.mxu0 0.0
      %2863 = vmatprep.subr.mxu0 0.0
      %2864 = vmatpush2.msra.mxu0 0.0
      %2865 = vmatprep.mubr.f32.mxu0 0.0
      %2866 = vmatmul.mubr.f32.gmra.mxu0 %v2799
      %v2867 = vpop.f32.mrf.mxu0
      %v2868 = vadd.f32 %v2796, %v2867
      %v2869 = vpop.f32.mrf.mxu0
      %2870 = vdwg.mxu0
      %v2871 = vsub.f32 0.0, %v2868
      %v2872 = vmul.f32 %v2871, 1.442695
      %v2873 = vpow.pop %v2872
      %v2874 = vadd.f32 %v2873, 1.0
      %v2875 = vrcp.pop %v2874
      %v2876 = vlaneseq
      %v2877 = vshrl.u32 %v2876, 7
      %v2878 = vsub.s32 0, %v2877
      %v2879 = vrot.slane %v2875, %v2878
      %v2880 = vmul.f32 %v2609, %v2879
      %v2881 = vmul.f32 %v2610, %v2879
      %v2882 = vmul.f32 %v2611, %v2879
      %v2883 = vmul.f32 %v2612, %v2879
      %v2884 = vmul.f32 %v2613, %v2879
      %v2885 = vmul.f32 %v2614, %v2879
      %v2886 = vmul.f32 %v2615, %v2879
      %v2887 = vmul.f32 %v2616, %v2879
      %v2888 = vmul.f32 %v2617, %v2879
      %v2889 = vmul.f32 %v2618, %v2879
      %v2890 = vmul.f32 %v2619, %v2879
      %v2891 = vmul.f32 %v2620, %v2879
      %v2892 = vmul.f32 %v2621, %v2879
      %v2893 = vmul.f32 %v2622, %v2879
      %v2894 = vmul.f32 %v2623, %v2879
      %v2895 = vmul.f32 %v2624, %v2879
      %v2896 = vmul.f32 %v2625, %v2879
      %v2897 = vmul.f32 %v2626, %v2879
      %v2898 = vmul.f32 %v2627, %v2879
      %v2899 = vmul.f32 %v2628, %v2879
      %v2900 = vmul.f32 %v2629, %v2879
      %v2901 = vmul.f32 %v2630, %v2879
      %v2902 = vmul.f32 %v2631, %v2879
      %v2903 = vmul.f32 %v2632, %v2879
      %v2904 = vmul.f32 %v2633, %v2879
      %v2905 = vmul.f32 %v2634, %v2879
      %v2906 = vmul.f32 %v2635, %v2879
      %v2907 = vmul.f32 %v2636, %v2879
      %v2908 = vmul.f32 %v2637, %v2879
      %v2909 = vmul.f32 %v2638, %v2879
      %v2910 = vmul.f32 %v2639, %v2879
      %v2911 = vmul.f32 %v2640, %v2879
      %v2912 = vpack.c.bf16 %v2881, %v2880
      %v2913 = vpack.c.bf16 %v2883, %v2882
      %v2914 = vpack.c.bf16 %v2885, %v2884
      %v2915 = vpack.c.bf16 %v2887, %v2886
      %v2916 = vpack.c.bf16 %v2889, %v2888
      %v2917 = vpack.c.bf16 %v2891, %v2890
      %v2918 = vpack.c.bf16 %v2893, %v2892
      %v2919 = vpack.c.bf16 %v2895, %v2894
      %v2920 = vpack.c.bf16 %v2897, %v2896
      %v2921 = vpack.c.bf16 %v2899, %v2898
      %v2922 = vpack.c.bf16 %v2901, %v2900
      %v2923 = vpack.c.bf16 %v2903, %v2902
      %v2924 = vpack.c.bf16 %v2905, %v2904
      %v2925 = vpack.c.bf16 %v2907, %v2906
      %v2926 = vpack.c.bf16 %v2909, %v2908
      %v2927 = vpack.c.bf16 %v2911, %v2910
      %v2928 = vld [vmem:[%s12] sm:$0xf]
      %v2929 = vld [vmem:[%s12 + $0x4] sm:$0xf]
      %v2930 = vld [vmem:[%s12 + $0x8] sm:$0xf]
      %v2931 = vld [vmem:[%s12 + $0xc] sm:$0xf]
      %v2932 = vld [vmem:[%s12 + $0x10] sm:$0xf]
      %v2933 = vld [vmem:[%s12 + $0x14] sm:$0xf]
      %v2934 = vld [vmem:[%s12 + $0x18] sm:$0xf]
      %v2935 = vld [vmem:[%s12 + $0x1c] sm:$0xf]
      %v2944 = vunpack.c.l.b16 %v2928
      %v2945 = vunpack.c.l.b16 %v2929
      %v2946 = vunpack.c.l.b16 %v2930
      %v2947 = vunpack.c.l.b16 %v2931
      %v2948 = vunpack.c.l.b16 %v2932
      %v2949 = vunpack.c.l.b16 %v2933
      %v2950 = vunpack.c.l.b16 %v2934
      %v2951 = vunpack.c.l.b16 %v2935
      %v2952 = vpack.c.b16 %v2945, %v2944
      %v2953 = vpack.c.b16 %v2947, %v2946
      %v2954 = vpack.c.b16 %v2949, %v2948
      %v2955 = vpack.c.b16 %v2951, %v2950
      %v2961 = vsel %vm1571, %v2912, 0
      %v2964 = vsel %vm1571, %v2913, 0
      %v2967 = vsel %vm1571, %v2914, 0
      %v2970 = vsel %vm1571, %v2915, 0
      %v2973 = vsel %vm1571, %v2916, 0
      %v2976 = vsel %vm1571, %v2917, 0
      %v2979 = vsel %vm1571, %v2918, 0
      %v2982 = vsel %vm1571, %v2919, 0
      %v2985 = vsel %vm1571, %v2920, 0
      %v2988 = vsel %vm1571, %v2921, 0
      %v2991 = vsel %vm1571, %v2922, 0
      %v2994 = vsel %vm1571, %v2923, 0
      %v2997 = vsel %vm1571, %v2924, 0
      %v3000 = vsel %vm1571, %v2925, 0
      %v3003 = vsel %vm1571, %v2926, 0
      %v3006 = vsel %vm1571, %v2927, 0
      %3008 = vmatprep.subr.bf16.mxu0 0
      %3009 = vmatpush1.bf16.msra.mxu0 0
      %3010 = vmatprep.subr.bf16.mxu0 0
      %3011 = vmatpush1.bf16.msra.mxu0 0
      %3012 = vmatprep.subr.bf16.mxu0 0
      %3013 = vmatpush1.bf16.msra.mxu0 0
      %3014 = vmatprep.subr.bf16.mxu0 0
      %3015 = vmatpush1.bf16.msra.mxu0 0
      %3016 = vmatprep.subr.bf16.mxu0 0
      %3017 = vmatpush1.bf16.msra.mxu0 %v2955
      %3018 = vmatprep.subr.bf16.mxu0 0
      %3019 = vmatpush1.bf16.msra.mxu0 %v2954
      %3020 = vmatprep.subr.bf16.mxu0 0
      %3021 = vmatpush1.bf16.msra.mxu0 %v2953
      %3022 = vmatprep.subr.bf16.mxu0 0
      %3023 = vmatpush1.bf16.msra.mxu0 %v2952
      %3024 = vmatprep.subr.bf16.mxu0 0
      %3025 = vmatpush2.bf16.msra.mxu0 0
      %3026 = vmatprep.subr.bf16.mxu0 0
      %3027 = vmatpush2.bf16.msra.mxu0 0
      %3028 = vmatprep.subr.bf16.mxu0 0
      %3029 = vmatpush2.bf16.msra.mxu0 0
      %3030 = vmatprep.subr.bf16.mxu0 0
      %3031 = vmatpush2.bf16.msra.mxu0 0
      %3032 = vmatprep.subr.bf16.mxu0 0
      %3033 = vmatpush2.bf16.msra.mxu0 0
      %3034 = vmatprep.subr.bf16.mxu0 0
      %3035 = vmatpush2.bf16.msra.mxu0 0
      %3036 = vmatprep.subr.bf16.mxu0 0
      %3037 = vmatpush2.bf16.msra.mxu0 0
      %3038 = vmatprep.subr.bf16.mxu0 0
      %3039 = vmatpush2.bf16.msra.mxu0 0
      %3040 = vmatprep.mubr.bf16.mxu0 0
      %3041 = vmatmul.mubr.bf16.gmra.mxu0 %v2961
      %v3042 = vpop.f32.mrf.mxu0
      %v3043 = vadd.f32 0.0, %v3042
      %v3044 = vpop.f32.mrf.mxu0
      %v3045 = vpop.f32.mrf.mxu0
      %v3046 = vadd.f32 0.0, %v3045
      %v3047 = vpop.f32.mrf.mxu0
      %3048 = vmatprep.mubr.bf16.mxu0 0
      %3049 = vmatmul.mubr.bf16.gmra.mxu0 %v2964
      %v3050 = vpop.f32.mrf.mxu0
      %v3051 = vadd.f32 0.0, %v3050
      %v3052 = vpop.f32.mrf.mxu0
      %v3053 = vpop.f32.mrf.mxu0
      %v3054 = vadd.f32 0.0, %v3053
      %v3055 = vpop.f32.mrf.mxu0
      %3056 = vmatprep.mubr.bf16.mxu0 0
      %3057 = vmatmul.mubr.bf16.gmra.mxu0 %v2967
      %v3058 = vpop.f32.mrf.mxu0
      %v3059 = vadd.f32 0.0, %v3058
      %v3060 = vpop.f32.mrf.mxu0
      %v3061 = vpop.f32.mrf.mxu0
      %v3062 = vadd.f32 0.0, %v3061
      %v3063 = vpop.f32.mrf.mxu0
      %3064 = vmatprep.mubr.bf16.mxu0 0
      %3065 = vmatmul.mubr.bf16.gmra.mxu0 %v2970
      %v3066 = vpop.f32.mrf.mxu0
      %v3067 = vadd.f32 0.0, %v3066
      %v3068 = vpop.f32.mrf.mxu0
      %v3069 = vpop.f32.mrf.mxu0
      %v3070 = vadd.f32 0.0, %v3069
      %v3071 = vpop.f32.mrf.mxu0
      %3072 = vmatprep.mubr.bf16.mxu0 0
      %3073 = vmatmul.mubr.bf16.gmra.mxu0 %v2973
      %v3074 = vpop.f32.mrf.mxu0
      %v3075 = vadd.f32 0.0, %v3074
      %v3076 = vpop.f32.mrf.mxu0
      %v3077 = vpop.f32.mrf.mxu0
      %v3078 = vadd.f32 0.0, %v3077
      %v3079 = vpop.f32.mrf.mxu0
      %3080 = vmatprep.mubr.bf16.mxu0 0
      %3081 = vmatmul.mubr.bf16.gmra.mxu0 %v2976
      %v3082 = vpop.f32.mrf.mxu0
      %v3083 = vadd.f32 0.0, %v3082
      %v3084 = vpop.f32.mrf.mxu0
      %v3085 = vpop.f32.mrf.mxu0
      %v3086 = vadd.f32 0.0, %v3085
      %v3087 = vpop.f32.mrf.mxu0
      %3088 = vmatprep.mubr.bf16.mxu0 0
      %3089 = vmatmul.mubr.bf16.gmra.mxu0 %v2979
      %v3090 = vpop.f32.mrf.mxu0
      %v3091 = vadd.f32 0.0, %v3090
      %v3092 = vpop.f32.mrf.mxu0
      %v3093 = vpop.f32.mrf.mxu0
      %v3094 = vadd.f32 0.0, %v3093
      %v3095 = vpop.f32.mrf.mxu0
      %3096 = vmatprep.mubr.bf16.mxu0 0
      %3097 = vmatmul.mubr.bf16.gmra.mxu0 %v2982
      %v3098 = vpop.f32.mrf.mxu0
      %v3099 = vadd.f32 0.0, %v3098
      %v3100 = vpop.f32.mrf.mxu0
      %v3101 = vpop.f32.mrf.mxu0
      %v3102 = vadd.f32 0.0, %v3101
      %v3103 = vpop.f32.mrf.mxu0
      %3104 = vmatprep.mubr.bf16.mxu0 0
      %3105 = vmatmul.mubr.bf16.gmra.mxu0 %v2985
      %v3106 = vpop.f32.mrf.mxu0
      %v3107 = vadd.f32 0.0, %v3106
      %v3108 = vpop.f32.mrf.mxu0
      %v3109 = vpop.f32.mrf.mxu0
      %v3110 = vadd.f32 0.0, %v3109
      %v3111 = vpop.f32.mrf.mxu0
      %3112 = vmatprep.mubr.bf16.mxu0 0
      %3113 = vmatmul.mubr.bf16.gmra.mxu0 %v2988
      %v3114 = vpop.f32.mrf.mxu0
      %v3115 = vadd.f32 0.0, %v3114
      %v3116 = vpop.f32.mrf.mxu0
      %v3117 = vpop.f32.mrf.mxu0
      %v3118 = vadd.f32 0.0, %v3117
      %v3119 = vpop.f32.mrf.mxu0
      %3120 = vmatprep.mubr.bf16.mxu0 0
      %3121 = vmatmul.mubr.bf16.gmra.mxu0 %v2991
      %v3122 = vpop.f32.mrf.mxu0
      %v3123 = vadd.f32 0.0, %v3122
      %v3124 = vpop.f32.mrf.mxu0
      %v3125 = vpop.f32.mrf.mxu0
      %v3126 = vadd.f32 0.0, %v3125
      %v3127 = vpop.f32.mrf.mxu0
      %3128 = vmatprep.mubr.bf16.mxu0 0
      %3129 = vmatmul.mubr.bf16.gmra.mxu0 %v2994
      %v3130 = vpop.f32.mrf.mxu0
      %v3131 = vadd.f32 0.0, %v3130
      %v3132 = vpop.f32.mrf.mxu0
      %v3133 = vpop.f32.mrf.mxu0
      %v3134 = vadd.f32 0.0, %v3133
      %v3135 = vpop.f32.mrf.mxu0
      %3136 = vmatprep.mubr.bf16.mxu0 0
      %3137 = vmatmul.mubr.bf16.gmra.mxu0 %v2997
      %v3138 = vpop.f32.mrf.mxu0
      %v3139 = vadd.f32 0.0, %v3138
      %v3140 = vpop.f32.mrf.mxu0
      %v3141 = vpop.f32.mrf.mxu0
      %v3142 = vadd.f32 0.0, %v3141
      %v3143 = vpop.f32.mrf.mxu0
      %3144 = vmatprep.mubr.bf16.mxu0 0
      %3145 = vmatmul.mubr.bf16.gmra.mxu0 %v3000
      %v3146 = vpop.f32.mrf.mxu0
      %v3147 = vadd.f32 0.0, %v3146
      %v3148 = vpop.f32.mrf.mxu0
      %v3149 = vpop.f32.mrf.mxu0
      %v3150 = vadd.f32 0.0, %v3149
      %v3151 = vpop.f32.mrf.mxu0
      %3152 = vmatprep.mubr.bf16.mxu0 0
      %3153 = vmatmul.mubr.bf16.gmra.mxu0 %v3003
      %v3154 = vpop.f32.mrf.mxu0
      %v3155 = vadd.f32 0.0, %v3154
      %v3156 = vpop.f32.mrf.mxu0
      %v3157 = vpop.f32.mrf.mxu0
      %v3158 = vadd.f32 0.0, %v3157
      %v3159 = vpop.f32.mrf.mxu0
      %3160 = vmatprep.mubr.bf16.mxu0 0
      %3161 = vmatmul.mubr.bf16.gmra.mxu0 %v3006
      %v3162 = vpop.f32.mrf.mxu0
      %v3163 = vadd.f32 0.0, %v3162
      %v3164 = vpop.f32.mrf.mxu0
      %v3165 = vpop.f32.mrf.mxu0
      %v3166 = vadd.f32 0.0, %v3165
      %v3167 = vpop.f32.mrf.mxu0
      %3168 = vdwg.mxu0
      %v3169 = vld [vmem:[%s13] sm:$0x1]
      %v3171 = vlaneseq
      %v3172 = vshrl.u32 %v3171, 7
      %v3173 = vsub.s32 0, %v3172
      %v3174 = vrot.slane %v3169, %v3173
      %v3176 = vmul.f32 %v3043, %v3174
      %v3177 = vmul.f32 %v3046, %v3174
      %v3178 = vmul.f32 %v3051, %v3174
      %v3179 = vmul.f32 %v3054, %v3174
      %v3180 = vmul.f32 %v3059, %v3174
      %v3181 = vmul.f32 %v3062, %v3174
      %v3182 = vmul.f32 %v3067, %v3174
      %v3183 = vmul.f32 %v3070, %v3174
      %v3184 = vmul.f32 %v3075, %v3174
      %v3185 = vmul.f32 %v3078, %v3174
      %v3186 = vmul.f32 %v3083, %v3174
      %v3187 = vmul.f32 %v3086, %v3174
      %v3188 = vmul.f32 %v3091, %v3174
      %v3189 = vmul.f32 %v3094, %v3174
      %v3190 = vmul.f32 %v3099, %v3174
      %v3191 = vmul.f32 %v3102, %v3174
      %v3192 = vmul.f32 %v3107, %v3174
      %v3193 = vmul.f32 %v3110, %v3174
      %v3194 = vmul.f32 %v3115, %v3174
      %v3195 = vmul.f32 %v3118, %v3174
      %v3196 = vmul.f32 %v3123, %v3174
      %v3197 = vmul.f32 %v3126, %v3174
      %v3198 = vmul.f32 %v3131, %v3174
      %v3199 = vmul.f32 %v3134, %v3174
      %v3200 = vmul.f32 %v3139, %v3174
      %v3201 = vmul.f32 %v3142, %v3174
      %v3202 = vmul.f32 %v3147, %v3174
      %v3203 = vmul.f32 %v3150, %v3174
      %v3204 = vmul.f32 %v3155, %v3174
      %v3205 = vmul.f32 %v3158, %v3174
      %v3206 = vmul.f32 %v3163, %v3174
      %v3207 = vmul.f32 %v3166, %v3174
      %v3208 = vld [vmem:[%s14] sm:$0x1]
      %v3210 = vlaneseq
      %v3211 = vshrl.u32 %v3210, 7
      %v3212 = vsub.s32 0, %v3211
      %v3213 = vrot.slane %v3208, %v3212
      %v3215 = vadd.f32 %v3176, %v3213
      %v3216 = vadd.f32 %v3177, %v3213
      %v3217 = vadd.f32 %v3178, %v3213
      %v3218 = vadd.f32 %v3179, %v3213
      %v3219 = vadd.f32 %v3180, %v3213
      %v3220 = vadd.f32 %v3181, %v3213
      %v3221 = vadd.f32 %v3182, %v3213
      %v3222 = vadd.f32 %v3183, %v3213
      %v3223 = vadd.f32 %v3184, %v3213
      %v3224 = vadd.f32 %v3185, %v3213
      %v3225 = vadd.f32 %v3186, %v3213
      %v3226 = vadd.f32 %v3187, %v3213
      %v3227 = vadd.f32 %v3188, %v3213
      %v3228 = vadd.f32 %v3189, %v3213
      %v3229 = vadd.f32 %v3190, %v3213
      %v3230 = vadd.f32 %v3191, %v3213
      %v3231 = vadd.f32 %v3192, %v3213
      %v3232 = vadd.f32 %v3193, %v3213
      %v3233 = vadd.f32 %v3194, %v3213
      %v3234 = vadd.f32 %v3195, %v3213
      %v3235 = vadd.f32 %v3196, %v3213
      %v3236 = vadd.f32 %v3197, %v3213
      %v3237 = vadd.f32 %v3198, %v3213
      %v3238 = vadd.f32 %v3199, %v3213
      %v3239 = vadd.f32 %v3200, %v3213
      %v3240 = vadd.f32 %v3201, %v3213
      %v3241 = vadd.f32 %v3202, %v3213
      %v3242 = vadd.f32 %v3203, %v3213
      %v3243 = vadd.f32 %v3204, %v3213
      %v3244 = vadd.f32 %v3205, %v3213
      %v3245 = vadd.f32 %v3206, %v3213
      %v3246 = vadd.f32 %v3207, %v3213
      %v3247 = vld [vmem:[%s536] sm:$0xf]
      %v3248 = vld [vmem:[%s536 + $0x4] sm:$0xf]
      %v3249 = vld [vmem:[%s536 + $0x8] sm:$0xf]
      %v3250 = vld [vmem:[%s536 + $0xc] sm:$0xf]
      %v3251 = vld [vmem:[%s536 + $0x10] sm:$0xf]
      %v3252 = vld [vmem:[%s536 + $0x14] sm:$0xf]
      %v3253 = vld [vmem:[%s536 + $0x18] sm:$0xf]
      %v3254 = vld [vmem:[%s536 + $0x1c] sm:$0xf]
      %v3255 = vld [vmem:[%s536 + $0x20] sm:$0xf]
      %v3256 = vld [vmem:[%s536 + $0x24] sm:$0xf]
      %v3257 = vld [vmem:[%s536 + $0x28] sm:$0xf]
      %v3258 = vld [vmem:[%s536 + $0x2c] sm:$0xf]
      %v3259 = vld [vmem:[%s536 + $0x30] sm:$0xf]
      %v3260 = vld [vmem:[%s536 + $0x34] sm:$0xf]
      %v3261 = vld [vmem:[%s536 + $0x38] sm:$0xf]
      %v3262 = vld [vmem:[%s536 + $0x3c] sm:$0xf]
      %v3263 = vld [vmem:[%s536 + $0x40] sm:$0xf]
      %v3264 = vld [vmem:[%s536 + $0x44] sm:$0xf]
      %v3265 = vld [vmem:[%s536 + $0x48] sm:$0xf]
      %v3266 = vld [vmem:[%s536 + $0x4c] sm:$0xf]
      %v3267 = vld [vmem:[%s536 + $0x50] sm:$0xf]
      %v3268 = vld [vmem:[%s536 + $0x54] sm:$0xf]
      %v3269 = vld [vmem:[%s536 + $0x58] sm:$0xf]
      %v3270 = vld [vmem:[%s536 + $0x5c] sm:$0xf]
      %v3271 = vld [vmem:[%s536 + $0x60] sm:$0xf]
      %v3272 = vld [vmem:[%s536 + $0x64] sm:$0xf]
      %v3273 = vld [vmem:[%s536 + $0x68] sm:$0xf]
      %v3274 = vld [vmem:[%s536 + $0x6c] sm:$0xf]
      %v3275 = vld [vmem:[%s536 + $0x70] sm:$0xf]
      %v3276 = vld [vmem:[%s536 + $0x74] sm:$0xf]
      %v3277 = vld [vmem:[%s536 + $0x78] sm:$0xf]
      %v3278 = vld [vmem:[%s536 + $0x7c] sm:$0xf]
      %v3279 = vunpack.c.l.bf16 %v3247
      %v3280 = vunpack.c.l.bf16 %v3248
      %v3281 = vunpack.c.l.bf16 %v3249
      %v3282 = vunpack.c.l.bf16 %v3250
      %v3283 = vunpack.c.l.bf16 %v3251
      %v3284 = vunpack.c.l.bf16 %v3252
      %v3285 = vunpack.c.l.bf16 %v3253
      %v3286 = vunpack.c.l.bf16 %v3254
      %v3287 = vunpack.c.l.bf16 %v3255
      %v3288 = vunpack.c.l.bf16 %v3256
      %v3289 = vunpack.c.l.bf16 %v3257
      %v3290 = vunpack.c.l.bf16 %v3258
      %v3291 = vunpack.c.l.bf16 %v3259
      %v3292 = vunpack.c.l.bf16 %v3260
      %v3293 = vunpack.c.l.bf16 %v3261
      %v3294 = vunpack.c.l.bf16 %v3262
      %v3295 = vunpack.c.l.bf16 %v3263
      %v3296 = vunpack.c.l.bf16 %v3264
      %v3297 = vunpack.c.l.bf16 %v3265
      %v3298 = vunpack.c.l.bf16 %v3266
      %v3299 = vunpack.c.l.bf16 %v3267
      %v3300 = vunpack.c.l.bf16 %v3268
      %v3301 = vunpack.c.l.bf16 %v3269
      %v3302 = vunpack.c.l.bf16 %v3270
      %v3303 = vunpack.c.l.bf16 %v3271
      %v3304 = vunpack.c.l.bf16 %v3272
      %v3305 = vunpack.c.l.bf16 %v3273
      %v3306 = vunpack.c.l.bf16 %v3274
      %v3307 = vunpack.c.l.bf16 %v3275
      %v3308 = vunpack.c.l.bf16 %v3276
      %v3309 = vunpack.c.l.bf16 %v3277
      %v3310 = vunpack.c.l.bf16 %v3278
      %v3311 = vadd.f32 %v3215, %v3279
      %v3312 = vadd.f32 %v3216, %v3280
      %v3313 = vadd.f32 %v3217, %v3281
      %v3314 = vadd.f32 %v3218, %v3282
      %v3315 = vadd.f32 %v3219, %v3283
      %v3316 = vadd.f32 %v3220, %v3284
      %v3317 = vadd.f32 %v3221, %v3285
      %v3318 = vadd.f32 %v3222, %v3286
      %v3319 = vadd.f32 %v3223, %v3287
      %v3320 = vadd.f32 %v3224, %v3288
      %v3321 = vadd.f32 %v3225, %v3289
      %v3322 = vadd.f32 %v3226, %v3290
      %v3323 = vadd.f32 %v3227, %v3291
      %v3324 = vadd.f32 %v3228, %v3292
      %v3325 = vadd.f32 %v3229, %v3293
      %v3326 = vadd.f32 %v3230, %v3294
      %v3327 = vadd.f32 %v3231, %v3295
      %v3328 = vadd.f32 %v3232, %v3296
      %v3329 = vadd.f32 %v3233, %v3297
      %v3330 = vadd.f32 %v3234, %v3298
      %v3331 = vadd.f32 %v3235, %v3299
      %v3332 = vadd.f32 %v3236, %v3300
      %v3333 = vadd.f32 %v3237, %v3301
      %v3334 = vadd.f32 %v3238, %v3302
      %v3335 = vadd.f32 %v3239, %v3303
      %v3336 = vadd.f32 %v3240, %v3304
      %v3337 = vadd.f32 %v3241, %v3305
      %v3338 = vadd.f32 %v3242, %v3306
      %v3339 = vadd.f32 %v3243, %v3307
      %v3340 = vadd.f32 %v3244, %v3308
      %v3341 = vadd.f32 %v3245, %v3309
      %v3342 = vadd.f32 %v3246, %v3310
      %3343 = vst.msk [vmem:[%s541] sm:$0xff] %vm686, %v3311
      %3344 = vst.msk [vmem:[%s541 + $0x8] sm:$0xff] %vm686, %v3312
      %3345 = vst.msk [vmem:[%s541 + $0x10] sm:$0xff] %vm686, %v3313
      %3346 = vst.msk [vmem:[%s541 + $0x18] sm:$0xff] %vm686, %v3314
      %3347 = vst.msk [vmem:[%s541 + $0x20] sm:$0xff] %vm686, %v3315
      %3348 = vst.msk [vmem:[%s541 + $0x28] sm:$0xff] %vm686, %v3316
      %3349 = vst.msk [vmem:[%s541 + $0x30] sm:$0xff] %vm686, %v3317
      %3350 = vst.msk [vmem:[%s541 + $0x38] sm:$0xff] %vm686, %v3318
      %3351 = vst.msk [vmem:[%s541 + $0x40] sm:$0xff] %vm686, %v3319
      %3352 = vst.msk [vmem:[%s541 + $0x48] sm:$0xff] %vm686, %v3320
      %3353 = vst.msk [vmem:[%s541 + $0x50] sm:$0xff] %vm686, %v3321
      %3354 = vst.msk [vmem:[%s541 + $0x58] sm:$0xff] %vm686, %v3322
      %3355 = vst.msk [vmem:[%s541 + $0x60] sm:$0xff] %vm686, %v3323
      %3356 = vst.msk [vmem:[%s541 + $0x68] sm:$0xff] %vm686, %v3324
      %3357 = vst.msk [vmem:[%s541 + $0x70] sm:$0xff] %vm686, %v3325
      %3358 = vst.msk [vmem:[%s541 + $0x78] sm:$0xff] %vm686, %v3326
      %3359 = vst.msk [vmem:[%s541 + $0x80] sm:$0xff] %vm686, %v3327
      %3360 = vst.msk [vmem:[%s541 + $0x88] sm:$0xff] %vm686, %v3328
      %3361 = vst.msk [vmem:[%s541 + $0x90] sm:$0xff] %vm686, %v3329
      %3362 = vst.msk [vmem:[%s541 + $0x98] sm:$0xff] %vm686, %v3330
      %3363 = vst.msk [vmem:[%s541 + $0xa0] sm:$0xff] %vm686, %v3331
      %3364 = vst.msk [vmem:[%s541 + $0xa8] sm:$0xff] %vm686, %v3332
      %3365 = vst.msk [vmem:[%s541 + $0xb0] sm:$0xff] %vm686, %v3333
      %3366 = vst.msk [vmem:[%s541 + $0xb8] sm:$0xff] %vm686, %v3334
      %3367 = vst.msk [vmem:[%s541 + $0xc0] sm:$0xff] %vm686, %v3335
      %3368 = vst.msk [vmem:[%s541 + $0xc8] sm:$0xff] %vm686, %v3336
      %3369 = vst.msk [vmem:[%s541 + $0xd0] sm:$0xff] %vm686, %v3337
      %3370 = vst.msk [vmem:[%s541 + $0xd8] sm:$0xff] %vm686, %v3338
      %3371 = vst.msk [vmem:[%s541 + $0xe0] sm:$0xff] %vm686, %v3339
      %3372 = vst.msk [vmem:[%s541 + $0xe8] sm:$0xff] %vm686, %v3340
      %3373 = vst.msk [vmem:[%s541 + $0xf0] sm:$0xff] %vm686, %v3341
      %3374 = vst.msk [vmem:[%s541 + $0xf8] sm:$0xff] %vm686, %v3342
      %p3375 = scmp.lt.s32.totalorder %s27, 1
      %s3376 = scalar_select %p3375, %s27, 1
      %s3377 = smul.addr %s3376, 32
      %s3378 = smul.addr %s3377, 8
      %s3379 = scalar_lea.vmem %s16, %s3378
      // Predicated region
      $region85: #{_lambda_.1} parent=83 // pred_check
        %p3380 = pneg %p391
      $region86: #{_lambda_.1} parent=83 // pred_check_branch
        %3382 = sbr.rel (%p3380) target = $region88
      $region87: #{_lambda_.1} parent=83 // pred_region
        _
      $region88: #{_lambda_.1} parent=83 // pred_fallthru
        _
    $region84: #{_lambda_.1} parent=5 // pred_fallthru
      _
    %p3383 = scmp.le.s32.totalorder 2, %s22
    // Predicated region
    $region89: #{_lambda_.1} parent=5 // pred_check
      %p3384 = pneg %p3383
    $region90: #{_lambda_.1} parent=5 // pred_check_branch
      %3386 = sbr.rel (%p3384) target = $region92
    $region91: #{_lambda_.1} parent=5 // pred_region
      %s3387 = ssub.s32 %s22, 2
      // Predicated region
      $region93: #{_lambda_.1} parent=91 // pred_check
        %p3388 = pneg %p397
      $region94: #{_lambda_.1} parent=91 // pred_check_branch
        %3390 = sbr.rel (%p3388) target = $region96
      $region95: #{_lambda_.1} parent=91 // pred_region
        %p3391 = scmp.lt.s32.totalorder %s28, 1
        %s3392 = scalar_select %p3391, %s28, 1
        %s3393 = smul.addr %s3392, 32
        %s3394 = smul.addr %s3393, 8
        %s3395 = scalar_lea.vmem %s16, %s3394
      $region96: #{_lambda_.1} parent=91 // pred_fallthru
        _
    $region92: #{_lambda_.1} parent=5 // pred_fallthru
      _
  $region6: #{_lambda_.1} parent=0 // loop_footer
    %s26 = sadd.s32 1, %s22
  $region7: #{_lambda_.1} parent=0 // loop_footer_branch
    %21 = sbr.rel target = $region3
  $region8: #{_lambda_.1} parent=0 // loop_exit
    _

</llo_original>
